<compile_context>
chip_gen: v6e
topology: v6e:2x2x1
jax: 0.10.0
libtpu: 0.0.40
codegen_flags: <defaults>
</compile_context>

<pallas_src>
import functools

import jax
import jax.numpy as jnp
from jax.experimental import pallas as pl
from jax.experimental.pallas import tpu as pltpu


# ---------------------------------------------------------------------------
# Weight preparation (runs in the JAX wrapper, traced under jit).
# Torch layout: w[., ., 4H, In] with gate blocks [i, f, g, o] along the 4H axis.
# Target layout: columns are gate-major / model-minor:
#   column index = gate * (M*H) + m * H + h
# ---------------------------------------------------------------------------
def _dense_gate_major(w):
    """(M, 4H, E) -> (E, 4*M*H); dense (input x is shared by all models)."""
    M, H4, E = w.shape
    H = H4 // 4
    # [m, g*H+h, e] -> [e, g, m, h] -> column g*M*H + m*H + h
    return w.reshape(M, 4, H, E).transpose(3, 1, 0, 2).reshape(E, 4 * M * H)


def _block_diag_gate_major(w):
    """(M, 4H, In) -> (M*In, 4*M*H) block-diagonal over models."""
    M, H4, In = w.shape
    H = H4 // 4
    out = jnp.zeros((M * In, 4 * M * H), jnp.float32)
    for m in range(M):
        wt = jnp.transpose(w[m]).astype(jnp.float32)  # (In, 4H), gates [i,f,g,o]
        for g in range(4):
            out = out.at[
                m * In:(m + 1) * In,
                g * M * H + m * H:g * M * H + (m + 1) * H,
            ].set(wt[:, g * H:(g + 1) * H])
    return out


# ---------------------------------------------------------------------------
# Kernel
# ---------------------------------------------------------------------------
def _make_kernel(T: int, B: int, L: int, M: int, H: int, mm_dtype):
    MH = M * H

    def kernel(x_ref, lens_ref, wx_ref, wrec0_ref, wcat_ref, out_ref):
        # Hoisted layer-0 input projection for ALL timesteps & models:
        # one (T*B, E) @ (E, 4*M*H) matmul before the recurrence.
        x_proj = jnp.dot(x_ref[...], wx_ref[...],
                         preferred_element_type=jnp.float32)     # (T*B, 4MH)
        lens = lens_ref[...]                                      # (B, 1) int32

        # States stacked across models along lanes: (B, M*H), f32 throughout.
        h = [jnp.zeros((B, MH), jnp.float32) for _ in range(L)]
        c = [jnp.zeros((B, MH), jnp.float32) for _ in range(L)]

        for t in range(T):  # fully unrolled (T static, small)
            # pack_padded_sequence: freeze state for rows with t >= length.
            keep = jnp.broadcast_to(lens > t, (B, MH))            # (B, MH) bool

            for l in range(L):
                if l == 0:
                    gates = x_proj[t * B:(t + 1) * B, :] + jnp.dot(
                        h[0].astype(mm_dtype), wrec0_ref[...],
                        preferred_element_type=jnp.float32)       # (B, 4MH)
                else:
                    # Fused input/hidden matmul with pre-concatenated weights.
                    inp = jnp.concatenate([h[l - 1], h[l]], axis=1)
                    gates = jnp.dot(inp.astype(mm_dtype), wcat_ref[l - 1],
                                    preferred_element_type=jnp.float32)

                # Gate bands are M*H lanes wide (gate-major column order).
                i = jax.nn.sigmoid(gates[:, 0 * MH:1 * MH])
                f = jax.nn.sigmoid(gates[:, 1 * MH:2 * MH])
                g = jnp.tanh(gates[:, 2 * MH:3 * MH])
                o = jax.nn.sigmoid(gates[:, 3 * MH:4 * MH])

                c_new = f * c[l] + i * g
                h_new = o * jnp.tanh(c_new)
                h[l] = jnp.where(keep, h_new, h[l])
                c[l] = jnp.where(keep, c_new, c[l])

        # MaxPool1d over the model axis, taken in-register; single store.
        h_top = h[L - 1]                                          # (B, M*H)
        res = h_top[:, 0:H]
        for m in range(1, M):
            res = jnp.maximum(res, h_top[:, m * H:(m + 1) * H])
        out_ref[...] = res

    return kernel


# ---------------------------------------------------------------------------
# Wrapper
# ---------------------------------------------------------------------------
@functools.partial(jax.jit, static_argnames=("matmul_dtype",))
def lstm_mwe_model_pool(batch_mwe, mwe_lengths, w_ih, w_hh,
                        matmul_dtype=jnp.float32):
    """
    batch_mwe  : (B, T, E) float32
    mwe_lengths: (B,) int32 (descending, as pack_padded_sequence requires)
    w_ih       : (M, L, 4H, E) float32  (torch weight_ih layout, gates i,f,g,o)
    w_hh       : (M, L, 4H, H) float32
    matmul_dtype: dtype for MXU operands (jnp.bfloat16 recommended on v6e/v7x;
                  accumulation and all elementwise state math stay f32).
    returns    : (B, H) float32
    """
    B, T, E = batch_mwe.shape
    M, L, H4, H = w_hh.shape
    assert H4 == 4 * H and E == H  # hidden_size == embedding_dim in the module
    MH = M * H

    # Time-major, flattened rows so the layer-0 projection is one big matmul.
    x2d = jnp.transpose(batch_mwe, (1, 0, 2)).reshape(T * B, E).astype(matmul_dtype)
    lens = mwe_lengths.astype(jnp.int32).reshape(B, 1)

    wx = _dense_gate_major(w_ih[:, 0].astype(jnp.float32)).astype(matmul_dtype)
    wrec0 = _block_diag_gate_major(w_hh[:, 0]).astype(matmul_dtype)
    if L > 1:
        wcat = jnp.stack(
            [jnp.concatenate([_block_diag_gate_major(w_ih[:, l]),
                              _block_diag_gate_major(w_hh[:, l])], axis=0)
             for l in range(1, L)],
            axis=0).astype(matmul_dtype)                 # (L-1, 2MH, 4MH)
    else:
        wcat = jnp.zeros((1, 2 * MH, 4 * MH), matmul_dtype)  # unused when L == 1

    kernel = _make_kernel(T, B, L, M, H, matmul_dtype)

    # Everything (weights ~0.2 MiB, activations a few KiB) fits in VMEM,
    # so there is no grid: a single kernel invocation handles all models,
    # layers, and timesteps.
    vmem = pltpu.MemorySpace.VMEM
    return pl.pallas_call(
        kernel,
        out_shape=jax.ShapeDtypeStruct((B, H), jnp.float32),
        in_specs=[pl.BlockSpec(memory_space=vmem)] * 5,
        out_specs=pl.BlockSpec(memory_space=vmem),
    )(x2d, lens, wx, wrec0, wcat)


# ---------------------------------------------------------------------------
# Pure-JAX reference (torch-equivalent forward) for the sanity check.
# ---------------------------------------------------------------------------
def _reference(batch_mwe, lengths, w_ih, w_hh):
    B, T, E = batch_mwe.shape
    M, L, _, H = w_hh.shape
    outs = []
    for mdl in range(M):
        h = [jnp.zeros((B, H), jnp.float32) for _ in range(L)]
        c = [jnp.zeros((B, H), jnp.float32) for _ in range(L)]
        for t in range(T):
            inp = batch_mwe[:, t, :]
            msk = (t < lengths).astype(jnp.float32)[:, None]
            for l in range(L):
                gates = inp @ w_ih[mdl, l].T + h[l] @ w_hh[mdl, l].T
                i = jax.nn.sigmoid(gates[:, :H])
                f = jax.nn.sigmoid(gates[:, H:2 * H])
                g = jnp.tanh(gates[:, 2 * H:3 * H])
                o = jax.nn.sigmoid(gates[:, 3 * H:])
                cn = f * c[l] + i * g
                hn = o * jnp.tanh(cn)
                h[l] = msk * hn + (1.0 - msk) * h[l]
                c[l] = msk * cn + (1.0 - msk) * c[l]
                inp = h[l]
        outs.append(h[-1])
    return jnp.max(jnp.stack(outs, axis=0), axis=0)


if __name__ == "__main__":
    # params = {'embedding_dim': 32, 'num_layers': 2, 'num_models': 3}
    B, T, E, L, M = 2, 8, 32, 2, 3
    H = E

    key = jax.random.PRNGKey(0)
    k_x, k_ih, k_hh = jax.random.split(key, 3)

    batch_mwe = jax.random.normal(k_x, (B, T, E), dtype=jnp.float32)
    # pack_padded_sequence requires descending lengths
    mwe_lengths = jnp.array([T, 5], dtype=jnp.int32)

    # Deterministic xavier_normal-style weights (biases are zero -> omitted).
    std_ih = (2.0 / (E + 4 * H)) ** 0.5
    std_hh = (2.0 / (H + 4 * H)) ** 0.5
    w_ih = std_ih * jax.random.normal(k_ih, (M, L, 4 * H, E), dtype=jnp.float32)
    w_hh = std_hh * jax.random.normal(k_hh, (M, L, 4 * H, H), dtype=jnp.float32)

    ref = _reference(batch_mwe, mwe_lengths, w_ih, w_hh)

    # Strict-accuracy f32 path.
    out = lstm_mwe_model_pool(batch_mwe, mwe_lengths, w_ih, w_hh,
                              matmul_dtype=jnp.float32)
    out = jax.block_until_ready(out)
    assert out.shape == (B, H)
    assert jnp.allclose(out, ref, atol=1e-4, rtol=1e-4), "f32 mismatch vs reference"

    # bf16 MXU-operand path (recommended on v6e/v7x); f32 accumulation/state.
    out_bf16 = lstm_mwe_model_pool(batch_mwe, mwe_lengths, w_ih, w_hh,
                                   matmul_dtype=jnp.bfloat16)
    out_bf16 = jax.block_until_ready(out_bf16)
    assert out_bf16.shape == (B, H)
    assert jnp.allclose(out_bf16, ref, atol=6e-2), "bf16 mismatch vs reference"

    print("KERNEL_OK")
</pallas_src>

<mosaic_0001>
module attributes {stable_mosaic.version = 11 : i64} {
  func.func @kernel(%arg0: memref<16x32xf32, #tpu.memory_space<vmem>>, %arg1: memref<2x1xi32, #tpu.memory_space<vmem>>, %arg2: memref<32x384xf32, #tpu.memory_space<vmem>>, %arg3: memref<96x384xf32, #tpu.memory_space<vmem>>, %arg4: memref<1x192x384xf32, #tpu.memory_space<vmem>>, %arg5: memref<2x32xf32, #tpu.memory_space<vmem>>) attributes {dimension_semantics = [], scalar_prefetch = 0 : i64, scratch_operands = 0 : i64, tpu.core_type = #tpu.core_type<tc>} {
    %c0 = arith.constant 0 : index
    %c0_0 = arith.constant 0 : index
    %0 = vector.load %arg0[%c0, %c0_0] : memref<16x32xf32, #tpu.memory_space<vmem>>, vector<16x32xf32>
    %c0_1 = arith.constant 0 : index
    %c0_2 = arith.constant 0 : index
    %1 = vector.load %arg2[%c0_1, %c0_2] : memref<32x384xf32, #tpu.memory_space<vmem>>, vector<32x384xf32>
    %cst = arith.constant dense<0.000000e+00> : vector<16x384xf32>
    %2 = tpu.matmul %0, %1, %cst {dimension_numbers = #tpu.dot_dimension_numbers<[1], [0], [0], [1], [0, 0, 1, 1], [], []>} : vector<16x32xf32>, vector<32x384xf32>, vector<16x384xf32> -> vector<16x384xf32>
    %c0_3 = arith.constant 0 : index
    %c0_4 = arith.constant 0 : index
    %3 = vector.load %arg1[%c0_3, %c0_4] : memref<2x1xi32, #tpu.memory_space<vmem>>, vector<2x1xi32>
    %cst_5 = arith.constant 0.000000e+00 : f32
    %4 = vector.broadcast %cst_5 : f32 to vector<2x96xf32>
    %cst_6 = arith.constant 0.000000e+00 : f32
    %5 = vector.broadcast %cst_6 : f32 to vector<2x96xf32>
    %cst_7 = arith.constant 0.000000e+00 : f32
    %6 = vector.broadcast %cst_7 : f32 to vector<2x96xf32>
    %cst_8 = arith.constant 0.000000e+00 : f32
    %7 = vector.broadcast %cst_8 : f32 to vector<2x96xf32>
    %c0_i32 = arith.constant 0 : i32
    %8 = vector.broadcast %c0_i32 : i32 to vector<2x1xi32>
    %9 = arith.cmpi sgt, %3, %8 : vector<2x1xi32>
    %10 = vector.shape_cast %9 : vector<2x1xi1> to vector<2x1xi1>
    %11 = vector.broadcast %10 : vector<2x1xi1> to vector<2x96xi1>
    %12 = vector.extract_strided_slice %2 {offsets = [0, 0], sizes = [2, 384], strides = [1, 1]} : vector<16x384xf32> to vector<2x384xf32>
    %c0_9 = arith.constant 0 : index
    %c0_10 = arith.constant 0 : index
    %13 = vector.load %arg3[%c0_9, %c0_10] : memref<96x384xf32, #tpu.memory_space<vmem>>, vector<96x384xf32>
    %cst_11 = arith.constant dense<0.000000e+00> : vector<2x384xf32>
    %14 = tpu.matmul %4, %13, %cst_11 {dimension_numbers = #tpu.dot_dimension_numbers<[1], [0], [0], [1], [0, 0, 1, 1], [], []>} : vector<2x96xf32>, vector<96x384xf32>, vector<2x384xf32> -> vector<2x384xf32>
    %15 = arith.addf %12, %14 : vector<2x384xf32>
    %16 = vector.extract_strided_slice %15 {offsets = [0, 0], sizes = [2, 96], strides = [1, 1]} : vector<2x384xf32> to vector<2x96xf32>
    %17 = arith.negf %16 : vector<2x96xf32>
    %18 = math.exp %17 : vector<2x96xf32>
    %cst_12 = arith.constant 1.000000e+00 : f32
    %19 = vector.broadcast %cst_12 : f32 to vector<2x96xf32>
    %20 = arith.addf %19, %18 : vector<2x96xf32>
    %21 = arith.divf %19, %20 : vector<2x96xf32>
    %22 = vector.extract_strided_slice %15 {offsets = [0, 96], sizes = [2, 96], strides = [1, 1]} : vector<2x384xf32> to vector<2x96xf32>
    %23 = arith.negf %22 : vector<2x96xf32>
    %24 = math.exp %23 : vector<2x96xf32>
    %cst_13 = arith.constant 1.000000e+00 : f32
    %25 = vector.broadcast %cst_13 : f32 to vector<2x96xf32>
    %26 = arith.addf %25, %24 : vector<2x96xf32>
    %27 = arith.divf %25, %26 : vector<2x96xf32>
    %28 = vector.extract_strided_slice %15 {offsets = [0, 192], sizes = [2, 96], strides = [1, 1]} : vector<2x384xf32> to vector<2x96xf32>
    %29 = math.tanh %28 : vector<2x96xf32>
    %30 = vector.extract_strided_slice %15 {offsets = [0, 288], sizes = [2, 96], strides = [1, 1]} : vector<2x384xf32> to vector<2x96xf32>
    %31 = arith.negf %30 : vector<2x96xf32>
    %32 = math.exp %31 : vector<2x96xf32>
    %cst_14 = arith.constant 1.000000e+00 : f32
    %33 = vector.broadcast %cst_14 : f32 to vector<2x96xf32>
    %34 = arith.addf %33, %32 : vector<2x96xf32>
    %35 = arith.divf %33, %34 : vector<2x96xf32>
    %36 = arith.mulf %27, %6 : vector<2x96xf32>
    %37 = arith.mulf %21, %29 : vector<2x96xf32>
    %38 = arith.addf %36, %37 : vector<2x96xf32>
    %39 = math.tanh %38 : vector<2x96xf32>
    %40 = arith.mulf %35, %39 : vector<2x96xf32>
    %41 = arith.select %11, %40, %4 : vector<2x96xi1>, vector<2x96xf32>
    %42 = arith.select %11, %38, %6 : vector<2x96xi1>, vector<2x96xf32>
    %43 = tpu.concatenate %41, %5 in 1 : vector<2x96xf32>, vector<2x96xf32> -> vector<2x192xf32>
    %c0_15 = arith.constant 0 : index
    %c0_16 = arith.constant 0 : index
    %c0_17 = arith.constant 0 : index
    %44 = vector.load %arg4[%c0_15, %c0_16, %c0_17] : memref<1x192x384xf32, #tpu.memory_space<vmem>>, vector<1x192x384xf32>
    %45 = vector.shape_cast %44 : vector<1x192x384xf32> to vector<192x384xf32>
    %cst_18 = arith.constant dense<0.000000e+00> : vector<2x384xf32>
    %46 = tpu.matmul %43, %45, %cst_18 {dimension_numbers = #tpu.dot_dimension_numbers<[1], [0], [0], [1], [0, 0, 1, 1], [], []>} : vector<2x192xf32>, vector<192x384xf32>, vector<2x384xf32> -> vector<2x384xf32>
    %47 = vector.extract_strided_slice %46 {offsets = [0, 0], sizes = [2, 96], strides = [1, 1]} : vector<2x384xf32> to vector<2x96xf32>
    %48 = arith.negf %47 : vector<2x96xf32>
    %49 = math.exp %48 : vector<2x96xf32>
    %cst_19 = arith.constant 1.000000e+00 : f32
    %50 = vector.broadcast %cst_19 : f32 to vector<2x96xf32>
    %51 = arith.addf %50, %49 : vector<2x96xf32>
    %52 = arith.divf %50, %51 : vector<2x96xf32>
    %53 = vector.extract_strided_slice %46 {offsets = [0, 96], sizes = [2, 96], strides = [1, 1]} : vector<2x384xf32> to vector<2x96xf32>
    %54 = arith.negf %53 : vector<2x96xf32>
    %55 = math.exp %54 : vector<2x96xf32>
    %cst_20 = arith.constant 1.000000e+00 : f32
    %56 = vector.broadcast %cst_20 : f32 to vector<2x96xf32>
    %57 = arith.addf %56, %55 : vector<2x96xf32>
    %58 = arith.divf %56, %57 : vector<2x96xf32>
    %59 = vector.extract_strided_slice %46 {offsets = [0, 192], sizes = [2, 96], strides = [1, 1]} : vector<2x384xf32> to vector<2x96xf32>
    %60 = math.tanh %59 : vector<2x96xf32>
    %61 = vector.extract_strided_slice %46 {offsets = [0, 288], sizes = [2, 96], strides = [1, 1]} : vector<2x384xf32> to vector<2x96xf32>
    %62 = arith.negf %61 : vector<2x96xf32>
    %63 = math.exp %62 : vector<2x96xf32>
    %cst_21 = arith.constant 1.000000e+00 : f32
    %64 = vector.broadcast %cst_21 : f32 to vector<2x96xf32>
    %65 = arith.addf %64, %63 : vector<2x96xf32>
    %66 = arith.divf %64, %65 : vector<2x96xf32>
    %67 = arith.mulf %58, %7 : vector<2x96xf32>
    %68 = arith.mulf %52, %60 : vector<2x96xf32>
    %69 = arith.addf %67, %68 : vector<2x96xf32>
    %70 = math.tanh %69 : vector<2x96xf32>
    %71 = arith.mulf %66, %70 : vector<2x96xf32>
    %72 = arith.select %11, %71, %5 : vector<2x96xi1>, vector<2x96xf32>
    %73 = arith.select %11, %69, %7 : vector<2x96xi1>, vector<2x96xf32>
    %c1_i32 = arith.constant 1 : i32
    %74 = vector.broadcast %c1_i32 : i32 to vector<2x1xi32>
    %75 = arith.cmpi sgt, %3, %74 : vector<2x1xi32>
    %76 = vector.shape_cast %75 : vector<2x1xi1> to vector<2x1xi1>
    %77 = vector.broadcast %76 : vector<2x1xi1> to vector<2x96xi1>
    %78 = vector.extract_strided_slice %2 {offsets = [2, 0], sizes = [2, 384], strides = [1, 1]} : vector<16x384xf32> to vector<2x384xf32>
    %c0_22 = arith.constant 0 : index
    %c0_23 = arith.constant 0 : index
    %79 = vector.load %arg3[%c0_22, %c0_23] : memref<96x384xf32, #tpu.memory_space<vmem>>, vector<96x384xf32>
    %cst_24 = arith.constant dense<0.000000e+00> : vector<2x384xf32>
    %80 = tpu.matmul %41, %79, %cst_24 {dimension_numbers = #tpu.dot_dimension_numbers<[1], [0], [0], [1], [0, 0, 1, 1], [], []>} : vector<2x96xf32>, vector<96x384xf32>, vector<2x384xf32> -> vector<2x384xf32>
    %81 = arith.addf %78, %80 : vector<2x384xf32>
    %82 = vector.extract_strided_slice %81 {offsets = [0, 0], sizes = [2, 96], strides = [1, 1]} : vector<2x384xf32> to vector<2x96xf32>
    %83 = arith.negf %82 : vector<2x96xf32>
    %84 = math.exp %83 : vector<2x96xf32>
    %cst_25 = arith.constant 1.000000e+00 : f32
    %85 = vector.broadcast %cst_25 : f32 to vector<2x96xf32>
    %86 = arith.addf %85, %84 : vector<2x96xf32>
    %87 = arith.divf %85, %86 : vector<2x96xf32>
    %88 = vector.extract_strided_slice %81 {offsets = [0, 96], sizes = [2, 96], strides = [1, 1]} : vector<2x384xf32> to vector<2x96xf32>
    %89 = arith.negf %88 : vector<2x96xf32>
    %90 = math.exp %89 : vector<2x96xf32>
    %cst_26 = arith.constant 1.000000e+00 : f32
    %91 = vector.broadcast %cst_26 : f32 to vector<2x96xf32>
    %92 = arith.addf %91, %90 : vector<2x96xf32>
    %93 = arith.divf %91, %92 : vector<2x96xf32>
    %94 = vector.extract_strided_slice %81 {offsets = [0, 192], sizes = [2, 96], strides = [1, 1]} : vector<2x384xf32> to vector<2x96xf32>
    %95 = math.tanh %94 : vector<2x96xf32>
    %96 = vector.extract_strided_slice %81 {offsets = [0, 288], sizes = [2, 96], strides = [1, 1]} : vector<2x384xf32> to vector<2x96xf32>
    %97 = arith.negf %96 : vector<2x96xf32>
    %98 = math.exp %97 : vector<2x96xf32>
    %cst_27 = arith.constant 1.000000e+00 : f32
    %99 = vector.broadcast %cst_27 : f32 to vector<2x96xf32>
    %100 = arith.addf %99, %98 : vector<2x96xf32>
    %101 = arith.divf %99, %100 : vector<2x96xf32>
    %102 = arith.mulf %93, %42 : vector<2x96xf32>
    %103 = arith.mulf %87, %95 : vector<2x96xf32>
    %104 = arith.addf %102, %103 : vector<2x96xf32>
    %105 = math.tanh %104 : vector<2x96xf32>
    %106 = arith.mulf %101, %105 : vector<2x96xf32>
    %107 = arith.select %77, %106, %41 : vector<2x96xi1>, vector<2x96xf32>
    %108 = arith.select %77, %104, %42 : vector<2x96xi1>, vector<2x96xf32>
    %109 = tpu.concatenate %107, %72 in 1 : vector<2x96xf32>, vector<2x96xf32> -> vector<2x192xf32>
    %c0_28 = arith.constant 0 : index
    %c0_29 = arith.constant 0 : index
    %c0_30 = arith.constant 0 : index
    %110 = vector.load %arg4[%c0_28, %c0_29, %c0_30] : memref<1x192x384xf32, #tpu.memory_space<vmem>>, vector<1x192x384xf32>
    %111 = vector.shape_cast %110 : vector<1x192x384xf32> to vector<192x384xf32>
    %cst_31 = arith.constant dense<0.000000e+00> : vector<2x384xf32>
    %112 = tpu.matmul %109, %111, %cst_31 {dimension_numbers = #tpu.dot_dimension_numbers<[1], [0], [0], [1], [0, 0, 1, 1], [], []>} : vector<2x192xf32>, vector<192x384xf32>, vector<2x384xf32> -> vector<2x384xf32>
    %113 = vector.extract_strided_slice %112 {offsets = [0, 0], sizes = [2, 96], strides = [1, 1]} : vector<2x384xf32> to vector<2x96xf32>
    %114 = arith.negf %113 : vector<2x96xf32>
    %115 = math.exp %114 : vector<2x96xf32>
    %cst_32 = arith.constant 1.000000e+00 : f32
    %116 = vector.broadcast %cst_32 : f32 to vector<2x96xf32>
    %117 = arith.addf %116, %115 : vector<2x96xf32>
    %118 = arith.divf %116, %117 : vector<2x96xf32>
    %119 = vector.extract_strided_slice %112 {offsets = [0, 96], sizes = [2, 96], strides = [1, 1]} : vector<2x384xf32> to vector<2x96xf32>
    %120 = arith.negf %119 : vector<2x96xf32>
    %121 = math.exp %120 : vector<2x96xf32>
    %cst_33 = arith.constant 1.000000e+00 : f32
    %122 = vector.broadcast %cst_33 : f32 to vector<2x96xf32>
    %123 = arith.addf %122, %121 : vector<2x96xf32>
    %124 = arith.divf %122, %123 : vector<2x96xf32>
    %125 = vector.extract_strided_slice %112 {offsets = [0, 192], sizes = [2, 96], strides = [1, 1]} : vector<2x384xf32> to vector<2x96xf32>
    %126 = math.tanh %125 : vector<2x96xf32>
    %127 = vector.extract_strided_slice %112 {offsets = [0, 288], sizes = [2, 96], strides = [1, 1]} : vector<2x384xf32> to vector<2x96xf32>
    %128 = arith.negf %127 : vector<2x96xf32>
    %129 = math.exp %128 : vector<2x96xf32>
    %cst_34 = arith.constant 1.000000e+00 : f32
    %130 = vector.broadcast %cst_34 : f32 to vector<2x96xf32>
    %131 = arith.addf %130, %129 : vector<2x96xf32>
    %132 = arith.divf %130, %131 : vector<2x96xf32>
    %133 = arith.mulf %124, %73 : vector<2x96xf32>
    %134 = arith.mulf %118, %126 : vector<2x96xf32>
    %135 = arith.addf %133, %134 : vector<2x96xf32>
    %136 = math.tanh %135 : vector<2x96xf32>
    %137 = arith.mulf %132, %136 : vector<2x96xf32>
    %138 = arith.select %77, %137, %72 : vector<2x96xi1>, vector<2x96xf32>
    %139 = arith.select %77, %135, %73 : vector<2x96xi1>, vector<2x96xf32>
    %c2_i32 = arith.constant 2 : i32
    %140 = vector.broadcast %c2_i32 : i32 to vector<2x1xi32>
    %141 = arith.cmpi sgt, %3, %140 : vector<2x1xi32>
    %142 = vector.shape_cast %141 : vector<2x1xi1> to vector<2x1xi1>
    %143 = vector.broadcast %142 : vector<2x1xi1> to vector<2x96xi1>
    %144 = vector.extract_strided_slice %2 {offsets = [4, 0], sizes = [2, 384], strides = [1, 1]} : vector<16x384xf32> to vector<2x384xf32>
    %c0_35 = arith.constant 0 : index
    %c0_36 = arith.constant 0 : index
    %145 = vector.load %arg3[%c0_35, %c0_36] : memref<96x384xf32, #tpu.memory_space<vmem>>, vector<96x384xf32>
    %cst_37 = arith.constant dense<0.000000e+00> : vector<2x384xf32>
    %146 = tpu.matmul %107, %145, %cst_37 {dimension_numbers = #tpu.dot_dimension_numbers<[1], [0], [0], [1], [0, 0, 1, 1], [], []>} : vector<2x96xf32>, vector<96x384xf32>, vector<2x384xf32> -> vector<2x384xf32>
    %147 = arith.addf %144, %146 : vector<2x384xf32>
    %148 = vector.extract_strided_slice %147 {offsets = [0, 0], sizes = [2, 96], strides = [1, 1]} : vector<2x384xf32> to vector<2x96xf32>
    %149 = arith.negf %148 : vector<2x96xf32>
    %150 = math.exp %149 : vector<2x96xf32>
    %cst_38 = arith.constant 1.000000e+00 : f32
    %151 = vector.broadcast %cst_38 : f32 to vector<2x96xf32>
    %152 = arith.addf %151, %150 : vector<2x96xf32>
    %153 = arith.divf %151, %152 : vector<2x96xf32>
    %154 = vector.extract_strided_slice %147 {offsets = [0, 96], sizes = [2, 96], strides = [1, 1]} : vector<2x384xf32> to vector<2x96xf32>
    %155 = arith.negf %154 : vector<2x96xf32>
    %156 = math.exp %155 : vector<2x96xf32>
    %cst_39 = arith.constant 1.000000e+00 : f32
    %157 = vector.broadcast %cst_39 : f32 to vector<2x96xf32>
    %158 = arith.addf %157, %156 : vector<2x96xf32>
    %159 = arith.divf %157, %158 : vector<2x96xf32>
    %160 = vector.extract_strided_slice %147 {offsets = [0, 192], sizes = [2, 96], strides = [1, 1]} : vector<2x384xf32> to vector<2x96xf32>
    %161 = math.tanh %160 : vector<2x96xf32>
    %162 = vector.extract_strided_slice %147 {offsets = [0, 288], sizes = [2, 96], strides = [1, 1]} : vector<2x384xf32> to vector<2x96xf32>
    %163 = arith.negf %162 : vector<2x96xf32>
    %164 = math.exp %163 : vector<2x96xf32>
    %cst_40 = arith.constant 1.000000e+00 : f32
    %165 = vector.broadcast %cst_40 : f32 to vector<2x96xf32>
    %166 = arith.addf %165, %164 : vector<2x96xf32>
    %167 = arith.divf %165, %166 : vector<2x96xf32>
    %168 = arith.mulf %159, %108 : vector<2x96xf32>
    %169 = arith.mulf %153, %161 : vector<2x96xf32>
    %170 = arith.addf %168, %169 : vector<2x96xf32>
    %171 = math.tanh %170 : vector<2x96xf32>
    %172 = arith.mulf %167, %171 : vector<2x96xf32>
    %173 = arith.select %143, %172, %107 : vector<2x96xi1>, vector<2x96xf32>
    %174 = arith.select %143, %170, %108 : vector<2x96xi1>, vector<2x96xf32>
    %175 = tpu.concatenate %173, %138 in 1 : vector<2x96xf32>, vector<2x96xf32> -> vector<2x192xf32>
    %c0_41 = arith.constant 0 : index
    %c0_42 = arith.constant 0 : index
    %c0_43 = arith.constant 0 : index
    %176 = vector.load %arg4[%c0_41, %c0_42, %c0_43] : memref<1x192x384xf32, #tpu.memory_space<vmem>>, vector<1x192x384xf32>
    %177 = vector.shape_cast %176 : vector<1x192x384xf32> to vector<192x384xf32>
    %cst_44 = arith.constant dense<0.000000e+00> : vector<2x384xf32>
    %178 = tpu.matmul %175, %177, %cst_44 {dimension_numbers = #tpu.dot_dimension_numbers<[1], [0], [0], [1], [0, 0, 1, 1], [], []>} : vector<2x192xf32>, vector<192x384xf32>, vector<2x384xf32> -> vector<2x384xf32>
    %179 = vector.extract_strided_slice %178 {offsets = [0, 0], sizes = [2, 96], strides = [1, 1]} : vector<2x384xf32> to vector<2x96xf32>
    %180 = arith.negf %179 : vector<2x96xf32>
    %181 = math.exp %180 : vector<2x96xf32>
    %cst_45 = arith.constant 1.000000e+00 : f32
    %182 = vector.broadcast %cst_45 : f32 to vector<2x96xf32>
    %183 = arith.addf %182, %181 : vector<2x96xf32>
    %184 = arith.divf %182, %183 : vector<2x96xf32>
    %185 = vector.extract_strided_slice %178 {offsets = [0, 96], sizes = [2, 96], strides = [1, 1]} : vector<2x384xf32> to vector<2x96xf32>
    %186 = arith.negf %185 : vector<2x96xf32>
    %187 = math.exp %186 : vector<2x96xf32>
    %cst_46 = arith.constant 1.000000e+00 : f32
    %188 = vector.broadcast %cst_46 : f32 to vector<2x96xf32>
    %189 = arith.addf %188, %187 : vector<2x96xf32>
    %190 = arith.divf %188, %189 : vector<2x96xf32>
    %191 = vector.extract_strided_slice %178 {offsets = [0, 192], sizes = [2, 96], strides = [1, 1]} : vector<2x384xf32> to vector<2x96xf32>
    %192 = math.tanh %191 : vector<2x96xf32>
    %193 = vector.extract_strided_slice %178 {offsets = [0, 288], sizes = [2, 96], strides = [1, 1]} : vector<2x384xf32> to vector<2x96xf32>
    %194 = arith.negf %193 : vector<2x96xf32>
    %195 = math.exp %194 : vector<2x96xf32>
    %cst_47 = arith.constant 1.000000e+00 : f32
    %196 = vector.broadcast %cst_47 : f32 to vector<2x96xf32>
    %197 = arith.addf %196, %195 : vector<2x96xf32>
    %198 = arith.divf %196, %197 : vector<2x96xf32>
    %199 = arith.mulf %190, %139 : vector<2x96xf32>
    %200 = arith.mulf %184, %192 : vector<2x96xf32>
    %201 = arith.addf %199, %200 : vector<2x96xf32>
    %202 = math.tanh %201 : vector<2x96xf32>
    %203 = arith.mulf %198, %202 : vector<2x96xf32>
    %204 = arith.select %143, %203, %138 : vector<2x96xi1>, vector<2x96xf32>
    %205 = arith.select %143, %201, %139 : vector<2x96xi1>, vector<2x96xf32>
    %c3_i32 = arith.constant 3 : i32
    %206 = vector.broadcast %c3_i32 : i32 to vector<2x1xi32>
    %207 = arith.cmpi sgt, %3, %206 : vector<2x1xi32>
    %208 = vector.shape_cast %207 : vector<2x1xi1> to vector<2x1xi1>
    %209 = vector.broadcast %208 : vector<2x1xi1> to vector<2x96xi1>
    %210 = vector.extract_strided_slice %2 {offsets = [6, 0], sizes = [2, 384], strides = [1, 1]} : vector<16x384xf32> to vector<2x384xf32>
    %c0_48 = arith.constant 0 : index
    %c0_49 = arith.constant 0 : index
    %211 = vector.load %arg3[%c0_48, %c0_49] : memref<96x384xf32, #tpu.memory_space<vmem>>, vector<96x384xf32>
    %cst_50 = arith.constant dense<0.000000e+00> : vector<2x384xf32>
    %212 = tpu.matmul %173, %211, %cst_50 {dimension_numbers = #tpu.dot_dimension_numbers<[1], [0], [0], [1], [0, 0, 1, 1], [], []>} : vector<2x96xf32>, vector<96x384xf32>, vector<2x384xf32> -> vector<2x384xf32>
    %213 = arith.addf %210, %212 : vector<2x384xf32>
    %214 = vector.extract_strided_slice %213 {offsets = [0, 0], sizes = [2, 96], strides = [1, 1]} : vector<2x384xf32> to vector<2x96xf32>
    %215 = arith.negf %214 : vector<2x96xf32>
    %216 = math.exp %215 : vector<2x96xf32>
    %cst_51 = arith.constant 1.000000e+00 : f32
    %217 = vector.broadcast %cst_51 : f32 to vector<2x96xf32>
    %218 = arith.addf %217, %216 : vector<2x96xf32>
    %219 = arith.divf %217, %218 : vector<2x96xf32>
    %220 = vector.extract_strided_slice %213 {offsets = [0, 96], sizes = [2, 96], strides = [1, 1]} : vector<2x384xf32> to vector<2x96xf32>
    %221 = arith.negf %220 : vector<2x96xf32>
    %222 = math.exp %221 : vector<2x96xf32>
    %cst_52 = arith.constant 1.000000e+00 : f32
    %223 = vector.broadcast %cst_52 : f32 to vector<2x96xf32>
    %224 = arith.addf %223, %222 : vector<2x96xf32>
    %225 = arith.divf %223, %224 : vector<2x96xf32>
    %226 = vector.extract_strided_slice %213 {offsets = [0, 192], sizes = [2, 96], strides = [1, 1]} : vector<2x384xf32> to vector<2x96xf32>
    %227 = math.tanh %226 : vector<2x96xf32>
    %228 = vector.extract_strided_slice %213 {offsets = [0, 288], sizes = [2, 96], strides = [1, 1]} : vector<2x384xf32> to vector<2x96xf32>
    %229 = arith.negf %228 : vector<2x96xf32>
    %230 = math.exp %229 : vector<2x96xf32>
    %cst_53 = arith.constant 1.000000e+00 : f32
    %231 = vector.broadcast %cst_53 : f32 to vector<2x96xf32>
    %232 = arith.addf %231, %230 : vector<2x96xf32>
    %233 = arith.divf %231, %232 : vector<2x96xf32>
    %234 = arith.mulf %225, %174 : vector<2x96xf32>
    %235 = arith.mulf %219, %227 : vector<2x96xf32>
    %236 = arith.addf %234, %235 : vector<2x96xf32>
    %237 = math.tanh %236 : vector<2x96xf32>
    %238 = arith.mulf %233, %237 : vector<2x96xf32>
    %239 = arith.select %209, %238, %173 : vector<2x96xi1>, vector<2x96xf32>
    %240 = arith.select %209, %236, %174 : vector<2x96xi1>, vector<2x96xf32>
    %241 = tpu.concatenate %239, %204 in 1 : vector<2x96xf32>, vector<2x96xf32> -> vector<2x192xf32>
    %c0_54 = arith.constant 0 : index
    %c0_55 = arith.constant 0 : index
    %c0_56 = arith.constant 0 : index
    %242 = vector.load %arg4[%c0_54, %c0_55, %c0_56] : memref<1x192x384xf32, #tpu.memory_space<vmem>>, vector<1x192x384xf32>
    %243 = vector.shape_cast %242 : vector<1x192x384xf32> to vector<192x384xf32>
    %cst_57 = arith.constant dense<0.000000e+00> : vector<2x384xf32>
    %244 = tpu.matmul %241, %243, %cst_57 {dimension_numbers = #tpu.dot_dimension_numbers<[1], [0], [0], [1], [0, 0, 1, 1], [], []>} : vector<2x192xf32>, vector<192x384xf32>, vector<2x384xf32> -> vector<2x384xf32>
    %245 = vector.extract_strided_slice %244 {offsets = [0, 0], sizes = [2, 96], strides = [1, 1]} : vector<2x384xf32> to vector<2x96xf32>
    %246 = arith.negf %245 : vector<2x96xf32>
    %247 = math.exp %246 : vector<2x96xf32>
    %cst_58 = arith.constant 1.000000e+00 : f32
    %248 = vector.broadcast %cst_58 : f32 to vector<2x96xf32>
    %249 = arith.addf %248, %247 : vector<2x96xf32>
    %250 = arith.divf %248, %249 : vector<2x96xf32>
    %251 = vector.extract_strided_slice %244 {offsets = [0, 96], sizes = [2, 96], strides = [1, 1]} : vector<2x384xf32> to vector<2x96xf32>
    %252 = arith.negf %251 : vector<2x96xf32>
    %253 = math.exp %252 : vector<2x96xf32>
    %cst_59 = arith.constant 1.000000e+00 : f32
    %254 = vector.broadcast %cst_59 : f32 to vector<2x96xf32>
    %255 = arith.addf %254, %253 : vector<2x96xf32>
    %256 = arith.divf %254, %255 : vector<2x96xf32>
    %257 = vector.extract_strided_slice %244 {offsets = [0, 192], sizes = [2, 96], strides = [1, 1]} : vector<2x384xf32> to vector<2x96xf32>
    %258 = math.tanh %257 : vector<2x96xf32>
    %259 = vector.extract_strided_slice %244 {offsets = [0, 288], sizes = [2, 96], strides = [1, 1]} : vector<2x384xf32> to vector<2x96xf32>
    %260 = arith.negf %259 : vector<2x96xf32>
    %261 = math.exp %260 : vector<2x96xf32>
    %cst_60 = arith.constant 1.000000e+00 : f32
    %262 = vector.broadcast %cst_60 : f32 to vector<2x96xf32>
    %263 = arith.addf %262, %261 : vector<2x96xf32>
    %264 = arith.divf %262, %263 : vector<2x96xf32>
    %265 = arith.mulf %256, %205 : vector<2x96xf32>
    %266 = arith.mulf %250, %258 : vector<2x96xf32>
    %267 = arith.addf %265, %266 : vector<2x96xf32>
    %268 = math.tanh %267 : vector<2x96xf32>
    %269 = arith.mulf %264, %268 : vector<2x96xf32>
    %270 = arith.select %209, %269, %204 : vector<2x96xi1>, vector<2x96xf32>
    %271 = arith.select %209, %267, %205 : vector<2x96xi1>, vector<2x96xf32>
    %c4_i32 = arith.constant 4 : i32
    %272 = vector.broadcast %c4_i32 : i32 to vector<2x1xi32>
    %273 = arith.cmpi sgt, %3, %272 : vector<2x1xi32>
    %274 = vector.shape_cast %273 : vector<2x1xi1> to vector<2x1xi1>
    %275 = vector.broadcast %274 : vector<2x1xi1> to vector<2x96xi1>
    %276 = vector.extract_strided_slice %2 {offsets = [8, 0], sizes = [2, 384], strides = [1, 1]} : vector<16x384xf32> to vector<2x384xf32>
    %c0_61 = arith.constant 0 : index
    %c0_62 = arith.constant 0 : index
    %277 = vector.load %arg3[%c0_61, %c0_62] : memref<96x384xf32, #tpu.memory_space<vmem>>, vector<96x384xf32>
    %cst_63 = arith.constant dense<0.000000e+00> : vector<2x384xf32>
    %278 = tpu.matmul %239, %277, %cst_63 {dimension_numbers = #tpu.dot_dimension_numbers<[1], [0], [0], [1], [0, 0, 1, 1], [], []>} : vector<2x96xf32>, vector<96x384xf32>, vector<2x384xf32> -> vector<2x384xf32>
    %279 = arith.addf %276, %278 : vector<2x384xf32>
    %280 = vector.extract_strided_slice %279 {offsets = [0, 0], sizes = [2, 96], strides = [1, 1]} : vector<2x384xf32> to vector<2x96xf32>
    %281 = arith.negf %280 : vector<2x96xf32>
    %282 = math.exp %281 : vector<2x96xf32>
    %cst_64 = arith.constant 1.000000e+00 : f32
    %283 = vector.broadcast %cst_64 : f32 to vector<2x96xf32>
    %284 = arith.addf %283, %282 : vector<2x96xf32>
    %285 = arith.divf %283, %284 : vector<2x96xf32>
    %286 = vector.extract_strided_slice %279 {offsets = [0, 96], sizes = [2, 96], strides = [1, 1]} : vector<2x384xf32> to vector<2x96xf32>
    %287 = arith.negf %286 : vector<2x96xf32>
    %288 = math.exp %287 : vector<2x96xf32>
    %cst_65 = arith.constant 1.000000e+00 : f32
    %289 = vector.broadcast %cst_65 : f32 to vector<2x96xf32>
    %290 = arith.addf %289, %288 : vector<2x96xf32>
    %291 = arith.divf %289, %290 : vector<2x96xf32>
    %292 = vector.extract_strided_slice %279 {offsets = [0, 192], sizes = [2, 96], strides = [1, 1]} : vector<2x384xf32> to vector<2x96xf32>
    %293 = math.tanh %292 : vector<2x96xf32>
    %294 = vector.extract_strided_slice %279 {offsets = [0, 288], sizes = [2, 96], strides = [1, 1]} : vector<2x384xf32> to vector<2x96xf32>
    %295 = arith.negf %294 : vector<2x96xf32>
    %296 = math.exp %295 : vector<2x96xf32>
    %cst_66 = arith.constant 1.000000e+00 : f32
    %297 = vector.broadcast %cst_66 : f32 to vector<2x96xf32>
    %298 = arith.addf %297, %296 : vector<2x96xf32>
    %299 = arith.divf %297, %298 : vector<2x96xf32>
    %300 = arith.mulf %291, %240 : vector<2x96xf32>
    %301 = arith.mulf %285, %293 : vector<2x96xf32>
    %302 = arith.addf %300, %301 : vector<2x96xf32>
    %303 = math.tanh %302 : vector<2x96xf32>
    %304 = arith.mulf %299, %303 : vector<2x96xf32>
    %305 = arith.select %275, %304, %239 : vector<2x96xi1>, vector<2x96xf32>
    %306 = arith.select %275, %302, %240 : vector<2x96xi1>, vector<2x96xf32>
    %307 = tpu.concatenate %305, %270 in 1 : vector<2x96xf32>, vector<2x96xf32> -> vector<2x192xf32>
    %c0_67 = arith.constant 0 : index
    %c0_68 = arith.constant 0 : index
    %c0_69 = arith.constant 0 : index
    %308 = vector.load %arg4[%c0_67, %c0_68, %c0_69] : memref<1x192x384xf32, #tpu.memory_space<vmem>>, vector<1x192x384xf32>
    %309 = vector.shape_cast %308 : vector<1x192x384xf32> to vector<192x384xf32>
    %cst_70 = arith.constant dense<0.000000e+00> : vector<2x384xf32>
    %310 = tpu.matmul %307, %309, %cst_70 {dimension_numbers = #tpu.dot_dimension_numbers<[1], [0], [0], [1], [0, 0, 1, 1], [], []>} : vector<2x192xf32>, vector<192x384xf32>, vector<2x384xf32> -> vector<2x384xf32>
    %311 = vector.extract_strided_slice %310 {offsets = [0, 0], sizes = [2, 96], strides = [1, 1]} : vector<2x384xf32> to vector<2x96xf32>
    %312 = arith.negf %311 : vector<2x96xf32>
    %313 = math.exp %312 : vector<2x96xf32>
    %cst_71 = arith.constant 1.000000e+00 : f32
    %314 = vector.broadcast %cst_71 : f32 to vector<2x96xf32>
    %315 = arith.addf %314, %313 : vector<2x96xf32>
    %316 = arith.divf %314, %315 : vector<2x96xf32>
    %317 = vector.extract_strided_slice %310 {offsets = [0, 96], sizes = [2, 96], strides = [1, 1]} : vector<2x384xf32> to vector<2x96xf32>
    %318 = arith.negf %317 : vector<2x96xf32>
    %319 = math.exp %318 : vector<2x96xf32>
    %cst_72 = arith.constant 1.000000e+00 : f32
    %320 = vector.broadcast %cst_72 : f32 to vector<2x96xf32>
    %321 = arith.addf %320, %319 : vector<2x96xf32>
    %322 = arith.divf %320, %321 : vector<2x96xf32>
    %323 = vector.extract_strided_slice %310 {offsets = [0, 192], sizes = [2, 96], strides = [1, 1]} : vector<2x384xf32> to vector<2x96xf32>
    %324 = math.tanh %323 : vector<2x96xf32>
    %325 = vector.extract_strided_slice %310 {offsets = [0, 288], sizes = [2, 96], strides = [1, 1]} : vector<2x384xf32> to vector<2x96xf32>
    %326 = arith.negf %325 : vector<2x96xf32>
    %327 = math.exp %326 : vector<2x96xf32>
    %cst_73 = arith.constant 1.000000e+00 : f32
    %328 = vector.broadcast %cst_73 : f32 to vector<2x96xf32>
    %329 = arith.addf %328, %327 : vector<2x96xf32>
    %330 = arith.divf %328, %329 : vector<2x96xf32>
    %331 = arith.mulf %322, %271 : vector<2x96xf32>
    %332 = arith.mulf %316, %324 : vector<2x96xf32>
    %333 = arith.addf %331, %332 : vector<2x96xf32>
    %334 = math.tanh %333 : vector<2x96xf32>
    %335 = arith.mulf %330, %334 : vector<2x96xf32>
    %336 = arith.select %275, %335, %270 : vector<2x96xi1>, vector<2x96xf32>
    %337 = arith.select %275, %333, %271 : vector<2x96xi1>, vector<2x96xf32>
    %c5_i32 = arith.constant 5 : i32
    %338 = vector.broadcast %c5_i32 : i32 to vector<2x1xi32>
    %339 = arith.cmpi sgt, %3, %338 : vector<2x1xi32>
    %340 = vector.shape_cast %339 : vector<2x1xi1> to vector<2x1xi1>
    %341 = vector.broadcast %340 : vector<2x1xi1> to vector<2x96xi1>
    %342 = vector.extract_strided_slice %2 {offsets = [10, 0], sizes = [2, 384], strides = [1, 1]} : vector<16x384xf32> to vector<2x384xf32>
    %c0_74 = arith.constant 0 : index
    %c0_75 = arith.constant 0 : index
    %343 = vector.load %arg3[%c0_74, %c0_75] : memref<96x384xf32, #tpu.memory_space<vmem>>, vector<96x384xf32>
    %cst_76 = arith.constant dense<0.000000e+00> : vector<2x384xf32>
    %344 = tpu.matmul %305, %343, %cst_76 {dimension_numbers = #tpu.dot_dimension_numbers<[1], [0], [0], [1], [0, 0, 1, 1], [], []>} : vector<2x96xf32>, vector<96x384xf32>, vector<2x384xf32> -> vector<2x384xf32>
    %345 = arith.addf %342, %344 : vector<2x384xf32>
    %346 = vector.extract_strided_slice %345 {offsets = [0, 0], sizes = [2, 96], strides = [1, 1]} : vector<2x384xf32> to vector<2x96xf32>
    %347 = arith.negf %346 : vector<2x96xf32>
    %348 = math.exp %347 : vector<2x96xf32>
    %cst_77 = arith.constant 1.000000e+00 : f32
    %349 = vector.broadcast %cst_77 : f32 to vector<2x96xf32>
    %350 = arith.addf %349, %348 : vector<2x96xf32>
    %351 = arith.divf %349, %350 : vector<2x96xf32>
    %352 = vector.extract_strided_slice %345 {offsets = [0, 96], sizes = [2, 96], strides = [1, 1]} : vector<2x384xf32> to vector<2x96xf32>
    %353 = arith.negf %352 : vector<2x96xf32>
    %354 = math.exp %353 : vector<2x96xf32>
    %cst_78 = arith.constant 1.000000e+00 : f32
    %355 = vector.broadcast %cst_78 : f32 to vector<2x96xf32>
    %356 = arith.addf %355, %354 : vector<2x96xf32>
    %357 = arith.divf %355, %356 : vector<2x96xf32>
    %358 = vector.extract_strided_slice %345 {offsets = [0, 192], sizes = [2, 96], strides = [1, 1]} : vector<2x384xf32> to vector<2x96xf32>
    %359 = math.tanh %358 : vector<2x96xf32>
    %360 = vector.extract_strided_slice %345 {offsets = [0, 288], sizes = [2, 96], strides = [1, 1]} : vector<2x384xf32> to vector<2x96xf32>
    %361 = arith.negf %360 : vector<2x96xf32>
    %362 = math.exp %361 : vector<2x96xf32>
    %cst_79 = arith.constant 1.000000e+00 : f32
    %363 = vector.broadcast %cst_79 : f32 to vector<2x96xf32>
    %364 = arith.addf %363, %362 : vector<2x96xf32>
    %365 = arith.divf %363, %364 : vector<2x96xf32>
    %366 = arith.mulf %357, %306 : vector<2x96xf32>
    %367 = arith.mulf %351, %359 : vector<2x96xf32>
    %368 = arith.addf %366, %367 : vector<2x96xf32>
    %369 = math.tanh %368 : vector<2x96xf32>
    %370 = arith.mulf %365, %369 : vector<2x96xf32>
    %371 = arith.select %341, %370, %305 : vector<2x96xi1>, vector<2x96xf32>
    %372 = arith.select %341, %368, %306 : vector<2x96xi1>, vector<2x96xf32>
    %373 = tpu.concatenate %371, %336 in 1 : vector<2x96xf32>, vector<2x96xf32> -> vector<2x192xf32>
    %c0_80 = arith.constant 0 : index
    %c0_81 = arith.constant 0 : index
    %c0_82 = arith.constant 0 : index
    %374 = vector.load %arg4[%c0_80, %c0_81, %c0_82] : memref<1x192x384xf32, #tpu.memory_space<vmem>>, vector<1x192x384xf32>
    %375 = vector.shape_cast %374 : vector<1x192x384xf32> to vector<192x384xf32>
    %cst_83 = arith.constant dense<0.000000e+00> : vector<2x384xf32>
    %376 = tpu.matmul %373, %375, %cst_83 {dimension_numbers = #tpu.dot_dimension_numbers<[1], [0], [0], [1], [0, 0, 1, 1], [], []>} : vector<2x192xf32>, vector<192x384xf32>, vector<2x384xf32> -> vector<2x384xf32>
    %377 = vector.extract_strided_slice %376 {offsets = [0, 0], sizes = [2, 96], strides = [1, 1]} : vector<2x384xf32> to vector<2x96xf32>
    %378 = arith.negf %377 : vector<2x96xf32>
    %379 = math.exp %378 : vector<2x96xf32>
    %cst_84 = arith.constant 1.000000e+00 : f32
    %380 = vector.broadcast %cst_84 : f32 to vector<2x96xf32>
    %381 = arith.addf %380, %379 : vector<2x96xf32>
    %382 = arith.divf %380, %381 : vector<2x96xf32>
    %383 = vector.extract_strided_slice %376 {offsets = [0, 96], sizes = [2, 96], strides = [1, 1]} : vector<2x384xf32> to vector<2x96xf32>
    %384 = arith.negf %383 : vector<2x96xf32>
    %385 = math.exp %384 : vector<2x96xf32>
    %cst_85 = arith.constant 1.000000e+00 : f32
    %386 = vector.broadcast %cst_85 : f32 to vector<2x96xf32>
    %387 = arith.addf %386, %385 : vector<2x96xf32>
    %388 = arith.divf %386, %387 : vector<2x96xf32>
    %389 = vector.extract_strided_slice %376 {offsets = [0, 192], sizes = [2, 96], strides = [1, 1]} : vector<2x384xf32> to vector<2x96xf32>
    %390 = math.tanh %389 : vector<2x96xf32>
    %391 = vector.extract_strided_slice %376 {offsets = [0, 288], sizes = [2, 96], strides = [1, 1]} : vector<2x384xf32> to vector<2x96xf32>
    %392 = arith.negf %391 : vector<2x96xf32>
    %393 = math.exp %392 : vector<2x96xf32>
    %cst_86 = arith.constant 1.000000e+00 : f32
    %394 = vector.broadcast %cst_86 : f32 to vector<2x96xf32>
    %395 = arith.addf %394, %393 : vector<2x96xf32>
    %396 = arith.divf %394, %395 : vector<2x96xf32>
    %397 = arith.mulf %388, %337 : vector<2x96xf32>
    %398 = arith.mulf %382, %390 : vector<2x96xf32>
    %399 = arith.addf %397, %398 : vector<2x96xf32>
    %400 = math.tanh %399 : vector<2x96xf32>
    %401 = arith.mulf %396, %400 : vector<2x96xf32>
    %402 = arith.select %341, %401, %336 : vector<2x96xi1>, vector<2x96xf32>
    %403 = arith.select %341, %399, %337 : vector<2x96xi1>, vector<2x96xf32>
    %c6_i32 = arith.constant 6 : i32
    %404 = vector.broadcast %c6_i32 : i32 to vector<2x1xi32>
    %405 = arith.cmpi sgt, %3, %404 : vector<2x1xi32>
    %406 = vector.shape_cast %405 : vector<2x1xi1> to vector<2x1xi1>
    %407 = vector.broadcast %406 : vector<2x1xi1> to vector<2x96xi1>
    %408 = vector.extract_strided_slice %2 {offsets = [12, 0], sizes = [2, 384], strides = [1, 1]} : vector<16x384xf32> to vector<2x384xf32>
    %c0_87 = arith.constant 0 : index
    %c0_88 = arith.constant 0 : index
    %409 = vector.load %arg3[%c0_87, %c0_88] : memref<96x384xf32, #tpu.memory_space<vmem>>, vector<96x384xf32>
    %cst_89 = arith.constant dense<0.000000e+00> : vector<2x384xf32>
    %410 = tpu.matmul %371, %409, %cst_89 {dimension_numbers = #tpu.dot_dimension_numbers<[1], [0], [0], [1], [0, 0, 1, 1], [], []>} : vector<2x96xf32>, vector<96x384xf32>, vector<2x384xf32> -> vector<2x384xf32>
    %411 = arith.addf %408, %410 : vector<2x384xf32>
    %412 = vector.extract_strided_slice %411 {offsets = [0, 0], sizes = [2, 96], strides = [1, 1]} : vector<2x384xf32> to vector<2x96xf32>
    %413 = arith.negf %412 : vector<2x96xf32>
    %414 = math.exp %413 : vector<2x96xf32>
    %cst_90 = arith.constant 1.000000e+00 : f32
    %415 = vector.broadcast %cst_90 : f32 to vector<2x96xf32>
    %416 = arith.addf %415, %414 : vector<2x96xf32>
    %417 = arith.divf %415, %416 : vector<2x96xf32>
    %418 = vector.extract_strided_slice %411 {offsets = [0, 96], sizes = [2, 96], strides = [1, 1]} : vector<2x384xf32> to vector<2x96xf32>
    %419 = arith.negf %418 : vector<2x96xf32>
    %420 = math.exp %419 : vector<2x96xf32>
    %cst_91 = arith.constant 1.000000e+00 : f32
    %421 = vector.broadcast %cst_91 : f32 to vector<2x96xf32>
    %422 = arith.addf %421, %420 : vector<2x96xf32>
    %423 = arith.divf %421, %422 : vector<2x96xf32>
    %424 = vector.extract_strided_slice %411 {offsets = [0, 192], sizes = [2, 96], strides = [1, 1]} : vector<2x384xf32> to vector<2x96xf32>
    %425 = math.tanh %424 : vector<2x96xf32>
    %426 = vector.extract_strided_slice %411 {offsets = [0, 288], sizes = [2, 96], strides = [1, 1]} : vector<2x384xf32> to vector<2x96xf32>
    %427 = arith.negf %426 : vector<2x96xf32>
    %428 = math.exp %427 : vector<2x96xf32>
    %cst_92 = arith.constant 1.000000e+00 : f32
    %429 = vector.broadcast %cst_92 : f32 to vector<2x96xf32>
    %430 = arith.addf %429, %428 : vector<2x96xf32>
    %431 = arith.divf %429, %430 : vector<2x96xf32>
    %432 = arith.mulf %423, %372 : vector<2x96xf32>
    %433 = arith.mulf %417, %425 : vector<2x96xf32>
    %434 = arith.addf %432, %433 : vector<2x96xf32>
    %435 = math.tanh %434 : vector<2x96xf32>
    %436 = arith.mulf %431, %435 : vector<2x96xf32>
    %437 = arith.select %407, %436, %371 : vector<2x96xi1>, vector<2x96xf32>
    %438 = arith.select %407, %434, %372 : vector<2x96xi1>, vector<2x96xf32>
    %439 = tpu.concatenate %437, %402 in 1 : vector<2x96xf32>, vector<2x96xf32> -> vector<2x192xf32>
    %c0_93 = arith.constant 0 : index
    %c0_94 = arith.constant 0 : index
    %c0_95 = arith.constant 0 : index
    %440 = vector.load %arg4[%c0_93, %c0_94, %c0_95] : memref<1x192x384xf32, #tpu.memory_space<vmem>>, vector<1x192x384xf32>
    %441 = vector.shape_cast %440 : vector<1x192x384xf32> to vector<192x384xf32>
    %cst_96 = arith.constant dense<0.000000e+00> : vector<2x384xf32>
    %442 = tpu.matmul %439, %441, %cst_96 {dimension_numbers = #tpu.dot_dimension_numbers<[1], [0], [0], [1], [0, 0, 1, 1], [], []>} : vector<2x192xf32>, vector<192x384xf32>, vector<2x384xf32> -> vector<2x384xf32>
    %443 = vector.extract_strided_slice %442 {offsets = [0, 0], sizes = [2, 96], strides = [1, 1]} : vector<2x384xf32> to vector<2x96xf32>
    %444 = arith.negf %443 : vector<2x96xf32>
    %445 = math.exp %444 : vector<2x96xf32>
    %cst_97 = arith.constant 1.000000e+00 : f32
    %446 = vector.broadcast %cst_97 : f32 to vector<2x96xf32>
    %447 = arith.addf %446, %445 : vector<2x96xf32>
    %448 = arith.divf %446, %447 : vector<2x96xf32>
    %449 = vector.extract_strided_slice %442 {offsets = [0, 96], sizes = [2, 96], strides = [1, 1]} : vector<2x384xf32> to vector<2x96xf32>
    %450 = arith.negf %449 : vector<2x96xf32>
    %451 = math.exp %450 : vector<2x96xf32>
    %cst_98 = arith.constant 1.000000e+00 : f32
    %452 = vector.broadcast %cst_98 : f32 to vector<2x96xf32>
    %453 = arith.addf %452, %451 : vector<2x96xf32>
    %454 = arith.divf %452, %453 : vector<2x96xf32>
    %455 = vector.extract_strided_slice %442 {offsets = [0, 192], sizes = [2, 96], strides = [1, 1]} : vector<2x384xf32> to vector<2x96xf32>
    %456 = math.tanh %455 : vector<2x96xf32>
    %457 = vector.extract_strided_slice %442 {offsets = [0, 288], sizes = [2, 96], strides = [1, 1]} : vector<2x384xf32> to vector<2x96xf32>
    %458 = arith.negf %457 : vector<2x96xf32>
    %459 = math.exp %458 : vector<2x96xf32>
    %cst_99 = arith.constant 1.000000e+00 : f32
    %460 = vector.broadcast %cst_99 : f32 to vector<2x96xf32>
    %461 = arith.addf %460, %459 : vector<2x96xf32>
    %462 = arith.divf %460, %461 : vector<2x96xf32>
    %463 = arith.mulf %454, %403 : vector<2x96xf32>
    %464 = arith.mulf %448, %456 : vector<2x96xf32>
    %465 = arith.addf %463, %464 : vector<2x96xf32>
    %466 = math.tanh %465 : vector<2x96xf32>
    %467 = arith.mulf %462, %466 : vector<2x96xf32>
    %468 = arith.select %407, %467, %402 : vector<2x96xi1>, vector<2x96xf32>
    %469 = arith.select %407, %465, %403 : vector<2x96xi1>, vector<2x96xf32>
    %c7_i32 = arith.constant 7 : i32
    %470 = vector.broadcast %c7_i32 : i32 to vector<2x1xi32>
    %471 = arith.cmpi sgt, %3, %470 : vector<2x1xi32>
    %472 = vector.shape_cast %471 : vector<2x1xi1> to vector<2x1xi1>
    %473 = vector.broadcast %472 : vector<2x1xi1> to vector<2x96xi1>
    %474 = vector.extract_strided_slice %2 {offsets = [14, 0], sizes = [2, 384], strides = [1, 1]} : vector<16x384xf32> to vector<2x384xf32>
    %c0_100 = arith.constant 0 : index
    %c0_101 = arith.constant 0 : index
    %475 = vector.load %arg3[%c0_100, %c0_101] : memref<96x384xf32, #tpu.memory_space<vmem>>, vector<96x384xf32>
    %cst_102 = arith.constant dense<0.000000e+00> : vector<2x384xf32>
    %476 = tpu.matmul %437, %475, %cst_102 {dimension_numbers = #tpu.dot_dimension_numbers<[1], [0], [0], [1], [0, 0, 1, 1], [], []>} : vector<2x96xf32>, vector<96x384xf32>, vector<2x384xf32> -> vector<2x384xf32>
    %477 = arith.addf %474, %476 : vector<2x384xf32>
    %478 = vector.extract_strided_slice %477 {offsets = [0, 0], sizes = [2, 96], strides = [1, 1]} : vector<2x384xf32> to vector<2x96xf32>
    %479 = arith.negf %478 : vector<2x96xf32>
    %480 = math.exp %479 : vector<2x96xf32>
    %cst_103 = arith.constant 1.000000e+00 : f32
    %481 = vector.broadcast %cst_103 : f32 to vector<2x96xf32>
    %482 = arith.addf %481, %480 : vector<2x96xf32>
    %483 = arith.divf %481, %482 : vector<2x96xf32>
    %484 = vector.extract_strided_slice %477 {offsets = [0, 96], sizes = [2, 96], strides = [1, 1]} : vector<2x384xf32> to vector<2x96xf32>
    %485 = arith.negf %484 : vector<2x96xf32>
    %486 = math.exp %485 : vector<2x96xf32>
    %cst_104 = arith.constant 1.000000e+00 : f32
    %487 = vector.broadcast %cst_104 : f32 to vector<2x96xf32>
    %488 = arith.addf %487, %486 : vector<2x96xf32>
    %489 = arith.divf %487, %488 : vector<2x96xf32>
    %490 = vector.extract_strided_slice %477 {offsets = [0, 192], sizes = [2, 96], strides = [1, 1]} : vector<2x384xf32> to vector<2x96xf32>
    %491 = math.tanh %490 : vector<2x96xf32>
    %492 = vector.extract_strided_slice %477 {offsets = [0, 288], sizes = [2, 96], strides = [1, 1]} : vector<2x384xf32> to vector<2x96xf32>
    %493 = arith.negf %492 : vector<2x96xf32>
    %494 = math.exp %493 : vector<2x96xf32>
    %cst_105 = arith.constant 1.000000e+00 : f32
    %495 = vector.broadcast %cst_105 : f32 to vector<2x96xf32>
    %496 = arith.addf %495, %494 : vector<2x96xf32>
    %497 = arith.divf %495, %496 : vector<2x96xf32>
    %498 = arith.mulf %489, %438 : vector<2x96xf32>
    %499 = arith.mulf %483, %491 : vector<2x96xf32>
    %500 = arith.addf %498, %499 : vector<2x96xf32>
    %501 = math.tanh %500 : vector<2x96xf32>
    %502 = arith.mulf %497, %501 : vector<2x96xf32>
    %503 = arith.select %473, %502, %437 : vector<2x96xi1>, vector<2x96xf32>
    %504 = tpu.concatenate %503, %468 in 1 : vector<2x96xf32>, vector<2x96xf32> -> vector<2x192xf32>
    %c0_106 = arith.constant 0 : index
    %c0_107 = arith.constant 0 : index
    %c0_108 = arith.constant 0 : index
    %505 = vector.load %arg4[%c0_106, %c0_107, %c0_108] : memref<1x192x384xf32, #tpu.memory_space<vmem>>, vector<1x192x384xf32>
    %506 = vector.shape_cast %505 : vector<1x192x384xf32> to vector<192x384xf32>
    %cst_109 = arith.constant dense<0.000000e+00> : vector<2x384xf32>
    %507 = tpu.matmul %504, %506, %cst_109 {dimension_numbers = #tpu.dot_dimension_numbers<[1], [0], [0], [1], [0, 0, 1, 1], [], []>} : vector<2x192xf32>, vector<192x384xf32>, vector<2x384xf32> -> vector<2x384xf32>
    %508 = vector.extract_strided_slice %507 {offsets = [0, 0], sizes = [2, 96], strides = [1, 1]} : vector<2x384xf32> to vector<2x96xf32>
    %509 = arith.negf %508 : vector<2x96xf32>
    %510 = math.exp %509 : vector<2x96xf32>
    %cst_110 = arith.constant 1.000000e+00 : f32
    %511 = vector.broadcast %cst_110 : f32 to vector<2x96xf32>
    %512 = arith.addf %511, %510 : vector<2x96xf32>
    %513 = arith.divf %511, %512 : vector<2x96xf32>
    %514 = vector.extract_strided_slice %507 {offsets = [0, 96], sizes = [2, 96], strides = [1, 1]} : vector<2x384xf32> to vector<2x96xf32>
    %515 = arith.negf %514 : vector<2x96xf32>
    %516 = math.exp %515 : vector<2x96xf32>
    %cst_111 = arith.constant 1.000000e+00 : f32
    %517 = vector.broadcast %cst_111 : f32 to vector<2x96xf32>
    %518 = arith.addf %517, %516 : vector<2x96xf32>
    %519 = arith.divf %517, %518 : vector<2x96xf32>
    %520 = vector.extract_strided_slice %507 {offsets = [0, 192], sizes = [2, 96], strides = [1, 1]} : vector<2x384xf32> to vector<2x96xf32>
    %521 = math.tanh %520 : vector<2x96xf32>
    %522 = vector.extract_strided_slice %507 {offsets = [0, 288], sizes = [2, 96], strides = [1, 1]} : vector<2x384xf32> to vector<2x96xf32>
    %523 = arith.negf %522 : vector<2x96xf32>
    %524 = math.exp %523 : vector<2x96xf32>
    %cst_112 = arith.constant 1.000000e+00 : f32
    %525 = vector.broadcast %cst_112 : f32 to vector<2x96xf32>
    %526 = arith.addf %525, %524 : vector<2x96xf32>
    %527 = arith.divf %525, %526 : vector<2x96xf32>
    %528 = arith.mulf %519, %469 : vector<2x96xf32>
    %529 = arith.mulf %513, %521 : vector<2x96xf32>
    %530 = arith.addf %528, %529 : vector<2x96xf32>
    %531 = math.tanh %530 : vector<2x96xf32>
    %532 = arith.mulf %527, %531 : vector<2x96xf32>
    %533 = arith.select %473, %532, %468 : vector<2x96xi1>, vector<2x96xf32>
    %534 = vector.extract_strided_slice %533 {offsets = [0, 0], sizes = [2, 32], strides = [1, 1]} : vector<2x96xf32> to vector<2x32xf32>
    %535 = vector.extract_strided_slice %533 {offsets = [0, 32], sizes = [2, 32], strides = [1, 1]} : vector<2x96xf32> to vector<2x32xf32>
    %536 = arith.maximumf %534, %535 : vector<2x32xf32>
    %537 = vector.extract_strided_slice %533 {offsets = [0, 64], sizes = [2, 32], strides = [1, 1]} : vector<2x96xf32> to vector<2x32xf32>
    %538 = arith.maximumf %536, %537 : vector<2x32xf32>
    %c0_113 = arith.constant 0 : index
    %c0_114 = arith.constant 0 : index
    %539 = vector.load %arg5[%c0_113, %c0_114] : memref<2x32xf32, #tpu.memory_space<vmem>>, vector<2x32xf32>
    tpu.vector_store %arg5[%c0_113, %c0_114], %538 {strides = array<i32>} : memref<2x32xf32, #tpu.memory_space<vmem>>, vector<2x32xf32>,
    return
  }
}

</mosaic_0001>

<llo_original>
// kernel: squeeze.13
$region0: #{squeeze.13}
  %s0 = inlined_call_operand.vmem [shape: f32[3,1,128,32], index: 0, kind: input, shape index: {}]
  %s1 = inlined_call_operand.vmem [shape: f32[3,4,32,32], index: 1, kind: output, shape index: {}]
  $region1: #{squeeze.13} parent=0
    #allocation0 [shape = 'u8[393216]{0}', space=vmem, size = 0x60000, scoped, tag = 'scoped mem for output reshape']
    %v2 = vld [vmem:[%s0] sm:$0xff]
    %vm3 = vcmask 261120
    %4 = vst.msk [vmem:[#allocation0] ss:$8 sm:$0xf] %vm3, %v2
    %5 = vst.msk [vmem:[#allocation0] ss:$8 sm:$0xf0] %vm3, %v2
    %s6 = scalar_lea.vmem %s0, 8
    %v7 = vld [vmem:[%s6] sm:$0xff]
    %vm8 = vcmask 261120
    %s9 = scalar_lea.vmem [#allocation0], 64
    %10 = vst.msk [vmem:[%s9] ss:$8 sm:$0xf] %vm8, %v7
    %s11 = scalar_lea.vmem [#allocation0], 64
    %12 = vst.msk [vmem:[%s11] ss:$8 sm:$0xf0] %vm8, %v7
    %s13 = scalar_lea.vmem %s0, 16
    %v14 = vld [vmem:[%s13] sm:$0xff]
    %vm15 = vcmask 261120
    %s16 = scalar_lea.vmem [#allocation0], 128
    %17 = vst.msk [vmem:[%s16] ss:$8 sm:$0xf] %vm15, %v14
    %s18 = scalar_lea.vmem [#allocation0], 128
    %19 = vst.msk [vmem:[%s18] ss:$8 sm:$0xf0] %vm15, %v14
    %s20 = scalar_lea.vmem %s0, 24
    %v21 = vld [vmem:[%s20] sm:$0xff]
    %vm22 = vcmask 261120
    %s23 = scalar_lea.vmem [#allocation0], 192
    %24 = vst.msk [vmem:[%s23] ss:$8 sm:$0xf] %vm22, %v21
    %s25 = scalar_lea.vmem [#allocation0], 192
    %26 = vst.msk [vmem:[%s25] ss:$8 sm:$0xf0] %vm22, %v21
    %s27 = scalar_lea.vmem %s0, 32
    %v28 = vld [vmem:[%s27] sm:$0xff]
    %vm29 = vcmask 261120
    %s30 = scalar_lea.vmem [#allocation0], 256
    %31 = vst.msk [vmem:[%s30] ss:$8 sm:$0xf] %vm29, %v28
    %s32 = scalar_lea.vmem [#allocation0], 256
    %33 = vst.msk [vmem:[%s32] ss:$8 sm:$0xf0] %vm29, %v28
    %s34 = scalar_lea.vmem %s0, 40
    %v35 = vld [vmem:[%s34] sm:$0xff]
    %vm36 = vcmask 261120
    %s37 = scalar_lea.vmem [#allocation0], 320
    %38 = vst.msk [vmem:[%s37] ss:$8 sm:$0xf] %vm36, %v35
    %s39 = scalar_lea.vmem [#allocation0], 320
    %40 = vst.msk [vmem:[%s39] ss:$8 sm:$0xf0] %vm36, %v35
    %s41 = scalar_lea.vmem %s0, 48
    %v42 = vld [vmem:[%s41] sm:$0xff]
    %vm43 = vcmask 261120
    %s44 = scalar_lea.vmem [#allocation0], 384
    %45 = vst.msk [vmem:[%s44] ss:$8 sm:$0xf] %vm43, %v42
    %s46 = scalar_lea.vmem [#allocation0], 384
    %47 = vst.msk [vmem:[%s46] ss:$8 sm:$0xf0] %vm43, %v42
    %s48 = scalar_lea.vmem %s0, 56
    %v49 = vld [vmem:[%s48] sm:$0xff]
    %vm50 = vcmask 261120
    %s51 = scalar_lea.vmem [#allocation0], 448
    %52 = vst.msk [vmem:[%s51] ss:$8 sm:$0xf] %vm50, %v49
    %s53 = scalar_lea.vmem [#allocation0], 448
    %54 = vst.msk [vmem:[%s53] ss:$8 sm:$0xf0] %vm50, %v49
    %s55 = scalar_lea.vmem %s0, 64
    %v56 = vld [vmem:[%s55] sm:$0xff]
    %vm57 = vcmask 261120
    %s58 = scalar_lea.vmem [#allocation0], 512
    %59 = vst.msk [vmem:[%s58] ss:$8 sm:$0xf] %vm57, %v56
    %s60 = scalar_lea.vmem [#allocation0], 512
    %61 = vst.msk [vmem:[%s60] ss:$8 sm:$0xf0] %vm57, %v56
    %s62 = scalar_lea.vmem %s0, 72
    %v63 = vld [vmem:[%s62] sm:$0xff]
    %vm64 = vcmask 261120
    %s65 = scalar_lea.vmem [#allocation0], 576
    %66 = vst.msk [vmem:[%s65] ss:$8 sm:$0xf] %vm64, %v63
    %s67 = scalar_lea.vmem [#allocation0], 576
    %68 = vst.msk [vmem:[%s67] ss:$8 sm:$0xf0] %vm64, %v63
    %s69 = scalar_lea.vmem %s0, 80
    %v70 = vld [vmem:[%s69] sm:$0xff]
    %vm71 = vcmask 261120
    %s72 = scalar_lea.vmem [#allocation0], 640
    %73 = vst.msk [vmem:[%s72] ss:$8 sm:$0xf] %vm71, %v70
    %s74 = scalar_lea.vmem [#allocation0], 640
    %75 = vst.msk [vmem:[%s74] ss:$8 sm:$0xf0] %vm71, %v70
    %s76 = scalar_lea.vmem %s0, 88
    %v77 = vld [vmem:[%s76] sm:$0xff]
    %vm78 = vcmask 261120
    %s79 = scalar_lea.vmem [#allocation0], 704
    %80 = vst.msk [vmem:[%s79] ss:$8 sm:$0xf] %vm78, %v77
    %s81 = scalar_lea.vmem [#allocation0], 704
    %82 = vst.msk [vmem:[%s81] ss:$8 sm:$0xf0] %vm78, %v77
    %v83 = vld [vmem:[%s0] sm:$0xff]
    %84 = vrot.lane.b32.xlu0 %v83, 96
    %v85 = vpop.permute.xlu0 %84
    %vm86 = vcmask 261120
    %s87 = scalar_lea.vmem [#allocation0], 1
    %88 = vst.msk [vmem:[%s87] ss:$8 sm:$0xf] %vm86, %v85
    %s89 = scalar_lea.vmem [#allocation0], 1
    %90 = vst.msk [vmem:[%s89] ss:$8 sm:$0xf0] %vm86, %v85
    %s91 = scalar_lea.vmem %s0, 8
    %v92 = vld [vmem:[%s91] sm:$0xff]
    %93 = vrot.lane.b32.xlu0 %v92, 96
    %v94 = vpop.permute.xlu0 %93
    %vm95 = vcmask 261120
    %s96 = scalar_lea.vmem [#allocation0], 65
    %97 = vst.msk [vmem:[%s96] ss:$8 sm:$0xf] %vm95, %v94
    %s98 = scalar_lea.vmem [#allocation0], 65
    %99 = vst.msk [vmem:[%s98] ss:$8 sm:$0xf0] %vm95, %v94
    %s100 = scalar_lea.vmem %s0, 16
    %v101 = vld [vmem:[%s100] sm:$0xff]
    %102 = vrot.lane.b32.xlu0 %v101, 96
    %v103 = vpop.permute.xlu0 %102
    %vm104 = vcmask 261120
    %s105 = scalar_lea.vmem [#allocation0], 129
    %106 = vst.msk [vmem:[%s105] ss:$8 sm:$0xf] %vm104, %v103
    %s107 = scalar_lea.vmem [#allocation0], 129
    %108 = vst.msk [vmem:[%s107] ss:$8 sm:$0xf0] %vm104, %v103
    %s109 = scalar_lea.vmem %s0, 24
    %v110 = vld [vmem:[%s109] sm:$0xff]
    %111 = vrot.lane.b32.xlu0 %v110, 96
    %v112 = vpop.permute.xlu0 %111
    %vm113 = vcmask 261120
    %s114 = scalar_lea.vmem [#allocation0], 193
    %115 = vst.msk [vmem:[%s114] ss:$8 sm:$0xf] %vm113, %v112
    %s116 = scalar_lea.vmem [#allocation0], 193
    %117 = vst.msk [vmem:[%s116] ss:$8 sm:$0xf0] %vm113, %v112
    %s118 = scalar_lea.vmem %s0, 32
    %v119 = vld [vmem:[%s118] sm:$0xff]
    %120 = vrot.lane.b32.xlu0 %v119, 96
    %v121 = vpop.permute.xlu0 %120
    %vm122 = vcmask 261120
    %s123 = scalar_lea.vmem [#allocation0], 257
    %124 = vst.msk [vmem:[%s123] ss:$8 sm:$0xf] %vm122, %v121
    %s125 = scalar_lea.vmem [#allocation0], 257
    %126 = vst.msk [vmem:[%s125] ss:$8 sm:$0xf0] %vm122, %v121
    %s127 = scalar_lea.vmem %s0, 40
    %v128 = vld [vmem:[%s127] sm:$0xff]
    %129 = vrot.lane.b32.xlu0 %v128, 96
    %v130 = vpop.permute.xlu0 %129
    %vm131 = vcmask 261120
    %s132 = scalar_lea.vmem [#allocation0], 321
    %133 = vst.msk [vmem:[%s132] ss:$8 sm:$0xf] %vm131, %v130
    %s134 = scalar_lea.vmem [#allocation0], 321
    %135 = vst.msk [vmem:[%s134] ss:$8 sm:$0xf0] %vm131, %v130
    %s136 = scalar_lea.vmem %s0, 48
    %v137 = vld [vmem:[%s136] sm:$0xff]
    %138 = vrot.lane.b32.xlu0 %v137, 96
    %v139 = vpop.permute.xlu0 %138
    %vm140 = vcmask 261120
    %s141 = scalar_lea.vmem [#allocation0], 385
    %142 = vst.msk [vmem:[%s141] ss:$8 sm:$0xf] %vm140, %v139
    %s143 = scalar_lea.vmem [#allocation0], 385
    %144 = vst.msk [vmem:[%s143] ss:$8 sm:$0xf0] %vm140, %v139
    %s145 = scalar_lea.vmem %s0, 56
    %v146 = vld [vmem:[%s145] sm:$0xff]
    %147 = vrot.lane.b32.xlu0 %v146, 96
    %v148 = vpop.permute.xlu0 %147
    %vm149 = vcmask 261120
    %s150 = scalar_lea.vmem [#allocation0], 449
    %151 = vst.msk [vmem:[%s150] ss:$8 sm:$0xf] %vm149, %v148
    %s152 = scalar_lea.vmem [#allocation0], 449
    %153 = vst.msk [vmem:[%s152] ss:$8 sm:$0xf0] %vm149, %v148
    %s154 = scalar_lea.vmem %s0, 64
    %v155 = vld [vmem:[%s154] sm:$0xff]
    %156 = vrot.lane.b32.xlu0 %v155, 96
    %v157 = vpop.permute.xlu0 %156
    %vm158 = vcmask 261120
    %s159 = scalar_lea.vmem [#allocation0], 513
    %160 = vst.msk [vmem:[%s159] ss:$8 sm:$0xf] %vm158, %v157
    %s161 = scalar_lea.vmem [#allocation0], 513
    %162 = vst.msk [vmem:[%s161] ss:$8 sm:$0xf0] %vm158, %v157
    %s163 = scalar_lea.vmem %s0, 72
    %v164 = vld [vmem:[%s163] sm:$0xff]
    %165 = vrot.lane.b32.xlu0 %v164, 96
    %v166 = vpop.permute.xlu0 %165
    %vm167 = vcmask 261120
    %s168 = scalar_lea.vmem [#allocation0], 577
    %169 = vst.msk [vmem:[%s168] ss:$8 sm:$0xf] %vm167, %v166
    %s170 = scalar_lea.vmem [#allocation0], 577
    %171 = vst.msk [vmem:[%s170] ss:$8 sm:$0xf0] %vm167, %v166
    %s172 = scalar_lea.vmem %s0, 80
    %v173 = vld [vmem:[%s172] sm:$0xff]
    %174 = vrot.lane.b32.xlu0 %v173, 96
    %v175 = vpop.permute.xlu0 %174
    %vm176 = vcmask 261120
    %s177 = scalar_lea.vmem [#allocation0], 641
    %178 = vst.msk [vmem:[%s177] ss:$8 sm:$0xf] %vm176, %v175
    %s179 = scalar_lea.vmem [#allocation0], 641
    %180 = vst.msk [vmem:[%s179] ss:$8 sm:$0xf0] %vm176, %v175
    %s181 = scalar_lea.vmem %s0, 88
    %v182 = vld [vmem:[%s181] sm:$0xff]
    %183 = vrot.lane.b32.xlu0 %v182, 96
    %v184 = vpop.permute.xlu0 %183
    %vm185 = vcmask 261120
    %s186 = scalar_lea.vmem [#allocation0], 705
    %187 = vst.msk [vmem:[%s186] ss:$8 sm:$0xf] %vm185, %v184
    %s188 = scalar_lea.vmem [#allocation0], 705
    %189 = vst.msk [vmem:[%s188] ss:$8 sm:$0xf0] %vm185, %v184
    %v190 = vld [vmem:[%s0] sm:$0xff]
    %191 = vrot.lane.b32.xlu0 %v190, 64
    %v192 = vpop.permute.xlu0 %191
    %vm193 = vcmask 261120
    %s194 = scalar_lea.vmem [#allocation0], 2
    %195 = vst.msk [vmem:[%s194] ss:$8 sm:$0xf] %vm193, %v192
    %s196 = scalar_lea.vmem [#allocation0], 2
    %197 = vst.msk [vmem:[%s196] ss:$8 sm:$0xf0] %vm193, %v192
    %s198 = scalar_lea.vmem %s0, 8
    %v199 = vld [vmem:[%s198] sm:$0xff]
    %200 = vrot.lane.b32.xlu0 %v199, 64
    %v201 = vpop.permute.xlu0 %200
    %vm202 = vcmask 261120
    %s203 = scalar_lea.vmem [#allocation0], 66
    %204 = vst.msk [vmem:[%s203] ss:$8 sm:$0xf] %vm202, %v201
    %s205 = scalar_lea.vmem [#allocation0], 66
    %206 = vst.msk [vmem:[%s205] ss:$8 sm:$0xf0] %vm202, %v201
    %s207 = scalar_lea.vmem %s0, 16
    %v208 = vld [vmem:[%s207] sm:$0xff]
    %209 = vrot.lane.b32.xlu0 %v208, 64
    %v210 = vpop.permute.xlu0 %209
    %vm211 = vcmask 261120
    %s212 = scalar_lea.vmem [#allocation0], 130
    %213 = vst.msk [vmem:[%s212] ss:$8 sm:$0xf] %vm211, %v210
    %s214 = scalar_lea.vmem [#allocation0], 130
    %215 = vst.msk [vmem:[%s214] ss:$8 sm:$0xf0] %vm211, %v210
    %s216 = scalar_lea.vmem %s0, 24
    %v217 = vld [vmem:[%s216] sm:$0xff]
    %218 = vrot.lane.b32.xlu0 %v217, 64
    %v219 = vpop.permute.xlu0 %218
    %vm220 = vcmask 261120
    %s221 = scalar_lea.vmem [#allocation0], 194
    %222 = vst.msk [vmem:[%s221] ss:$8 sm:$0xf] %vm220, %v219
    %s223 = scalar_lea.vmem [#allocation0], 194
    %224 = vst.msk [vmem:[%s223] ss:$8 sm:$0xf0] %vm220, %v219
    %s225 = scalar_lea.vmem %s0, 32
    %v226 = vld [vmem:[%s225] sm:$0xff]
    %227 = vrot.lane.b32.xlu0 %v226, 64
    %v228 = vpop.permute.xlu0 %227
    %vm229 = vcmask 261120
    %s230 = scalar_lea.vmem [#allocation0], 258
    %231 = vst.msk [vmem:[%s230] ss:$8 sm:$0xf] %vm229, %v228
    %s232 = scalar_lea.vmem [#allocation0], 258
    %233 = vst.msk [vmem:[%s232] ss:$8 sm:$0xf0] %vm229, %v228
    %s234 = scalar_lea.vmem %s0, 40
    %v235 = vld [vmem:[%s234] sm:$0xff]
    %236 = vrot.lane.b32.xlu0 %v235, 64
    %v237 = vpop.permute.xlu0 %236
    %vm238 = vcmask 261120
    %s239 = scalar_lea.vmem [#allocation0], 322
    %240 = vst.msk [vmem:[%s239] ss:$8 sm:$0xf] %vm238, %v237
    %s241 = scalar_lea.vmem [#allocation0], 322
    %242 = vst.msk [vmem:[%s241] ss:$8 sm:$0xf0] %vm238, %v237
    %s243 = scalar_lea.vmem %s0, 48
    %v244 = vld [vmem:[%s243] sm:$0xff]
    %245 = vrot.lane.b32.xlu0 %v244, 64
    %v246 = vpop.permute.xlu0 %245
    %vm247 = vcmask 261120
    %s248 = scalar_lea.vmem [#allocation0], 386
    %249 = vst.msk [vmem:[%s248] ss:$8 sm:$0xf] %vm247, %v246
    %s250 = scalar_lea.vmem [#allocation0], 386
    %251 = vst.msk [vmem:[%s250] ss:$8 sm:$0xf0] %vm247, %v246
    %s252 = scalar_lea.vmem %s0, 56
    %v253 = vld [vmem:[%s252] sm:$0xff]
    %254 = vrot.lane.b32.xlu0 %v253, 64
    %v255 = vpop.permute.xlu0 %254
    %vm256 = vcmask 261120
    %s257 = scalar_lea.vmem [#allocation0], 450
    %258 = vst.msk [vmem:[%s257] ss:$8 sm:$0xf] %vm256, %v255
    %s259 = scalar_lea.vmem [#allocation0], 450
    %260 = vst.msk [vmem:[%s259] ss:$8 sm:$0xf0] %vm256, %v255
    %s261 = scalar_lea.vmem %s0, 64
    %v262 = vld [vmem:[%s261] sm:$0xff]
    %263 = vrot.lane.b32.xlu0 %v262, 64
    %v264 = vpop.permute.xlu0 %263
    %vm265 = vcmask 261120
    %s266 = scalar_lea.vmem [#allocation0], 514
    %267 = vst.msk [vmem:[%s266] ss:$8 sm:$0xf] %vm265, %v264
    %s268 = scalar_lea.vmem [#allocation0], 514
    %269 = vst.msk [vmem:[%s268] ss:$8 sm:$0xf0] %vm265, %v264
    %s270 = scalar_lea.vmem %s0, 72
    %v271 = vld [vmem:[%s270] sm:$0xff]
    %272 = vrot.lane.b32.xlu0 %v271, 64
    %v273 = vpop.permute.xlu0 %272
    %vm274 = vcmask 261120
    %s275 = scalar_lea.vmem [#allocation0], 578
    %276 = vst.msk [vmem:[%s275] ss:$8 sm:$0xf] %vm274, %v273
    %s277 = scalar_lea.vmem [#allocation0], 578
    %278 = vst.msk [vmem:[%s277] ss:$8 sm:$0xf0] %vm274, %v273
    %s279 = scalar_lea.vmem %s0, 80
    %v280 = vld [vmem:[%s279] sm:$0xff]
    %281 = vrot.lane.b32.xlu0 %v280, 64
    %v282 = vpop.permute.xlu0 %281
    %vm283 = vcmask 261120
    %s284 = scalar_lea.vmem [#allocation0], 642
    %285 = vst.msk [vmem:[%s284] ss:$8 sm:$0xf] %vm283, %v282
    %s286 = scalar_lea.vmem [#allocation0], 642
    %287 = vst.msk [vmem:[%s286] ss:$8 sm:$0xf0] %vm283, %v282
    %s288 = scalar_lea.vmem %s0, 88
    %v289 = vld [vmem:[%s288] sm:$0xff]
    %290 = vrot.lane.b32.xlu0 %v289, 64
    %v291 = vpop.permute.xlu0 %290
    %vm292 = vcmask 261120
    %s293 = scalar_lea.vmem [#allocation0], 706
    %294 = vst.msk [vmem:[%s293] ss:$8 sm:$0xf] %vm292, %v291
    %s295 = scalar_lea.vmem [#allocation0], 706
    %296 = vst.msk [vmem:[%s295] ss:$8 sm:$0xf0] %vm292, %v291
    %v297 = vld [vmem:[%s0] sm:$0xff]
    %298 = vrot.lane.b32.xlu0 %v297, 32
    %v299 = vpop.permute.xlu0 %298
    %vm300 = vcmask 261120
    %s301 = scalar_lea.vmem [#allocation0], 3
    %302 = vst.msk [vmem:[%s301] ss:$8 sm:$0xf] %vm300, %v299
    %s303 = scalar_lea.vmem [#allocation0], 3
    %304 = vst.msk [vmem:[%s303] ss:$8 sm:$0xf0] %vm300, %v299
    %s305 = scalar_lea.vmem %s0, 8
    %v306 = vld [vmem:[%s305] sm:$0xff]
    %307 = vrot.lane.b32.xlu0 %v306, 32
    %v308 = vpop.permute.xlu0 %307
    %vm309 = vcmask 261120
    %s310 = scalar_lea.vmem [#allocation0], 67
    %311 = vst.msk [vmem:[%s310] ss:$8 sm:$0xf] %vm309, %v308
    %s312 = scalar_lea.vmem [#allocation0], 67
    %313 = vst.msk [vmem:[%s312] ss:$8 sm:$0xf0] %vm309, %v308
    %s314 = scalar_lea.vmem %s0, 16
    %v315 = vld [vmem:[%s314] sm:$0xff]
    %316 = vrot.lane.b32.xlu0 %v315, 32
    %v317 = vpop.permute.xlu0 %316
    %vm318 = vcmask 261120
    %s319 = scalar_lea.vmem [#allocation0], 131
    %320 = vst.msk [vmem:[%s319] ss:$8 sm:$0xf] %vm318, %v317
    %s321 = scalar_lea.vmem [#allocation0], 131
    %322 = vst.msk [vmem:[%s321] ss:$8 sm:$0xf0] %vm318, %v317
    %s323 = scalar_lea.vmem %s0, 24
    %v324 = vld [vmem:[%s323] sm:$0xff]
    %325 = vrot.lane.b32.xlu0 %v324, 32
    %v326 = vpop.permute.xlu0 %325
    %vm327 = vcmask 261120
    %s328 = scalar_lea.vmem [#allocation0], 195
    %329 = vst.msk [vmem:[%s328] ss:$8 sm:$0xf] %vm327, %v326
    %s330 = scalar_lea.vmem [#allocation0], 195
    %331 = vst.msk [vmem:[%s330] ss:$8 sm:$0xf0] %vm327, %v326
    %s332 = scalar_lea.vmem %s0, 32
    %v333 = vld [vmem:[%s332] sm:$0xff]
    %334 = vrot.lane.b32.xlu0 %v333, 32
    %v335 = vpop.permute.xlu0 %334
    %vm336 = vcmask 261120
    %s337 = scalar_lea.vmem [#allocation0], 259
    %338 = vst.msk [vmem:[%s337] ss:$8 sm:$0xf] %vm336, %v335
    %s339 = scalar_lea.vmem [#allocation0], 259
    %340 = vst.msk [vmem:[%s339] ss:$8 sm:$0xf0] %vm336, %v335
    %s341 = scalar_lea.vmem %s0, 40
    %v342 = vld [vmem:[%s341] sm:$0xff]
    %343 = vrot.lane.b32.xlu0 %v342, 32
    %v344 = vpop.permute.xlu0 %343
    %vm345 = vcmask 261120
    %s346 = scalar_lea.vmem [#allocation0], 323
    %347 = vst.msk [vmem:[%s346] ss:$8 sm:$0xf] %vm345, %v344
    %s348 = scalar_lea.vmem [#allocation0], 323
    %349 = vst.msk [vmem:[%s348] ss:$8 sm:$0xf0] %vm345, %v344
    %s350 = scalar_lea.vmem %s0, 48
    %v351 = vld [vmem:[%s350] sm:$0xff]
    %352 = vrot.lane.b32.xlu0 %v351, 32
    %v353 = vpop.permute.xlu0 %352
    %vm354 = vcmask 261120
    %s355 = scalar_lea.vmem [#allocation0], 387
    %356 = vst.msk [vmem:[%s355] ss:$8 sm:$0xf] %vm354, %v353
    %s357 = scalar_lea.vmem [#allocation0], 387
    %358 = vst.msk [vmem:[%s357] ss:$8 sm:$0xf0] %vm354, %v353
    %s359 = scalar_lea.vmem %s0, 56
    %v360 = vld [vmem:[%s359] sm:$0xff]
    %361 = vrot.lane.b32.xlu0 %v360, 32
    %v362 = vpop.permute.xlu0 %361
    %vm363 = vcmask 261120
    %s364 = scalar_lea.vmem [#allocation0], 451
    %365 = vst.msk [vmem:[%s364] ss:$8 sm:$0xf] %vm363, %v362
    %s366 = scalar_lea.vmem [#allocation0], 451
    %367 = vst.msk [vmem:[%s366] ss:$8 sm:$0xf0] %vm363, %v362
    %s368 = scalar_lea.vmem %s0, 64
    %v369 = vld [vmem:[%s368] sm:$0xff]
    %370 = vrot.lane.b32.xlu0 %v369, 32
    %v371 = vpop.permute.xlu0 %370
    %vm372 = vcmask 261120
    %s373 = scalar_lea.vmem [#allocation0], 515
    %374 = vst.msk [vmem:[%s373] ss:$8 sm:$0xf] %vm372, %v371
    %s375 = scalar_lea.vmem [#allocation0], 515
    %376 = vst.msk [vmem:[%s375] ss:$8 sm:$0xf0] %vm372, %v371
    %s377 = scalar_lea.vmem %s0, 72
    %v378 = vld [vmem:[%s377] sm:$0xff]
    %379 = vrot.lane.b32.xlu0 %v378, 32
    %v380 = vpop.permute.xlu0 %379
    %vm381 = vcmask 261120
    %s382 = scalar_lea.vmem [#allocation0], 579
    %383 = vst.msk [vmem:[%s382] ss:$8 sm:$0xf] %vm381, %v380
    %s384 = scalar_lea.vmem [#allocation0], 579
    %385 = vst.msk [vmem:[%s384] ss:$8 sm:$0xf0] %vm381, %v380
    %s386 = scalar_lea.vmem %s0, 80
    %v387 = vld [vmem:[%s386] sm:$0xff]
    %388 = vrot.lane.b32.xlu0 %v387, 32
    %v389 = vpop.permute.xlu0 %388
    %vm390 = vcmask 261120
    %s391 = scalar_lea.vmem [#allocation0], 643
    %392 = vst.msk [vmem:[%s391] ss:$8 sm:$0xf] %vm390, %v389
    %s393 = scalar_lea.vmem [#allocation0], 643
    %394 = vst.msk [vmem:[%s393] ss:$8 sm:$0xf0] %vm390, %v389
    %s395 = scalar_lea.vmem %s0, 88
    %v396 = vld [vmem:[%s395] sm:$0xff]
    %397 = vrot.lane.b32.xlu0 %v396, 32
    %v398 = vpop.permute.xlu0 %397
    %vm399 = vcmask 261120
    %s400 = scalar_lea.vmem [#allocation0], 707
    %401 = vst.msk [vmem:[%s400] ss:$8 sm:$0xf] %vm399, %v398
    %s402 = scalar_lea.vmem [#allocation0], 707
    %403 = vst.msk [vmem:[%s402] ss:$8 sm:$0xf0] %vm399, %v398
    %s405 = sshll.u32 1, 4
    %s406 = ssub.s32 %s405, 1
    %v408 = vld [vmem:[#allocation0] sm:%s406]
    %s409 = sshll.u32 1, 4
    %s410 = ssub.s32 %s409, 1
    %411 = vst [vmem:[%s1] sm:%s410] %v408
    %s412 = scalar_lea.vmem [#allocation0], 8
    %v413 = vld [vmem:[%s412] sm:%s406]
    %s414 = sshll.u32 1, 4
    %s415 = ssub.s32 %s414, 1
    %s416 = scalar_lea.vmem %s1, 4
    %417 = vst [vmem:[%s416] sm:%s415] %v413
    %s418 = scalar_lea.vmem [#allocation0], 16
    %v419 = vld [vmem:[%s418] sm:%s406]
    %s420 = sshll.u32 1, 4
    %s421 = ssub.s32 %s420, 1
    %s422 = smul.addr 4, 2
    %s423 = scalar_lea.vmem %s1, %s422
    %424 = vst [vmem:[%s423] sm:%s421] %v419
    %s425 = scalar_lea.vmem [#allocation0], 24
    %v426 = vld [vmem:[%s425] sm:%s406]
    %s427 = sshll.u32 1, 4
    %s428 = ssub.s32 %s427, 1
    %s429 = smul.addr 4, 3
    %s430 = scalar_lea.vmem %s1, %s429
    %431 = vst [vmem:[%s430] sm:%s428] %v426
    %s432 = scalar_lea.vmem [#allocation0], 32
    %v433 = vld [vmem:[%s432] sm:%s406]
    %s434 = sshll.u32 1, 4
    %s435 = ssub.s32 %s434, 1
    %s436 = smul.addr 4, 4
    %s437 = scalar_lea.vmem %s1, %s436
    %438 = vst [vmem:[%s437] sm:%s435] %v433
    %s439 = scalar_lea.vmem [#allocation0], 40
    %v440 = vld [vmem:[%s439] sm:%s406]
    %s441 = sshll.u32 1, 4
    %s442 = ssub.s32 %s441, 1
    %s443 = smul.addr 4, 5
    %s444 = scalar_lea.vmem %s1, %s443
    %445 = vst [vmem:[%s444] sm:%s442] %v440
    %s446 = scalar_lea.vmem [#allocation0], 48
    %v447 = vld [vmem:[%s446] sm:%s406]
    %s448 = sshll.u32 1, 4
    %s449 = ssub.s32 %s448, 1
    %s450 = smul.addr 4, 6
    %s451 = scalar_lea.vmem %s1, %s450
    %452 = vst [vmem:[%s451] sm:%s449] %v447
    %s453 = scalar_lea.vmem [#allocation0], 56
    %v454 = vld [vmem:[%s453] sm:%s406]
    %s455 = sshll.u32 1, 4
    %s456 = ssub.s32 %s455, 1
    %s457 = smul.addr 4, 7
    %s458 = scalar_lea.vmem %s1, %s457
    %459 = vst [vmem:[%s458] sm:%s456] %v454
    %s460 = scalar_lea.vmem [#allocation0], 64
    %v461 = vld [vmem:[%s460] sm:%s406]
    %s462 = sshll.u32 1, 4
    %s463 = ssub.s32 %s462, 1
    %s464 = smul.addr 4, 8
    %s465 = scalar_lea.vmem %s1, %s464
    %466 = vst [vmem:[%s465] sm:%s463] %v461
    %s467 = scalar_lea.vmem [#allocation0], 72
    %v468 = vld [vmem:[%s467] sm:%s406]
    %s469 = sshll.u32 1, 4
    %s470 = ssub.s32 %s469, 1
    %s471 = smul.addr 4, 9
    %s472 = scalar_lea.vmem %s1, %s471
    %473 = vst [vmem:[%s472] sm:%s470] %v468
    %s474 = scalar_lea.vmem [#allocation0], 80
    %v475 = vld [vmem:[%s474] sm:%s406]
    %s476 = sshll.u32 1, 4
    %s477 = ssub.s32 %s476, 1
    %s478 = smul.addr 4, 10
    %s479 = scalar_lea.vmem %s1, %s478
    %480 = vst [vmem:[%s479] sm:%s477] %v475
    %s481 = scalar_lea.vmem [#allocation0], 88
    %v482 = vld [vmem:[%s481] sm:%s406]
    %s483 = sshll.u32 1, 4
    %s484 = ssub.s32 %s483, 1
    %s485 = smul.addr 4, 11
    %s486 = scalar_lea.vmem %s1, %s485
    %487 = vst [vmem:[%s486] sm:%s484] %v482
    %s488 = scalar_lea.vmem [#allocation0], 96
    %v489 = vld [vmem:[%s488] sm:%s406]
    %s490 = sshll.u32 1, 4
    %s491 = ssub.s32 %s490, 1
    %s492 = smul.addr 4, 12
    %s493 = scalar_lea.vmem %s1, %s492
    %494 = vst [vmem:[%s493] sm:%s491] %v489
    %s495 = scalar_lea.vmem [#allocation0], 104
    %v496 = vld [vmem:[%s495] sm:%s406]
    %s497 = sshll.u32 1, 4
    %s498 = ssub.s32 %s497, 1
    %s499 = smul.addr 4, 13
    %s500 = scalar_lea.vmem %s1, %s499
    %501 = vst [vmem:[%s500] sm:%s498] %v496
    %s502 = scalar_lea.vmem [#allocation0], 112
    %v503 = vld [vmem:[%s502] sm:%s406]
    %s504 = sshll.u32 1, 4
    %s505 = ssub.s32 %s504, 1
    %s506 = smul.addr 4, 14
    %s507 = scalar_lea.vmem %s1, %s506
    %508 = vst [vmem:[%s507] sm:%s505] %v503
    %s509 = scalar_lea.vmem [#allocation0], 120
    %v510 = vld [vmem:[%s509] sm:%s406]
    %s511 = sshll.u32 1, 4
    %s512 = ssub.s32 %s511, 1
    %s513 = smul.addr 4, 15
    %s514 = scalar_lea.vmem %s1, %s513
    %515 = vst [vmem:[%s514] sm:%s512] %v510
    %s516 = scalar_lea.vmem [#allocation0], 128
    %v517 = vld [vmem:[%s516] sm:%s406]
    %s518 = sshll.u32 1, 4
    %s519 = ssub.s32 %s518, 1
    %s520 = smul.addr 4, 16
    %s521 = scalar_lea.vmem %s1, %s520
    %522 = vst [vmem:[%s521] sm:%s519] %v517
    %s523 = scalar_lea.vmem [#allocation0], 136
    %v524 = vld [vmem:[%s523] sm:%s406]
    %s525 = sshll.u32 1, 4
    %s526 = ssub.s32 %s525, 1
    %s527 = smul.addr 4, 17
    %s528 = scalar_lea.vmem %s1, %s527
    %529 = vst [vmem:[%s528] sm:%s526] %v524
    %s530 = scalar_lea.vmem [#allocation0], 144
    %v531 = vld [vmem:[%s530] sm:%s406]
    %s532 = sshll.u32 1, 4
    %s533 = ssub.s32 %s532, 1
    %s534 = smul.addr 4, 18
    %s535 = scalar_lea.vmem %s1, %s534
    %536 = vst [vmem:[%s535] sm:%s533] %v531
    %s537 = scalar_lea.vmem [#allocation0], 152
    %v538 = vld [vmem:[%s537] sm:%s406]
    %s539 = sshll.u32 1, 4
    %s540 = ssub.s32 %s539, 1
    %s541 = smul.addr 4, 19
    %s542 = scalar_lea.vmem %s1, %s541
    %543 = vst [vmem:[%s542] sm:%s540] %v538
    %s544 = scalar_lea.vmem [#allocation0], 160
    %v545 = vld [vmem:[%s544] sm:%s406]
    %s546 = sshll.u32 1, 4
    %s547 = ssub.s32 %s546, 1
    %s548 = smul.addr 4, 20
    %s549 = scalar_lea.vmem %s1, %s548
    %550 = vst [vmem:[%s549] sm:%s547] %v545
    %s551 = scalar_lea.vmem [#allocation0], 168
    %v552 = vld [vmem:[%s551] sm:%s406]
    %s553 = sshll.u32 1, 4
    %s554 = ssub.s32 %s553, 1
    %s555 = smul.addr 4, 21
    %s556 = scalar_lea.vmem %s1, %s555
    %557 = vst [vmem:[%s556] sm:%s554] %v552
    %s558 = scalar_lea.vmem [#allocation0], 176
    %v559 = vld [vmem:[%s558] sm:%s406]
    %s560 = sshll.u32 1, 4
    %s561 = ssub.s32 %s560, 1
    %s562 = smul.addr 4, 22
    %s563 = scalar_lea.vmem %s1, %s562
    %564 = vst [vmem:[%s563] sm:%s561] %v559
    %s565 = scalar_lea.vmem [#allocation0], 184
    %v566 = vld [vmem:[%s565] sm:%s406]
    %s567 = sshll.u32 1, 4
    %s568 = ssub.s32 %s567, 1
    %s569 = smul.addr 4, 23
    %s570 = scalar_lea.vmem %s1, %s569
    %571 = vst [vmem:[%s570] sm:%s568] %v566
    %s572 = scalar_lea.vmem [#allocation0], 192
    %v573 = vld [vmem:[%s572] sm:%s406]
    %s574 = sshll.u32 1, 4
    %s575 = ssub.s32 %s574, 1
    %s576 = smul.addr 4, 24
    %s577 = scalar_lea.vmem %s1, %s576
    %578 = vst [vmem:[%s577] sm:%s575] %v573
    %s579 = scalar_lea.vmem [#allocation0], 200
    %v580 = vld [vmem:[%s579] sm:%s406]
    %s581 = sshll.u32 1, 4
    %s582 = ssub.s32 %s581, 1
    %s583 = smul.addr 4, 25
    %s584 = scalar_lea.vmem %s1, %s583
    %585 = vst [vmem:[%s584] sm:%s582] %v580
    %s586 = scalar_lea.vmem [#allocation0], 208
    %v587 = vld [vmem:[%s586] sm:%s406]
    %s588 = sshll.u32 1, 4
    %s589 = ssub.s32 %s588, 1
    %s590 = smul.addr 4, 26
    %s591 = scalar_lea.vmem %s1, %s590
    %592 = vst [vmem:[%s591] sm:%s589] %v587
    %s593 = scalar_lea.vmem [#allocation0], 216
    %v594 = vld [vmem:[%s593] sm:%s406]
    %s595 = sshll.u32 1, 4
    %s596 = ssub.s32 %s595, 1
    %s597 = smul.addr 4, 27
    %s598 = scalar_lea.vmem %s1, %s597
    %599 = vst [vmem:[%s598] sm:%s596] %v594
    %s600 = scalar_lea.vmem [#allocation0], 224
    %v601 = vld [vmem:[%s600] sm:%s406]
    %s602 = sshll.u32 1, 4
    %s603 = ssub.s32 %s602, 1
    %s604 = smul.addr 4, 28
    %s605 = scalar_lea.vmem %s1, %s604
    %606 = vst [vmem:[%s605] sm:%s603] %v601
    %s607 = scalar_lea.vmem [#allocation0], 232
    %v608 = vld [vmem:[%s607] sm:%s406]
    %s609 = sshll.u32 1, 4
    %s610 = ssub.s32 %s609, 1
    %s611 = smul.addr 4, 29
    %s612 = scalar_lea.vmem %s1, %s611
    %613 = vst [vmem:[%s612] sm:%s610] %v608
    %s614 = scalar_lea.vmem [#allocation0], 240
    %v615 = vld [vmem:[%s614] sm:%s406]
    %s616 = sshll.u32 1, 4
    %s617 = ssub.s32 %s616, 1
    %s618 = smul.addr 4, 30
    %s619 = scalar_lea.vmem %s1, %s618
    %620 = vst [vmem:[%s619] sm:%s617] %v615
    %s621 = scalar_lea.vmem [#allocation0], 248
    %v622 = vld [vmem:[%s621] sm:%s406]
    %s623 = sshll.u32 1, 4
    %s624 = ssub.s32 %s623, 1
    %s625 = smul.addr 4, 31
    %s626 = scalar_lea.vmem %s1, %s625
    %627 = vst [vmem:[%s626] sm:%s624] %v622
    %s628 = scalar_lea.vmem [#allocation0], 256
    %v629 = vld [vmem:[%s628] sm:%s406]
    %s630 = sshll.u32 1, 4
    %s631 = ssub.s32 %s630, 1
    %s632 = smul.addr 4, 32
    %s633 = scalar_lea.vmem %s1, %s632
    %634 = vst [vmem:[%s633] sm:%s631] %v629
    %s635 = scalar_lea.vmem [#allocation0], 264
    %v636 = vld [vmem:[%s635] sm:%s406]
    %s637 = sshll.u32 1, 4
    %s638 = ssub.s32 %s637, 1
    %s639 = smul.addr 4, 33
    %s640 = scalar_lea.vmem %s1, %s639
    %641 = vst [vmem:[%s640] sm:%s638] %v636
    %s642 = scalar_lea.vmem [#allocation0], 272
    %v643 = vld [vmem:[%s642] sm:%s406]
    %s644 = sshll.u32 1, 4
    %s645 = ssub.s32 %s644, 1
    %s646 = smul.addr 4, 34
    %s647 = scalar_lea.vmem %s1, %s646
    %648 = vst [vmem:[%s647] sm:%s645] %v643
    %s649 = scalar_lea.vmem [#allocation0], 280
    %v650 = vld [vmem:[%s649] sm:%s406]
    %s651 = sshll.u32 1, 4
    %s652 = ssub.s32 %s651, 1
    %s653 = smul.addr 4, 35
    %s654 = scalar_lea.vmem %s1, %s653
    %655 = vst [vmem:[%s654] sm:%s652] %v650
    %s656 = scalar_lea.vmem [#allocation0], 288
    %v657 = vld [vmem:[%s656] sm:%s406]
    %s658 = sshll.u32 1, 4
    %s659 = ssub.s32 %s658, 1
    %s660 = smul.addr 4, 36
    %s661 = scalar_lea.vmem %s1, %s660
    %662 = vst [vmem:[%s661] sm:%s659] %v657
    %s663 = scalar_lea.vmem [#allocation0], 296
    %v664 = vld [vmem:[%s663] sm:%s406]
    %s665 = sshll.u32 1, 4
    %s666 = ssub.s32 %s665, 1
    %s667 = smul.addr 4, 37
    %s668 = scalar_lea.vmem %s1, %s667
    %669 = vst [vmem:[%s668] sm:%s666] %v664
    %s670 = scalar_lea.vmem [#allocation0], 304
    %v671 = vld [vmem:[%s670] sm:%s406]
    %s672 = sshll.u32 1, 4
    %s673 = ssub.s32 %s672, 1
    %s674 = smul.addr 4, 38
    %s675 = scalar_lea.vmem %s1, %s674
    %676 = vst [vmem:[%s675] sm:%s673] %v671
    %s677 = scalar_lea.vmem [#allocation0], 312
    %v678 = vld [vmem:[%s677] sm:%s406]
    %s679 = sshll.u32 1, 4
    %s680 = ssub.s32 %s679, 1
    %s681 = smul.addr 4, 39
    %s682 = scalar_lea.vmem %s1, %s681
    %683 = vst [vmem:[%s682] sm:%s680] %v678
    %s684 = scalar_lea.vmem [#allocation0], 320
    %v685 = vld [vmem:[%s684] sm:%s406]
    %s686 = sshll.u32 1, 4
    %s687 = ssub.s32 %s686, 1
    %s688 = smul.addr 4, 40
    %s689 = scalar_lea.vmem %s1, %s688
    %690 = vst [vmem:[%s689] sm:%s687] %v685
    %s691 = scalar_lea.vmem [#allocation0], 328
    %v692 = vld [vmem:[%s691] sm:%s406]
    %s693 = sshll.u32 1, 4
    %s694 = ssub.s32 %s693, 1
    %s695 = smul.addr 4, 41
    %s696 = scalar_lea.vmem %s1, %s695
    %697 = vst [vmem:[%s696] sm:%s694] %v692
    %s698 = scalar_lea.vmem [#allocation0], 336
    %v699 = vld [vmem:[%s698] sm:%s406]
    %s700 = sshll.u32 1, 4
    %s701 = ssub.s32 %s700, 1
    %s702 = smul.addr 4, 42
    %s703 = scalar_lea.vmem %s1, %s702
    %704 = vst [vmem:[%s703] sm:%s701] %v699
    %s705 = scalar_lea.vmem [#allocation0], 344
    %v706 = vld [vmem:[%s705] sm:%s406]
    %s707 = sshll.u32 1, 4
    %s708 = ssub.s32 %s707, 1
    %s709 = smul.addr 4, 43
    %s710 = scalar_lea.vmem %s1, %s709
    %711 = vst [vmem:[%s710] sm:%s708] %v706
    %s712 = scalar_lea.vmem [#allocation0], 352
    %v713 = vld [vmem:[%s712] sm:%s406]
    %s714 = sshll.u32 1, 4
    %s715 = ssub.s32 %s714, 1
    %s716 = smul.addr 4, 44
    %s717 = scalar_lea.vmem %s1, %s716
    %718 = vst [vmem:[%s717] sm:%s715] %v713
    %s719 = scalar_lea.vmem [#allocation0], 360
    %v720 = vld [vmem:[%s719] sm:%s406]
    %s721 = sshll.u32 1, 4
    %s722 = ssub.s32 %s721, 1
    %s723 = smul.addr 4, 45
    %s724 = scalar_lea.vmem %s1, %s723
    %725 = vst [vmem:[%s724] sm:%s722] %v720
    %s726 = scalar_lea.vmem [#allocation0], 368
    %v727 = vld [vmem:[%s726] sm:%s406]
    %s728 = sshll.u32 1, 4
    %s729 = ssub.s32 %s728, 1
    %s730 = smul.addr 4, 46
    %s731 = scalar_lea.vmem %s1, %s730
    %732 = vst [vmem:[%s731] sm:%s729] %v727
    %s733 = scalar_lea.vmem [#allocation0], 376
    %v734 = vld [vmem:[%s733] sm:%s406]
    %s735 = sshll.u32 1, 4
    %s736 = ssub.s32 %s735, 1
    %s737 = smul.addr 4, 47
    %s738 = scalar_lea.vmem %s1, %s737
    %739 = vst [vmem:[%s738] sm:%s736] %v734
    %s740 = scalar_lea.vmem [#allocation0], 384
    %v741 = vld [vmem:[%s740] sm:%s406]
    %s742 = sshll.u32 1, 4
    %s743 = ssub.s32 %s742, 1
    %s744 = smul.addr 4, 48
    %s745 = scalar_lea.vmem %s1, %s744
    %746 = vst [vmem:[%s745] sm:%s743] %v741
    %s747 = scalar_lea.vmem [#allocation0], 392
    %v748 = vld [vmem:[%s747] sm:%s406]
    %s749 = sshll.u32 1, 4
    %s750 = ssub.s32 %s749, 1
    %s751 = smul.addr 4, 49
    %s752 = scalar_lea.vmem %s1, %s751
    %753 = vst [vmem:[%s752] sm:%s750] %v748
    %s754 = scalar_lea.vmem [#allocation0], 400
    %v755 = vld [vmem:[%s754] sm:%s406]
    %s756 = sshll.u32 1, 4
    %s757 = ssub.s32 %s756, 1
    %s758 = smul.addr 4, 50
    %s759 = scalar_lea.vmem %s1, %s758
    %760 = vst [vmem:[%s759] sm:%s757] %v755
    %s761 = scalar_lea.vmem [#allocation0], 408
    %v762 = vld [vmem:[%s761] sm:%s406]
    %s763 = sshll.u32 1, 4
    %s764 = ssub.s32 %s763, 1
    %s765 = smul.addr 4, 51
    %s766 = scalar_lea.vmem %s1, %s765
    %767 = vst [vmem:[%s766] sm:%s764] %v762
    %s768 = scalar_lea.vmem [#allocation0], 416
    %v769 = vld [vmem:[%s768] sm:%s406]
    %s770 = sshll.u32 1, 4
    %s771 = ssub.s32 %s770, 1
    %s772 = smul.addr 4, 52
    %s773 = scalar_lea.vmem %s1, %s772
    %774 = vst [vmem:[%s773] sm:%s771] %v769
    %s775 = scalar_lea.vmem [#allocation0], 424
    %v776 = vld [vmem:[%s775] sm:%s406]
    %s777 = sshll.u32 1, 4
    %s778 = ssub.s32 %s777, 1
    %s779 = smul.addr 4, 53
    %s780 = scalar_lea.vmem %s1, %s779
    %781 = vst [vmem:[%s780] sm:%s778] %v776
    %s782 = scalar_lea.vmem [#allocation0], 432
    %v783 = vld [vmem:[%s782] sm:%s406]
    %s784 = sshll.u32 1, 4
    %s785 = ssub.s32 %s784, 1
    %s786 = smul.addr 4, 54
    %s787 = scalar_lea.vmem %s1, %s786
    %788 = vst [vmem:[%s787] sm:%s785] %v783
    %s789 = scalar_lea.vmem [#allocation0], 440
    %v790 = vld [vmem:[%s789] sm:%s406]
    %s791 = sshll.u32 1, 4
    %s792 = ssub.s32 %s791, 1
    %s793 = smul.addr 4, 55
    %s794 = scalar_lea.vmem %s1, %s793
    %795 = vst [vmem:[%s794] sm:%s792] %v790
    %s796 = scalar_lea.vmem [#allocation0], 448
    %v797 = vld [vmem:[%s796] sm:%s406]
    %s798 = sshll.u32 1, 4
    %s799 = ssub.s32 %s798, 1
    %s800 = smul.addr 4, 56
    %s801 = scalar_lea.vmem %s1, %s800
    %802 = vst [vmem:[%s801] sm:%s799] %v797
    %s803 = scalar_lea.vmem [#allocation0], 456
    %v804 = vld [vmem:[%s803] sm:%s406]
    %s805 = sshll.u32 1, 4
    %s806 = ssub.s32 %s805, 1
    %s807 = smul.addr 4, 57
    %s808 = scalar_lea.vmem %s1, %s807
    %809 = vst [vmem:[%s808] sm:%s806] %v804
    %s810 = scalar_lea.vmem [#allocation0], 464
    %v811 = vld [vmem:[%s810] sm:%s406]
    %s812 = sshll.u32 1, 4
    %s813 = ssub.s32 %s812, 1
    %s814 = smul.addr 4, 58
    %s815 = scalar_lea.vmem %s1, %s814
    %816 = vst [vmem:[%s815] sm:%s813] %v811
    %s817 = scalar_lea.vmem [#allocation0], 472
    %v818 = vld [vmem:[%s817] sm:%s406]
    %s819 = sshll.u32 1, 4
    %s820 = ssub.s32 %s819, 1
    %s821 = smul.addr 4, 59
    %s822 = scalar_lea.vmem %s1, %s821
    %823 = vst [vmem:[%s822] sm:%s820] %v818
    %s824 = scalar_lea.vmem [#allocation0], 480
    %v825 = vld [vmem:[%s824] sm:%s406]
    %s826 = sshll.u32 1, 4
    %s827 = ssub.s32 %s826, 1
    %s828 = smul.addr 4, 60
    %s829 = scalar_lea.vmem %s1, %s828
    %830 = vst [vmem:[%s829] sm:%s827] %v825
    %s831 = scalar_lea.vmem [#allocation0], 488
    %v832 = vld [vmem:[%s831] sm:%s406]
    %s833 = sshll.u32 1, 4
    %s834 = ssub.s32 %s833, 1
    %s835 = smul.addr 4, 61
    %s836 = scalar_lea.vmem %s1, %s835
    %837 = vst [vmem:[%s836] sm:%s834] %v832
    %s838 = scalar_lea.vmem [#allocation0], 496
    %v839 = vld [vmem:[%s838] sm:%s406]
    %s840 = sshll.u32 1, 4
    %s841 = ssub.s32 %s840, 1
    %s842 = smul.addr 4, 62
    %s843 = scalar_lea.vmem %s1, %s842
    %844 = vst [vmem:[%s843] sm:%s841] %v839
    %s845 = scalar_lea.vmem [#allocation0], 504
    %v846 = vld [vmem:[%s845] sm:%s406]
    %s847 = sshll.u32 1, 4
    %s848 = ssub.s32 %s847, 1
    %s849 = smul.addr 4, 63
    %s850 = scalar_lea.vmem %s1, %s849
    %851 = vst [vmem:[%s850] sm:%s848] %v846
    %s852 = scalar_lea.vmem [#allocation0], 512
    %v853 = vld [vmem:[%s852] sm:%s406]
    %s854 = sshll.u32 1, 4
    %s855 = ssub.s32 %s854, 1
    %s856 = smul.addr 4, 64
    %s857 = scalar_lea.vmem %s1, %s856
    %858 = vst [vmem:[%s857] sm:%s855] %v853
    %s859 = scalar_lea.vmem [#allocation0], 520
    %v860 = vld [vmem:[%s859] sm:%s406]
    %s861 = sshll.u32 1, 4
    %s862 = ssub.s32 %s861, 1
    %s863 = smul.addr 4, 65
    %s864 = scalar_lea.vmem %s1, %s863
    %865 = vst [vmem:[%s864] sm:%s862] %v860
    %s866 = scalar_lea.vmem [#allocation0], 528
    %v867 = vld [vmem:[%s866] sm:%s406]
    %s868 = sshll.u32 1, 4
    %s869 = ssub.s32 %s868, 1
    %s870 = smul.addr 4, 66
    %s871 = scalar_lea.vmem %s1, %s870
    %872 = vst [vmem:[%s871] sm:%s869] %v867
    %s873 = scalar_lea.vmem [#allocation0], 536
    %v874 = vld [vmem:[%s873] sm:%s406]
    %s875 = sshll.u32 1, 4
    %s876 = ssub.s32 %s875, 1
    %s877 = smul.addr 4, 67
    %s878 = scalar_lea.vmem %s1, %s877
    %879 = vst [vmem:[%s878] sm:%s876] %v874
    %s880 = scalar_lea.vmem [#allocation0], 544
    %v881 = vld [vmem:[%s880] sm:%s406]
    %s882 = sshll.u32 1, 4
    %s883 = ssub.s32 %s882, 1
    %s884 = smul.addr 4, 68
    %s885 = scalar_lea.vmem %s1, %s884
    %886 = vst [vmem:[%s885] sm:%s883] %v881
    %s887 = scalar_lea.vmem [#allocation0], 552
    %v888 = vld [vmem:[%s887] sm:%s406]
    %s889 = sshll.u32 1, 4
    %s890 = ssub.s32 %s889, 1
    %s891 = smul.addr 4, 69
    %s892 = scalar_lea.vmem %s1, %s891
    %893 = vst [vmem:[%s892] sm:%s890] %v888
    %s894 = scalar_lea.vmem [#allocation0], 560
    %v895 = vld [vmem:[%s894] sm:%s406]
    %s896 = sshll.u32 1, 4
    %s897 = ssub.s32 %s896, 1
    %s898 = smul.addr 4, 70
    %s899 = scalar_lea.vmem %s1, %s898
    %900 = vst [vmem:[%s899] sm:%s897] %v895
    %s901 = scalar_lea.vmem [#allocation0], 568
    %v902 = vld [vmem:[%s901] sm:%s406]
    %s903 = sshll.u32 1, 4
    %s904 = ssub.s32 %s903, 1
    %s905 = smul.addr 4, 71
    %s906 = scalar_lea.vmem %s1, %s905
    %907 = vst [vmem:[%s906] sm:%s904] %v902
    %s908 = scalar_lea.vmem [#allocation0], 576
    %v909 = vld [vmem:[%s908] sm:%s406]
    %s910 = sshll.u32 1, 4
    %s911 = ssub.s32 %s910, 1
    %s912 = smul.addr 4, 72
    %s913 = scalar_lea.vmem %s1, %s912
    %914 = vst [vmem:[%s913] sm:%s911] %v909
    %s915 = scalar_lea.vmem [#allocation0], 584
    %v916 = vld [vmem:[%s915] sm:%s406]
    %s917 = sshll.u32 1, 4
    %s918 = ssub.s32 %s917, 1
    %s919 = smul.addr 4, 73
    %s920 = scalar_lea.vmem %s1, %s919
    %921 = vst [vmem:[%s920] sm:%s918] %v916
    %s922 = scalar_lea.vmem [#allocation0], 592
    %v923 = vld [vmem:[%s922] sm:%s406]
    %s924 = sshll.u32 1, 4
    %s925 = ssub.s32 %s924, 1
    %s926 = smul.addr 4, 74
    %s927 = scalar_lea.vmem %s1, %s926
    %928 = vst [vmem:[%s927] sm:%s925] %v923
    %s929 = scalar_lea.vmem [#allocation0], 600
    %v930 = vld [vmem:[%s929] sm:%s406]
    %s931 = sshll.u32 1, 4
    %s932 = ssub.s32 %s931, 1
    %s933 = smul.addr 4, 75
    %s934 = scalar_lea.vmem %s1, %s933
    %935 = vst [vmem:[%s934] sm:%s932] %v930
    %s936 = scalar_lea.vmem [#allocation0], 608
    %v937 = vld [vmem:[%s936] sm:%s406]
    %s938 = sshll.u32 1, 4
    %s939 = ssub.s32 %s938, 1
    %s940 = smul.addr 4, 76
    %s941 = scalar_lea.vmem %s1, %s940
    %942 = vst [vmem:[%s941] sm:%s939] %v937
    %s943 = scalar_lea.vmem [#allocation0], 616
    %v944 = vld [vmem:[%s943] sm:%s406]
    %s945 = sshll.u32 1, 4
    %s946 = ssub.s32 %s945, 1
    %s947 = smul.addr 4, 77
    %s948 = scalar_lea.vmem %s1, %s947
    %949 = vst [vmem:[%s948] sm:%s946] %v944
    %s950 = scalar_lea.vmem [#allocation0], 624
    %v951 = vld [vmem:[%s950] sm:%s406]
    %s952 = sshll.u32 1, 4
    %s953 = ssub.s32 %s952, 1
    %s954 = smul.addr 4, 78
    %s955 = scalar_lea.vmem %s1, %s954
    %956 = vst [vmem:[%s955] sm:%s953] %v951
    %s957 = scalar_lea.vmem [#allocation0], 632
    %v958 = vld [vmem:[%s957] sm:%s406]
    %s959 = sshll.u32 1, 4
    %s960 = ssub.s32 %s959, 1
    %s961 = smul.addr 4, 79
    %s962 = scalar_lea.vmem %s1, %s961
    %963 = vst [vmem:[%s962] sm:%s960] %v958
    %s964 = scalar_lea.vmem [#allocation0], 640
    %v965 = vld [vmem:[%s964] sm:%s406]
    %s966 = sshll.u32 1, 4
    %s967 = ssub.s32 %s966, 1
    %s968 = smul.addr 4, 80
    %s969 = scalar_lea.vmem %s1, %s968
    %970 = vst [vmem:[%s969] sm:%s967] %v965
    %s971 = scalar_lea.vmem [#allocation0], 648
    %v972 = vld [vmem:[%s971] sm:%s406]
    %s973 = sshll.u32 1, 4
    %s974 = ssub.s32 %s973, 1
    %s975 = smul.addr 4, 81
    %s976 = scalar_lea.vmem %s1, %s975
    %977 = vst [vmem:[%s976] sm:%s974] %v972
    %s978 = scalar_lea.vmem [#allocation0], 656
    %v979 = vld [vmem:[%s978] sm:%s406]
    %s980 = sshll.u32 1, 4
    %s981 = ssub.s32 %s980, 1
    %s982 = smul.addr 4, 82
    %s983 = scalar_lea.vmem %s1, %s982
    %984 = vst [vmem:[%s983] sm:%s981] %v979
    %s985 = scalar_lea.vmem [#allocation0], 664
    %v986 = vld [vmem:[%s985] sm:%s406]
    %s987 = sshll.u32 1, 4
    %s988 = ssub.s32 %s987, 1
    %s989 = smul.addr 4, 83
    %s990 = scalar_lea.vmem %s1, %s989
    %991 = vst [vmem:[%s990] sm:%s988] %v986
    %s992 = scalar_lea.vmem [#allocation0], 672
    %v993 = vld [vmem:[%s992] sm:%s406]
    %s994 = sshll.u32 1, 4
    %s995 = ssub.s32 %s994, 1
    %s996 = smul.addr 4, 84
    %s997 = scalar_lea.vmem %s1, %s996
    %998 = vst [vmem:[%s997] sm:%s995] %v993
    %s999 = scalar_lea.vmem [#allocation0], 680
    %v1000 = vld [vmem:[%s999] sm:%s406]
    %s1001 = sshll.u32 1, 4
    %s1002 = ssub.s32 %s1001, 1
    %s1003 = smul.addr 4, 85
    %s1004 = scalar_lea.vmem %s1, %s1003
    %1005 = vst [vmem:[%s1004] sm:%s1002] %v1000
    %s1006 = scalar_lea.vmem [#allocation0], 688
    %v1007 = vld [vmem:[%s1006] sm:%s406]
    %s1008 = sshll.u32 1, 4
    %s1009 = ssub.s32 %s1008, 1
    %s1010 = smul.addr 4, 86
    %s1011 = scalar_lea.vmem %s1, %s1010
    %1012 = vst [vmem:[%s1011] sm:%s1009] %v1007
    %s1013 = scalar_lea.vmem [#allocation0], 696
    %v1014 = vld [vmem:[%s1013] sm:%s406]
    %s1015 = sshll.u32 1, 4
    %s1016 = ssub.s32 %s1015, 1
    %s1017 = smul.addr 4, 87
    %s1018 = scalar_lea.vmem %s1, %s1017
    %1019 = vst [vmem:[%s1018] sm:%s1016] %v1014
    %s1020 = scalar_lea.vmem [#allocation0], 704
    %v1021 = vld [vmem:[%s1020] sm:%s406]
    %s1022 = sshll.u32 1, 4
    %s1023 = ssub.s32 %s1022, 1
    %s1024 = smul.addr 4, 88
    %s1025 = scalar_lea.vmem %s1, %s1024
    %1026 = vst [vmem:[%s1025] sm:%s1023] %v1021
    %s1027 = scalar_lea.vmem [#allocation0], 712
    %v1028 = vld [vmem:[%s1027] sm:%s406]
    %s1029 = sshll.u32 1, 4
    %s1030 = ssub.s32 %s1029, 1
    %s1031 = smul.addr 4, 89
    %s1032 = scalar_lea.vmem %s1, %s1031
    %1033 = vst [vmem:[%s1032] sm:%s1030] %v1028
    %s1034 = scalar_lea.vmem [#allocation0], 720
    %v1035 = vld [vmem:[%s1034] sm:%s406]
    %s1036 = sshll.u32 1, 4
    %s1037 = ssub.s32 %s1036, 1
    %s1038 = smul.addr 4, 90
    %s1039 = scalar_lea.vmem %s1, %s1038
    %1040 = vst [vmem:[%s1039] sm:%s1037] %v1035
    %s1041 = scalar_lea.vmem [#allocation0], 728
    %v1042 = vld [vmem:[%s1041] sm:%s406]
    %s1043 = sshll.u32 1, 4
    %s1044 = ssub.s32 %s1043, 1
    %s1045 = smul.addr 4, 91
    %s1046 = scalar_lea.vmem %s1, %s1045
    %1047 = vst [vmem:[%s1046] sm:%s1044] %v1042
    %s1048 = scalar_lea.vmem [#allocation0], 736
    %v1049 = vld [vmem:[%s1048] sm:%s406]
    %s1050 = sshll.u32 1, 4
    %s1051 = ssub.s32 %s1050, 1
    %s1052 = smul.addr 4, 92
    %s1053 = scalar_lea.vmem %s1, %s1052
    %1054 = vst [vmem:[%s1053] sm:%s1051] %v1049
    %s1055 = scalar_lea.vmem [#allocation0], 744
    %v1056 = vld [vmem:[%s1055] sm:%s406]
    %s1057 = sshll.u32 1, 4
    %s1058 = ssub.s32 %s1057, 1
    %s1059 = smul.addr 4, 93
    %s1060 = scalar_lea.vmem %s1, %s1059
    %1061 = vst [vmem:[%s1060] sm:%s1058] %v1056
    %s1062 = scalar_lea.vmem [#allocation0], 752
    %v1063 = vld [vmem:[%s1062] sm:%s406]
    %s1064 = sshll.u32 1, 4
    %s1065 = ssub.s32 %s1064, 1
    %s1066 = smul.addr 4, 94
    %s1067 = scalar_lea.vmem %s1, %s1066
    %1068 = vst [vmem:[%s1067] sm:%s1065] %v1063
    %s1069 = scalar_lea.vmem [#allocation0], 760
    %v1070 = vld [vmem:[%s1069] sm:%s406]
    %s1071 = sshll.u32 1, 4
    %s1072 = ssub.s32 %s1071, 1
    %s1073 = smul.addr 4, 95
    %s1074 = scalar_lea.vmem %s1, %s1073
    %1075 = vst [vmem:[%s1074] sm:%s1072] %v1070

// kernel: lstm_mwe_model_pool.1
$region0: #{lstm_mwe_model_pool.1}
  #allocation0 [shape = 'u32[]', space=smem, size = 0x4, offset = 0x4, fixed_abs, tag = 'smem constant byte address 0x4 - core index']
  #allocation1 [shape = 'u32[144,128]{1,0:T(1,128)}', space=vmem, size = 0x12000, scoped, tag = 'internal scratch']
  %s0 = inlined_call_operand.vmem [shape: f32[16,32], index: 0, kind: input, shape index: {}]
  %s1 = inlined_call_operand.vmem [shape: s32[2,1], index: 1, kind: input, shape index: {}]
  %s2 = inlined_call_operand.vmem [shape: f32[32,384], index: 2, kind: input, shape index: {}]
  %s3 = inlined_call_operand.vmem [shape: f32[96,384], index: 3, kind: input, shape index: {}]
  %s4 = inlined_call_operand.vmem [shape: f32[1,192,384], index: 4, kind: input, shape index: {}]
  %s5 = inlined_call_operand.hbm [shape: f32[2,32], index: 5, kind: output, shape index: {}]
  %s6 = sld [smem:[#allocation0]]
  $region30: #{lstm_mwe_model_pool.1} parent=0
    _
  %s8 = ssub.s32 1, %s6
  %s9 = scalar_select 0, %s8, %s6
  $region1: #{lstm_mwe_model_pool.1} parent=0
    #allocation2 [shape = 'u8[1024]{0}', space=vmem, size = 0x400, scoped, tag = 'output window, operand 0, single buffered']
    #allocation3 [shape = 's32[1]{0}', space=sflag, size = 0x4, scoped, tag = 'scoped memory for lstm_mwe_model_pool.1']
    %10 = vsyncpa [#allocation3], 0
    // Predicated region
    $region2: #{lstm_mwe_model_pool.1} parent=1 // pred_check
      _
    $region3: #{lstm_mwe_model_pool.1} parent=1 // pred_check_branch
      %12 = sbr.rel (0) target = $region5
    $region4: #{lstm_mwe_model_pool.1} parent=1 // pred_region
      _
    $region5: #{lstm_mwe_model_pool.1} parent=1 // pred_fallthru
      _
    // Predicated region
    $region6: #{lstm_mwe_model_pool.1} parent=1 // pred_check
      _
    $region7: #{lstm_mwe_model_pool.1} parent=1 // pred_check_branch
      %14 = sbr.rel (0) target = $region9
    $region8: #{lstm_mwe_model_pool.1} parent=1 // pred_region
      _
    $region9: #{lstm_mwe_model_pool.1} parent=1 // pred_fallthru
      _
    // Predicated region
    $region10: #{lstm_mwe_model_pool.1} parent=1 // pred_check
      _
    $region11: #{lstm_mwe_model_pool.1} parent=1 // pred_check_branch
      %16 = sbr.rel (0) target = $region13
    $region12: #{lstm_mwe_model_pool.1} parent=1 // pred_region
      _
    $region13: #{lstm_mwe_model_pool.1} parent=1 // pred_fallthru
      _
    // Predicated region
    $region14: #{lstm_mwe_model_pool.1} parent=1 // pred_check
      _
    $region15: #{lstm_mwe_model_pool.1} parent=1 // pred_check_branch
      %18 = sbr.rel (0) target = $region17
    $region16: #{lstm_mwe_model_pool.1} parent=1 // pred_region
      _
    $region17: #{lstm_mwe_model_pool.1} parent=1 // pred_fallthru
      _
    // Predicated region
    $region18: #{lstm_mwe_model_pool.1} parent=1 // pred_check
      _
    $region19: #{lstm_mwe_model_pool.1} parent=1 // pred_check_branch
      %20 = sbr.rel (0) target = $region21
    $region20: #{lstm_mwe_model_pool.1} parent=1 // pred_region
      _
    $region21: #{lstm_mwe_model_pool.1} parent=1 // pred_fallthru
      _
    %v21 = vld [vmem:[%s0] sm:$0xff]
    %v22 = vld [vmem:[%s0 + $0x8] sm:$0xff]
    %v23 = vld [vmem:[%s2] sm:$0xff]
    %v24 = vld [vmem:[%s2 + $0x8] sm:$0xff]
    %v25 = vld [vmem:[%s2 + $0x10] sm:$0xff]
    %v26 = vld [vmem:[%s2 + $0x18] sm:$0xff]
    %v27 = vld [vmem:[%s2 + $0x20] sm:$0xff]
    %v28 = vld [vmem:[%s2 + $0x28] sm:$0xff]
    %v29 = vld [vmem:[%s2 + $0x30] sm:$0xff]
    %v30 = vld [vmem:[%s2 + $0x38] sm:$0xff]
    %v31 = vld [vmem:[%s2 + $0x40] sm:$0xff]
    %v32 = vld [vmem:[%s2 + $0x48] sm:$0xff]
    %v33 = vld [vmem:[%s2 + $0x50] sm:$0xff]
    %v34 = vld [vmem:[%s2 + $0x58] sm:$0xff]
    %vm35 = vcmask 261120
    %v37 = vsel %vm35, %v21, 0
    %v40 = vsel %vm35, %v22, 0
    %42 = vmatprep.subr.mxu0 0.0
    %43 = vmatpush1.msra.mxu0 0.0
    %44 = vmatprep.subr.mxu0 0.0
    %45 = vmatpush1.msra.mxu0 0.0
    %46 = vmatprep.subr.mxu0 0.0
    %47 = vmatpush1.msra.mxu0 0.0
    %48 = vmatprep.subr.mxu0 0.0
    %49 = vmatpush1.msra.mxu0 0.0
    %50 = vmatprep.subr.mxu0 0.0
    %51 = vmatpush1.msra.mxu0 0.0
    %52 = vmatprep.subr.mxu0 0.0
    %53 = vmatpush1.msra.mxu0 0.0
    %54 = vmatprep.subr.mxu0 0.0
    %55 = vmatpush1.msra.mxu0 0.0
    %56 = vmatprep.subr.mxu0 0.0
    %57 = vmatpush1.msra.mxu0 0.0
    %58 = vmatprep.subr.mxu0 0.0
    %59 = vmatpush1.msra.mxu0 0.0
    %60 = vmatprep.subr.mxu0 0.0
    %61 = vmatpush1.msra.mxu0 0.0
    %62 = vmatprep.subr.mxu0 0.0
    %63 = vmatpush1.msra.mxu0 0.0
    %64 = vmatprep.subr.mxu0 0.0
    %65 = vmatpush1.msra.mxu0 0.0
    %66 = vmatprep.subr.mxu0 %v33
    %67 = vmatpush1.msra.mxu0 %v32
    %68 = vmatprep.subr.mxu0 %v30
    %69 = vmatpush1.msra.mxu0 %v29
    %70 = vmatprep.subr.mxu0 %v27
    %71 = vmatpush1.msra.mxu0 %v26
    %72 = vmatprep.subr.mxu0 %v24
    %73 = vmatpush1.msra.mxu0 %v23
    %74 = vmatprep.subr.mxu0 0.0
    %75 = vmatpush2.msra.mxu0 0.0
    %76 = vmatprep.subr.mxu0 0.0
    %77 = vmatpush2.msra.mxu0 0.0
    %78 = vmatprep.subr.mxu0 0.0
    %79 = vmatpush2.msra.mxu0 0.0
    %80 = vmatprep.subr.mxu0 0.0
    %81 = vmatpush2.msra.mxu0 0.0
    %82 = vmatprep.subr.mxu0 0.0
    %83 = vmatpush2.msra.mxu0 0.0
    %84 = vmatprep.subr.mxu0 0.0
    %85 = vmatpush2.msra.mxu0 0.0
    %86 = vmatprep.subr.mxu0 0.0
    %87 = vmatpush2.msra.mxu0 0.0
    %88 = vmatprep.subr.mxu0 0.0
    %89 = vmatpush2.msra.mxu0 0.0
    %90 = vmatprep.subr.mxu0 0.0
    %91 = vmatpush2.msra.mxu0 0.0
    %92 = vmatprep.subr.mxu0 0.0
    %93 = vmatpush2.msra.mxu0 0.0
    %94 = vmatprep.subr.mxu0 0.0
    %95 = vmatpush2.msra.mxu0 0.0
    %96 = vmatprep.subr.mxu0 0.0
    %97 = vmatpush2.msra.mxu0 0.0
    %98 = vmatprep.subr.mxu0 0.0
    %99 = vmatpush2.msra.mxu0 0.0
    %100 = vmatprep.subr.mxu0 0.0
    %101 = vmatpush2.msra.mxu0 0.0
    %102 = vmatprep.subr.mxu0 0.0
    %103 = vmatpush2.msra.mxu0 0.0
    %104 = vmatprep.subr.mxu0 0.0
    %105 = vmatpush2.msra.mxu0 0.0
    %106 = vmatprep.mubr.f32.mxu0 0.0
    %107 = vmatmul.mubr.f32.gmra.mxu0 %v37
    %v108 = vpop.f32.mrf.mxu0
    %v109 = vadd.f32 0.0, %v108
    %v110 = vpop.f32.mrf.mxu0
    %v111 = vadd.f32 0.0, %v110
    %112 = vmatprep.mubr.f32.mxu0 0.0
    %113 = vmatmul.mubr.f32.gmra.mxu0 %v40
    %v114 = vpop.f32.mrf.mxu0
    %v115 = vadd.f32 0.0, %v114
    %v116 = vpop.f32.mrf.mxu0
    %v117 = vadd.f32 0.0, %v116
    %118 = vdwg.mxu0
    %119 = vmatprep.subr.mxu0 0.0
    %120 = vmatpush1.msra.mxu0 0.0
    %121 = vmatprep.subr.mxu0 0.0
    %122 = vmatpush1.msra.mxu0 0.0
    %123 = vmatprep.subr.mxu0 0.0
    %124 = vmatpush1.msra.mxu0 0.0
    %125 = vmatprep.subr.mxu0 0.0
    %126 = vmatpush1.msra.mxu0 0.0
    %127 = vmatprep.subr.mxu0 0.0
    %128 = vmatpush1.msra.mxu0 0.0
    %129 = vmatprep.subr.mxu0 0.0
    %130 = vmatpush1.msra.mxu0 0.0
    %131 = vmatprep.subr.mxu0 0.0
    %132 = vmatpush1.msra.mxu0 0.0
    %133 = vmatprep.subr.mxu0 0.0
    %134 = vmatpush1.msra.mxu0 0.0
    %135 = vmatprep.subr.mxu0 0.0
    %136 = vmatpush1.msra.mxu0 0.0
    %137 = vmatprep.subr.mxu0 0.0
    %138 = vmatpush1.msra.mxu0 0.0
    %139 = vmatprep.subr.mxu0 0.0
    %140 = vmatpush1.msra.mxu0 0.0
    %141 = vmatprep.subr.mxu0 0.0
    %142 = vmatpush1.msra.mxu0 0.0
    %143 = vmatprep.subr.mxu0 0.0
    %144 = vmatpush1.msra.mxu0 %v34
    %145 = vmatprep.subr.mxu0 0.0
    %146 = vmatpush1.msra.mxu0 %v31
    %147 = vmatprep.subr.mxu0 0.0
    %148 = vmatpush1.msra.mxu0 %v28
    %149 = vmatprep.subr.mxu0 0.0
    %150 = vmatpush1.msra.mxu0 %v25
    %151 = vmatprep.subr.mxu0 0.0
    %152 = vmatpush2.msra.mxu0 0.0
    %153 = vmatprep.subr.mxu0 0.0
    %154 = vmatpush2.msra.mxu0 0.0
    %155 = vmatprep.subr.mxu0 0.0
    %156 = vmatpush2.msra.mxu0 0.0
    %157 = vmatprep.subr.mxu0 0.0
    %158 = vmatpush2.msra.mxu0 0.0
    %159 = vmatprep.subr.mxu0 0.0
    %160 = vmatpush2.msra.mxu0 0.0
    %161 = vmatprep.subr.mxu0 0.0
    %162 = vmatpush2.msra.mxu0 0.0
    %163 = vmatprep.subr.mxu0 0.0
    %164 = vmatpush2.msra.mxu0 0.0
    %165 = vmatprep.subr.mxu0 0.0
    %166 = vmatpush2.msra.mxu0 0.0
    %167 = vmatprep.subr.mxu0 0.0
    %168 = vmatpush2.msra.mxu0 0.0
    %169 = vmatprep.subr.mxu0 0.0
    %170 = vmatpush2.msra.mxu0 0.0
    %171 = vmatprep.subr.mxu0 0.0
    %172 = vmatpush2.msra.mxu0 0.0
    %173 = vmatprep.subr.mxu0 0.0
    %174 = vmatpush2.msra.mxu0 0.0
    %175 = vmatprep.subr.mxu0 0.0
    %176 = vmatpush2.msra.mxu0 0.0
    %177 = vmatprep.subr.mxu0 0.0
    %178 = vmatpush2.msra.mxu0 0.0
    %179 = vmatprep.subr.mxu0 0.0
    %180 = vmatpush2.msra.mxu0 0.0
    %181 = vmatprep.subr.mxu0 0.0
    %182 = vmatpush2.msra.mxu0 0.0
    %183 = vmatprep.mubr.f32.mxu0 0.0
    %184 = vmatmul.mubr.f32.gmra.mxu0 %v37
    %v185 = vpop.f32.mrf.mxu0
    %v186 = vadd.f32 0.0, %v185
    %v187 = vpop.f32.mrf.mxu0
    %188 = vmatprep.mubr.f32.mxu0 0.0
    %189 = vmatmul.mubr.f32.gmra.mxu0 %v40
    %v190 = vpop.f32.mrf.mxu0
    %v191 = vadd.f32 0.0, %v190
    %v192 = vpop.f32.mrf.mxu0
    %193 = vdwg.mxu0
    %v194 = vld [vmem:[%s1] sm:$0x3]
    %vm195 = vcmp.gt.s32.totalorder %v194, 0
    %v196 = vsel %vm195, 1, 0
    %197 = vset.pattern.permute.xlu0 0
    %198 = vperm.xlu0 %197, %v196
    %v199 = vpop.permute.xlu0 %198
    %vm200 = vcmp.eq.s32.totalorder %v199, 1
    %v201 = vld [vmem:[%s3] sm:$0xff]
    %v202 = vld [vmem:[%s3 + $0x8] sm:$0xff]
    %v203 = vld [vmem:[%s3 + $0x10] sm:$0xff]
    %v204 = vld [vmem:[%s3 + $0x18] sm:$0xff]
    %v205 = vld [vmem:[%s3 + $0x20] sm:$0xff]
    %v206 = vld [vmem:[%s3 + $0x28] sm:$0xff]
    %v207 = vld [vmem:[%s3 + $0x30] sm:$0xff]
    %v208 = vld [vmem:[%s3 + $0x38] sm:$0xff]
    %v209 = vld [vmem:[%s3 + $0x40] sm:$0xff]
    %v210 = vld [vmem:[%s3 + $0x48] sm:$0xff]
    %v211 = vld [vmem:[%s3 + $0x50] sm:$0xff]
    %v212 = vld [vmem:[%s3 + $0x58] sm:$0xff]
    %v213 = vld [vmem:[%s3 + $0x60] sm:$0xff]
    %v214 = vld [vmem:[%s3 + $0x68] sm:$0xff]
    %v215 = vld [vmem:[%s3 + $0x70] sm:$0xff]
    %v216 = vld [vmem:[%s3 + $0x78] sm:$0xff]
    %v217 = vld [vmem:[%s3 + $0x80] sm:$0xff]
    %v218 = vld [vmem:[%s3 + $0x88] sm:$0xff]
    %v219 = vld [vmem:[%s3 + $0x90] sm:$0xff]
    %v220 = vld [vmem:[%s3 + $0x98] sm:$0xff]
    %v221 = vld [vmem:[%s3 + $0xa0] sm:$0xff]
    %v222 = vld [vmem:[%s3 + $0xa8] sm:$0xff]
    %v223 = vld [vmem:[%s3 + $0xb0] sm:$0xff]
    %v224 = vld [vmem:[%s3 + $0xb8] sm:$0xff]
    %v225 = vld [vmem:[%s3 + $0xc0] sm:$0xff]
    %v226 = vld [vmem:[%s3 + $0xc8] sm:$0xff]
    %v227 = vld [vmem:[%s3 + $0xd0] sm:$0xff]
    %v228 = vld [vmem:[%s3 + $0xd8] sm:$0xff]
    %v229 = vld [vmem:[%s3 + $0xe0] sm:$0xff]
    %v230 = vld [vmem:[%s3 + $0xe8] sm:$0xff]
    %v231 = vld [vmem:[%s3 + $0xf0] sm:$0xff]
    %v232 = vld [vmem:[%s3 + $0xf8] sm:$0xff]
    %v233 = vld [vmem:[%s3 + $0x100] sm:$0xff]
    %v234 = vld [vmem:[%s3 + $0x108] sm:$0xff]
    %v235 = vld [vmem:[%s3 + $0x110] sm:$0xff]
    %v236 = vld [vmem:[%s3 + $0x118] sm:$0xff]
    %vm237 = vcmask 785408
    %v239 = vsel %vm237, 0.0, 0
    %241 = vmatprep.subr.mxu0 0.0
    %242 = vmatpush1.msra.mxu0 0.0
    %243 = vmatprep.subr.mxu0 0.0
    %244 = vmatpush1.msra.mxu0 0.0
    %245 = vmatprep.subr.mxu0 0.0
    %246 = vmatpush1.msra.mxu0 0.0
    %247 = vmatprep.subr.mxu0 0.0
    %248 = vmatpush1.msra.mxu0 0.0
    %249 = vmatprep.subr.mxu0 %v235
    %250 = vmatpush1.msra.mxu0 %v234
    %251 = vmatprep.subr.mxu0 %v232
    %252 = vmatpush1.msra.mxu0 %v231
    %253 = vmatprep.subr.mxu0 %v229
    %254 = vmatpush1.msra.mxu0 %v228
    %255 = vmatprep.subr.mxu0 %v226
    %256 = vmatpush1.msra.mxu0 %v225
    %257 = vmatprep.subr.mxu0 %v223
    %258 = vmatpush1.msra.mxu0 %v222
    %259 = vmatprep.subr.mxu0 %v220
    %260 = vmatpush1.msra.mxu0 %v219
    %261 = vmatprep.subr.mxu0 %v217
    %262 = vmatpush1.msra.mxu0 %v216
    %263 = vmatprep.subr.mxu0 %v214
    %264 = vmatpush1.msra.mxu0 %v213
    %265 = vmatprep.subr.mxu0 %v211
    %266 = vmatpush1.msra.mxu0 %v210
    %267 = vmatprep.subr.mxu0 %v208
    %268 = vmatpush1.msra.mxu0 %v207
    %269 = vmatprep.subr.mxu0 %v205
    %270 = vmatpush1.msra.mxu0 %v204
    %271 = vmatprep.subr.mxu0 %v202
    %272 = vmatpush1.msra.mxu0 %v201
    %273 = vmatprep.subr.mxu0 0.0
    %274 = vmatpush2.msra.mxu0 0.0
    %275 = vmatprep.subr.mxu0 0.0
    %276 = vmatpush2.msra.mxu0 0.0
    %277 = vmatprep.subr.mxu0 0.0
    %278 = vmatpush2.msra.mxu0 0.0
    %279 = vmatprep.subr.mxu0 0.0
    %280 = vmatpush2.msra.mxu0 0.0
    %281 = vmatprep.subr.mxu0 0.0
    %282 = vmatpush2.msra.mxu0 0.0
    %283 = vmatprep.subr.mxu0 0.0
    %284 = vmatpush2.msra.mxu0 0.0
    %285 = vmatprep.subr.mxu0 0.0
    %286 = vmatpush2.msra.mxu0 0.0
    %287 = vmatprep.subr.mxu0 0.0
    %288 = vmatpush2.msra.mxu0 0.0
    %289 = vmatprep.subr.mxu0 0.0
    %290 = vmatpush2.msra.mxu0 0.0
    %291 = vmatprep.subr.mxu0 0.0
    %292 = vmatpush2.msra.mxu0 0.0
    %293 = vmatprep.subr.mxu0 0.0
    %294 = vmatpush2.msra.mxu0 0.0
    %295 = vmatprep.subr.mxu0 0.0
    %296 = vmatpush2.msra.mxu0 0.0
    %297 = vmatprep.subr.mxu0 0.0
    %298 = vmatpush2.msra.mxu0 0.0
    %299 = vmatprep.subr.mxu0 0.0
    %300 = vmatpush2.msra.mxu0 0.0
    %301 = vmatprep.subr.mxu0 0.0
    %302 = vmatpush2.msra.mxu0 0.0
    %303 = vmatprep.subr.mxu0 0.0
    %304 = vmatpush2.msra.mxu0 0.0
    %305 = vmatprep.mubr.f32.mxu0 0.0
    %306 = vmatmul.mubr.f32.gmra.mxu0 %v239
    %v307 = vpop.f32.mrf.mxu0
    %v308 = vadd.f32 0.0, %v307
    %v309 = vpop.f32.mrf.mxu0
    %v310 = vadd.f32 0.0, %v309
    %311 = vdwg.mxu0
    %312 = vmatprep.subr.mxu0 0.0
    %313 = vmatpush1.msra.mxu0 0.0
    %314 = vmatprep.subr.mxu0 0.0
    %315 = vmatpush1.msra.mxu0 0.0
    %316 = vmatprep.subr.mxu0 0.0
    %317 = vmatpush1.msra.mxu0 0.0
    %318 = vmatprep.subr.mxu0 0.0
    %319 = vmatpush1.msra.mxu0 0.0
    %320 = vmatprep.subr.mxu0 0.0
    %321 = vmatpush1.msra.mxu0 %v236
    %322 = vmatprep.subr.mxu0 0.0
    %323 = vmatpush1.msra.mxu0 %v233
    %324 = vmatprep.subr.mxu0 0.0
    %325 = vmatpush1.msra.mxu0 %v230
    %326 = vmatprep.subr.mxu0 0.0
    %327 = vmatpush1.msra.mxu0 %v227
    %328 = vmatprep.subr.mxu0 0.0
    %329 = vmatpush1.msra.mxu0 %v224
    %330 = vmatprep.subr.mxu0 0.0
    %331 = vmatpush1.msra.mxu0 %v221
    %332 = vmatprep.subr.mxu0 0.0
    %333 = vmatpush1.msra.mxu0 %v218
    %334 = vmatprep.subr.mxu0 0.0
    %335 = vmatpush1.msra.mxu0 %v215
    %336 = vmatprep.subr.mxu0 0.0
    %337 = vmatpush1.msra.mxu0 %v212
    %338 = vmatprep.subr.mxu0 0.0
    %339 = vmatpush1.msra.mxu0 %v209
    %340 = vmatprep.subr.mxu0 0.0
    %341 = vmatpush1.msra.mxu0 %v206
    %342 = vmatprep.subr.mxu0 0.0
    %343 = vmatpush1.msra.mxu0 %v203
    %344 = vmatprep.subr.mxu0 0.0
    %345 = vmatpush2.msra.mxu0 0.0
    %346 = vmatprep.subr.mxu0 0.0
    %347 = vmatpush2.msra.mxu0 0.0
    %348 = vmatprep.subr.mxu0 0.0
    %349 = vmatpush2.msra.mxu0 0.0
    %350 = vmatprep.subr.mxu0 0.0
    %351 = vmatpush2.msra.mxu0 0.0
    %352 = vmatprep.subr.mxu0 0.0
    %353 = vmatpush2.msra.mxu0 0.0
    %354 = vmatprep.subr.mxu0 0.0
    %355 = vmatpush2.msra.mxu0 0.0
    %356 = vmatprep.subr.mxu0 0.0
    %357 = vmatpush2.msra.mxu0 0.0
    %358 = vmatprep.subr.mxu0 0.0
    %359 = vmatpush2.msra.mxu0 0.0
    %360 = vmatprep.subr.mxu0 0.0
    %361 = vmatpush2.msra.mxu0 0.0
    %362 = vmatprep.subr.mxu0 0.0
    %363 = vmatpush2.msra.mxu0 0.0
    %364 = vmatprep.subr.mxu0 0.0
    %365 = vmatpush2.msra.mxu0 0.0
    %366 = vmatprep.subr.mxu0 0.0
    %367 = vmatpush2.msra.mxu0 0.0
    %368 = vmatprep.subr.mxu0 0.0
    %369 = vmatpush2.msra.mxu0 0.0
    %370 = vmatprep.subr.mxu0 0.0
    %371 = vmatpush2.msra.mxu0 0.0
    %372 = vmatprep.subr.mxu0 0.0
    %373 = vmatpush2.msra.mxu0 0.0
    %374 = vmatprep.subr.mxu0 0.0
    %375 = vmatpush2.msra.mxu0 0.0
    %376 = vmatprep.mubr.f32.mxu0 0.0
    %377 = vmatmul.mubr.f32.gmra.mxu0 %v239
    %v378 = vpop.f32.mrf.mxu0
    %v379 = vadd.f32 0.0, %v378
    %v380 = vpop.f32.mrf.mxu0
    %381 = vdwg.mxu0
    %v382 = vadd.f32 %v109, %v308
    %v383 = vadd.f32 %v111, %v310
    %v384 = vadd.f32 %v186, %v379
    %v385 = vxor.u32 %v382, 2147483648
    %v386 = vmul.f32 %v385, 1.442695
    %v387 = vpow.pop %v386
    %v388 = vadd.f32 %v387, 1.0
    %v389 = vrcp.pop %v388
    %v390 = vmul.f32 1.0, %v389
    %v391 = vxor.u32 %v383, 2147483648
    %v392 = vmul.f32 %v391, 1.442695
    %v393 = vpow.pop %v392
    %v394 = vadd.f32 %v393, 1.0
    %v395 = vrcp.pop %v394
    %v396 = vmul.f32 1.0, %v395
    %v397 = vtanh.pop %v383
    %v398 = vtanh.pop %v384
    %v399 = vxor.u32 %v384, 2147483648
    %v400 = vmul.f32 %v399, 1.442695
    %v401 = vpow.pop %v400
    %v402 = vadd.f32 %v401, 1.0
    %v403 = vrcp.pop %v402
    %v404 = vmul.f32 1.0, %v403
    %v405 = vmul.f32 %v390, 0.0
    %v406 = vmul.f32 %v396, 0.0
    %409 = vrot.lane.b32.xlu0 %v397, 64
    %v410 = vpop.permute.xlu0 %409
    %411 = vrot.lane.b32.xlu0 %v398, 64
    %v412 = vpop.permute.xlu0 %411
    %vm413 = vcmask 523264
    %v414 = vsel %vm413, %v410, %v412
    %v416 = vmul.f32 %v390, %v414
    %418 = vrot.lane.b32.xlu0 %v416, 96
    %v419 = vpop.permute.xlu0 %418
    %v421 = vadd.f32 %v405, %v419
    %v422 = vadd.f32 %v406, %v419
    %v423 = vtanh.pop %v421
    %v424 = vtanh.pop %v422
    %427 = vrot.lane.b32.xlu0 %v423, 64
    %v428 = vpop.permute.xlu0 %427
    %429 = vrot.lane.b32.xlu0 %v424, 64
    %v430 = vpop.permute.xlu0 %429
    %v431 = vsel %vm413, %v428, %v430
    %v433 = vmul.f32 %v404, %v431
    %v434 = vsel %vm200, %v433, 0.0
    %v435 = vsel %vm200, %v421, 0.0
    %v436 = vsel %vm200, %v422, 0.0
    %438 = vrot.lane.b32.xlu0 %v434, 96
    %v439 = vpop.permute.xlu0 %438
    %v441 = vsel %vm237, %v439, 0.0
    %v442 = vld [vmem:[%s4] sm:$0xff]
    %v443 = vld [vmem:[%s4 + $0x8] sm:$0xff]
    %v444 = vld [vmem:[%s4 + $0x10] sm:$0xff]
    %v445 = vld [vmem:[%s4 + $0x18] sm:$0xff]
    %v446 = vld [vmem:[%s4 + $0x20] sm:$0xff]
    %v447 = vld [vmem:[%s4 + $0x28] sm:$0xff]
    %v448 = vld [vmem:[%s4 + $0x30] sm:$0xff]
    %v449 = vld [vmem:[%s4 + $0x38] sm:$0xff]
    %v450 = vld [vmem:[%s4 + $0x40] sm:$0xff]
    %v451 = vld [vmem:[%s4 + $0x48] sm:$0xff]
    %v452 = vld [vmem:[%s4 + $0x50] sm:$0xff]
    %v453 = vld [vmem:[%s4 + $0x58] sm:$0xff]
    %v454 = vld [vmem:[%s4 + $0x60] sm:$0xff]
    %v455 = vld [vmem:[%s4 + $0x68] sm:$0xff]
    %v456 = vld [vmem:[%s4 + $0x70] sm:$0xff]
    %v457 = vld [vmem:[%s4 + $0x78] sm:$0xff]
    %v458 = vld [vmem:[%s4 + $0x80] sm:$0xff]
    %v459 = vld [vmem:[%s4 + $0x88] sm:$0xff]
    %v460 = vld [vmem:[%s4 + $0x90] sm:$0xff]
    %v461 = vld [vmem:[%s4 + $0x98] sm:$0xff]
    %v462 = vld [vmem:[%s4 + $0xa0] sm:$0xff]
    %v463 = vld [vmem:[%s4 + $0xa8] sm:$0xff]
    %v464 = vld [vmem:[%s4 + $0xb0] sm:$0xff]
    %v465 = vld [vmem:[%s4 + $0xb8] sm:$0xff]
    %v466 = vld [vmem:[%s4 + $0xc0] sm:$0xff]
    %v467 = vld [vmem:[%s4 + $0xc8] sm:$0xff]
    %v468 = vld [vmem:[%s4 + $0xd0] sm:$0xff]
    %v469 = vld [vmem:[%s4 + $0xd8] sm:$0xff]
    %v470 = vld [vmem:[%s4 + $0xe0] sm:$0xff]
    %v471 = vld [vmem:[%s4 + $0xe8] sm:$0xff]
    %v472 = vld [vmem:[%s4 + $0xf0] sm:$0xff]
    %v473 = vld [vmem:[%s4 + $0xf8] sm:$0xff]
    %v474 = vld [vmem:[%s4 + $0x100] sm:$0xff]
    %v475 = vld [vmem:[%s4 + $0x108] sm:$0xff]
    %v476 = vld [vmem:[%s4 + $0x110] sm:$0xff]
    %v477 = vld [vmem:[%s4 + $0x118] sm:$0xff]
    %v478 = vld [vmem:[%s4 + $0x120] sm:$0xff]
    %v479 = vld [vmem:[%s4 + $0x128] sm:$0xff]
    %v480 = vld [vmem:[%s4 + $0x130] sm:$0xff]
    %v481 = vld [vmem:[%s4 + $0x138] sm:$0xff]
    %v482 = vld [vmem:[%s4 + $0x140] sm:$0xff]
    %v483 = vld [vmem:[%s4 + $0x148] sm:$0xff]
    %v484 = vld [vmem:[%s4 + $0x150] sm:$0xff]
    %v485 = vld [vmem:[%s4 + $0x158] sm:$0xff]
    %v486 = vld [vmem:[%s4 + $0x160] sm:$0xff]
    %v487 = vld [vmem:[%s4 + $0x168] sm:$0xff]
    %v488 = vld [vmem:[%s4 + $0x170] sm:$0xff]
    %v489 = vld [vmem:[%s4 + $0x178] sm:$0xff]
    %v490 = vld [vmem:[%s4 + $0x180] sm:$0xff]
    %v491 = vld [vmem:[%s4 + $0x188] sm:$0xff]
    %v492 = vld [vmem:[%s4 + $0x190] sm:$0xff]
    %v493 = vld [vmem:[%s4 + $0x198] sm:$0xff]
    %v494 = vld [vmem:[%s4 + $0x1a0] sm:$0xff]
    %v495 = vld [vmem:[%s4 + $0x1a8] sm:$0xff]
    %v496 = vld [vmem:[%s4 + $0x1b0] sm:$0xff]
    %v497 = vld [vmem:[%s4 + $0x1b8] sm:$0xff]
    %v498 = vld [vmem:[%s4 + $0x1c0] sm:$0xff]
    %v499 = vld [vmem:[%s4 + $0x1c8] sm:$0xff]
    %v500 = vld [vmem:[%s4 + $0x1d0] sm:$0xff]
    %v501 = vld [vmem:[%s4 + $0x1d8] sm:$0xff]
    %v502 = vld [vmem:[%s4 + $0x1e0] sm:$0xff]
    %v503 = vld [vmem:[%s4 + $0x1e8] sm:$0xff]
    %v504 = vld [vmem:[%s4 + $0x1f0] sm:$0xff]
    %v505 = vld [vmem:[%s4 + $0x1f8] sm:$0xff]
    %v506 = vld [vmem:[%s4 + $0x200] sm:$0xff]
    %v507 = vld [vmem:[%s4 + $0x208] sm:$0xff]
    %v508 = vld [vmem:[%s4 + $0x210] sm:$0xff]
    %v509 = vld [vmem:[%s4 + $0x218] sm:$0xff]
    %v510 = vld [vmem:[%s4 + $0x220] sm:$0xff]
    %v511 = vld [vmem:[%s4 + $0x228] sm:$0xff]
    %v512 = vld [vmem:[%s4 + $0x230] sm:$0xff]
    %v513 = vld [vmem:[%s4 + $0x238] sm:$0xff]
    %v514 = vsel %vm413, 0.0, 0
    %516 = vmatprep.subr.mxu0 %v488
    %517 = vmatpush1.msra.mxu0 %v487
    %518 = vmatprep.subr.mxu0 %v485
    %519 = vmatpush1.msra.mxu0 %v484
    %520 = vmatprep.subr.mxu0 %v482
    %521 = vmatpush1.msra.mxu0 %v481
    %522 = vmatprep.subr.mxu0 %v479
    %523 = vmatpush1.msra.mxu0 %v478
    %524 = vmatprep.subr.mxu0 %v476
    %525 = vmatpush1.msra.mxu0 %v475
    %526 = vmatprep.subr.mxu0 %v473
    %527 = vmatpush1.msra.mxu0 %v472
    %528 = vmatprep.subr.mxu0 %v470
    %529 = vmatpush1.msra.mxu0 %v469
    %530 = vmatprep.subr.mxu0 %v467
    %531 = vmatpush1.msra.mxu0 %v466
    %532 = vmatprep.subr.mxu0 %v464
    %533 = vmatpush1.msra.mxu0 %v463
    %534 = vmatprep.subr.mxu0 %v461
    %535 = vmatpush1.msra.mxu0 %v460
    %536 = vmatprep.subr.mxu0 %v458
    %537 = vmatpush1.msra.mxu0 %v457
    %538 = vmatprep.subr.mxu0 %v455
    %539 = vmatpush1.msra.mxu0 %v454
    %540 = vmatprep.subr.mxu0 %v452
    %541 = vmatpush1.msra.mxu0 %v451
    %542 = vmatprep.subr.mxu0 %v449
    %543 = vmatpush1.msra.mxu0 %v448
    %544 = vmatprep.subr.mxu0 %v446
    %545 = vmatpush1.msra.mxu0 %v445
    %546 = vmatprep.subr.mxu0 %v443
    %547 = vmatpush1.msra.mxu0 %v442
    %548 = vmatprep.subr.mxu0 0.0
    %549 = vmatpush2.msra.mxu0 0.0
    %550 = vmatprep.subr.mxu0 0.0
    %551 = vmatpush2.msra.mxu0 0.0
    %552 = vmatprep.subr.mxu0 0.0
    %553 = vmatpush2.msra.mxu0 0.0
    %554 = vmatprep.subr.mxu0 0.0
    %555 = vmatpush2.msra.mxu0 0.0
    %556 = vmatprep.subr.mxu0 0.0
    %557 = vmatpush2.msra.mxu0 0.0
    %558 = vmatprep.subr.mxu0 0.0
    %559 = vmatpush2.msra.mxu0 0.0
    %560 = vmatprep.subr.mxu0 0.0
    %561 = vmatpush2.msra.mxu0 0.0
    %562 = vmatprep.subr.mxu0 0.0
    %563 = vmatpush2.msra.mxu0 0.0
    %564 = vmatprep.subr.mxu0 %v512
    %565 = vmatpush2.msra.mxu0 %v511
    %566 = vmatprep.subr.mxu0 %v509
    %567 = vmatpush2.msra.mxu0 %v508
    %568 = vmatprep.subr.mxu0 %v506
    %569 = vmatpush2.msra.mxu0 %v505
    %570 = vmatprep.subr.mxu0 %v503
    %571 = vmatpush2.msra.mxu0 %v502
    %572 = vmatprep.subr.mxu0 %v500
    %573 = vmatpush2.msra.mxu0 %v499
    %574 = vmatprep.subr.mxu0 %v497
    %575 = vmatpush2.msra.mxu0 %v496
    %576 = vmatprep.subr.mxu0 %v494
    %577 = vmatpush2.msra.mxu0 %v493
    %578 = vmatprep.subr.mxu0 %v491
    %579 = vmatpush2.msra.mxu0 %v490
    %580 = vmatprep.mubr.f32.mxu0 %v514
    %581 = vmatmul.mubr.f32.gmra.mxu0 %v441
    %v582 = vpop.f32.mrf.mxu0
    %v583 = vadd.f32 0.0, %v582
    %v584 = vpop.f32.mrf.mxu0
    %v585 = vadd.f32 0.0, %v584
    %586 = vdwg.mxu0
    %587 = vmatprep.subr.mxu0 0.0
    %588 = vmatpush1.msra.mxu0 %v489
    %589 = vmatprep.subr.mxu0 0.0
    %590 = vmatpush1.msra.mxu0 %v486
    %591 = vmatprep.subr.mxu0 0.0
    %592 = vmatpush1.msra.mxu0 %v483
    %593 = vmatprep.subr.mxu0 0.0
    %594 = vmatpush1.msra.mxu0 %v480
    %595 = vmatprep.subr.mxu0 0.0
    %596 = vmatpush1.msra.mxu0 %v477
    %597 = vmatprep.subr.mxu0 0.0
    %598 = vmatpush1.msra.mxu0 %v474
    %599 = vmatprep.subr.mxu0 0.0
    %600 = vmatpush1.msra.mxu0 %v471
    %601 = vmatprep.subr.mxu0 0.0
    %602 = vmatpush1.msra.mxu0 %v468
    %603 = vmatprep.subr.mxu0 0.0
    %604 = vmatpush1.msra.mxu0 %v465
    %605 = vmatprep.subr.mxu0 0.0
    %606 = vmatpush1.msra.mxu0 %v462
    %607 = vmatprep.subr.mxu0 0.0
    %608 = vmatpush1.msra.mxu0 %v459
    %609 = vmatprep.subr.mxu0 0.0
    %610 = vmatpush1.msra.mxu0 %v456
    %611 = vmatprep.subr.mxu0 0.0
    %612 = vmatpush1.msra.mxu0 %v453
    %613 = vmatprep.subr.mxu0 0.0
    %614 = vmatpush1.msra.mxu0 %v450
    %615 = vmatprep.subr.mxu0 0.0
    %616 = vmatpush1.msra.mxu0 %v447
    %617 = vmatprep.subr.mxu0 0.0
    %618 = vmatpush1.msra.mxu0 %v444
    %619 = vmatprep.subr.mxu0 0.0
    %620 = vmatpush2.msra.mxu0 0.0
    %621 = vmatprep.subr.mxu0 0.0
    %622 = vmatpush2.msra.mxu0 0.0
    %623 = vmatprep.subr.mxu0 0.0
    %624 = vmatpush2.msra.mxu0 0.0
    %625 = vmatprep.subr.mxu0 0.0
    %626 = vmatpush2.msra.mxu0 0.0
    %627 = vmatprep.subr.mxu0 0.0
    %628 = vmatpush2.msra.mxu0 0.0
    %629 = vmatprep.subr.mxu0 0.0
    %630 = vmatpush2.msra.mxu0 0.0
    %631 = vmatprep.subr.mxu0 0.0
    %632 = vmatpush2.msra.mxu0 0.0
    %633 = vmatprep.subr.mxu0 0.0
    %634 = vmatpush2.msra.mxu0 0.0
    %635 = vmatprep.subr.mxu0 0.0
    %636 = vmatpush2.msra.mxu0 %v513
    %637 = vmatprep.subr.mxu0 0.0
    %638 = vmatpush2.msra.mxu0 %v510
    %639 = vmatprep.subr.mxu0 0.0
    %640 = vmatpush2.msra.mxu0 %v507
    %641 = vmatprep.subr.mxu0 0.0
    %642 = vmatpush2.msra.mxu0 %v504
    %643 = vmatprep.subr.mxu0 0.0
    %644 = vmatpush2.msra.mxu0 %v501
    %645 = vmatprep.subr.mxu0 0.0
    %646 = vmatpush2.msra.mxu0 %v498
    %647 = vmatprep.subr.mxu0 0.0
    %648 = vmatpush2.msra.mxu0 %v495
    %649 = vmatprep.subr.mxu0 0.0
    %650 = vmatpush2.msra.mxu0 %v492
    %651 = vmatprep.mubr.f32.mxu0 %v514
    %652 = vmatmul.mubr.f32.gmra.mxu0 %v441
    %v653 = vpop.f32.mrf.mxu0
    %v654 = vadd.f32 0.0, %v653
    %v655 = vpop.f32.mrf.mxu0
    %656 = vdwg.mxu0
    %v657 = vxor.u32 %v583, 2147483648
    %v658 = vmul.f32 %v657, 1.442695
    %v659 = vpow.pop %v658
    %v660 = vadd.f32 %v659, 1.0
    %v661 = vrcp.pop %v660
    %v662 = vmul.f32 1.0, %v661
    %v663 = vxor.u32 %v585, 2147483648
    %v664 = vmul.f32 %v663, 1.442695
    %v665 = vpow.pop %v664
    %v666 = vadd.f32 %v665, 1.0
    %v667 = vrcp.pop %v666
    %v668 = vmul.f32 1.0, %v667
    %v669 = vtanh.pop %v585
    %v670 = vtanh.pop %v654
    %v671 = vxor.u32 %v654, 2147483648
    %v672 = vmul.f32 %v671, 1.442695
    %v673 = vpow.pop %v672
    %v674 = vadd.f32 %v673, 1.0
    %v675 = vrcp.pop %v674
    %v676 = vmul.f32 1.0, %v675
    %v677 = vmul.f32 %v662, 0.0
    %v678 = vmul.f32 %v668, 0.0
    %681 = vrot.lane.b32.xlu0 %v669, 64
    %v682 = vpop.permute.xlu0 %681
    %683 = vrot.lane.b32.xlu0 %v670, 64
    %v684 = vpop.permute.xlu0 %683
    %v685 = vsel %vm413, %v682, %v684
    %v687 = vmul.f32 %v662, %v685
    %689 = vrot.lane.b32.xlu0 %v687, 96
    %v690 = vpop.permute.xlu0 %689
    %v692 = vadd.f32 %v677, %v690
    %v693 = vadd.f32 %v678, %v690
    %v694 = vtanh.pop %v692
    %v695 = vtanh.pop %v693
    %698 = vrot.lane.b32.xlu0 %v694, 64
    %v699 = vpop.permute.xlu0 %698
    %700 = vrot.lane.b32.xlu0 %v695, 64
    %v701 = vpop.permute.xlu0 %700
    %v702 = vsel %vm413, %v699, %v701
    %v704 = vmul.f32 %v676, %v702
    %v705 = vsel %vm200, %v704, 0.0
    %v706 = vsel %vm200, %v692, 0.0
    %v707 = vsel %vm200, %v693, 0.0
    %vm708 = vcmp.gt.s32.totalorder %v194, 1
    %v709 = vsel %vm708, 1, 0
    %710 = vset.pattern.permute.xlu0 0
    %711 = vperm.xlu0 %710, %v709
    %v712 = vpop.permute.xlu0 %711
    %vm713 = vcmp.eq.s32.totalorder %v712, 1
    %v714 = vsel %vm237, %v439, 0
    %716 = vmatprep.subr.mxu0 0.0
    %717 = vmatpush1.msra.mxu0 0.0
    %718 = vmatprep.subr.mxu0 0.0
    %719 = vmatpush1.msra.mxu0 0.0
    %720 = vmatprep.subr.mxu0 0.0
    %721 = vmatpush1.msra.mxu0 0.0
    %722 = vmatprep.subr.mxu0 0.0
    %723 = vmatpush1.msra.mxu0 0.0
    %724 = vmatprep.subr.mxu0 %v235
    %725 = vmatpush1.msra.mxu0 %v234
    %726 = vmatprep.subr.mxu0 %v232
    %727 = vmatpush1.msra.mxu0 %v231
    %728 = vmatprep.subr.mxu0 %v229
    %729 = vmatpush1.msra.mxu0 %v228
    %730 = vmatprep.subr.mxu0 %v226
    %731 = vmatpush1.msra.mxu0 %v225
    %732 = vmatprep.subr.mxu0 %v223
    %733 = vmatpush1.msra.mxu0 %v222
    %734 = vmatprep.subr.mxu0 %v220
    %735 = vmatpush1.msra.mxu0 %v219
    %736 = vmatprep.subr.mxu0 %v217
    %737 = vmatpush1.msra.mxu0 %v216
    %738 = vmatprep.subr.mxu0 %v214
    %739 = vmatpush1.msra.mxu0 %v213
    %740 = vmatprep.subr.mxu0 %v211
    %741 = vmatpush1.msra.mxu0 %v210
    %742 = vmatprep.subr.mxu0 %v208
    %743 = vmatpush1.msra.mxu0 %v207
    %744 = vmatprep.subr.mxu0 %v205
    %745 = vmatpush1.msra.mxu0 %v204
    %746 = vmatprep.subr.mxu0 %v202
    %747 = vmatpush1.msra.mxu0 %v201
    %748 = vmatprep.subr.mxu0 0.0
    %749 = vmatpush2.msra.mxu0 0.0
    %750 = vmatprep.subr.mxu0 0.0
    %751 = vmatpush2.msra.mxu0 0.0
    %752 = vmatprep.subr.mxu0 0.0
    %753 = vmatpush2.msra.mxu0 0.0
    %754 = vmatprep.subr.mxu0 0.0
    %755 = vmatpush2.msra.mxu0 0.0
    %756 = vmatprep.subr.mxu0 0.0
    %757 = vmatpush2.msra.mxu0 0.0
    %758 = vmatprep.subr.mxu0 0.0
    %759 = vmatpush2.msra.mxu0 0.0
    %760 = vmatprep.subr.mxu0 0.0
    %761 = vmatpush2.msra.mxu0 0.0
    %762 = vmatprep.subr.mxu0 0.0
    %763 = vmatpush2.msra.mxu0 0.0
    %764 = vmatprep.subr.mxu0 0.0
    %765 = vmatpush2.msra.mxu0 0.0
    %766 = vmatprep.subr.mxu0 0.0
    %767 = vmatpush2.msra.mxu0 0.0
    %768 = vmatprep.subr.mxu0 0.0
    %769 = vmatpush2.msra.mxu0 0.0
    %770 = vmatprep.subr.mxu0 0.0
    %771 = vmatpush2.msra.mxu0 0.0
    %772 = vmatprep.subr.mxu0 0.0
    %773 = vmatpush2.msra.mxu0 0.0
    %774 = vmatprep.subr.mxu0 0.0
    %775 = vmatpush2.msra.mxu0 0.0
    %776 = vmatprep.subr.mxu0 0.0
    %777 = vmatpush2.msra.mxu0 0.0
    %778 = vmatprep.subr.mxu0 0.0
    %779 = vmatpush2.msra.mxu0 0.0
    %780 = vmatprep.mubr.f32.mxu0 0.0
    %781 = vmatmul.mubr.f32.gmra.mxu0 %v714
    %v782 = vpop.f32.mrf.mxu0
    %v783 = vadd.f32 0.0, %v782
    %v784 = vpop.f32.mrf.mxu0
    %v785 = vadd.f32 0.0, %v784
    %786 = vdwg.mxu0
    %787 = vmatprep.subr.mxu0 0.0
    %788 = vmatpush1.msra.mxu0 0.0
    %789 = vmatprep.subr.mxu0 0.0
    %790 = vmatpush1.msra.mxu0 0.0
    %791 = vmatprep.subr.mxu0 0.0
    %792 = vmatpush1.msra.mxu0 0.0
    %793 = vmatprep.subr.mxu0 0.0
    %794 = vmatpush1.msra.mxu0 0.0
    %795 = vmatprep.subr.mxu0 0.0
    %796 = vmatpush1.msra.mxu0 %v236
    %797 = vmatprep.subr.mxu0 0.0
    %798 = vmatpush1.msra.mxu0 %v233
    %799 = vmatprep.subr.mxu0 0.0
    %800 = vmatpush1.msra.mxu0 %v230
    %801 = vmatprep.subr.mxu0 0.0
    %802 = vmatpush1.msra.mxu0 %v227
    %803 = vmatprep.subr.mxu0 0.0
    %804 = vmatpush1.msra.mxu0 %v224
    %805 = vmatprep.subr.mxu0 0.0
    %806 = vmatpush1.msra.mxu0 %v221
    %807 = vmatprep.subr.mxu0 0.0
    %808 = vmatpush1.msra.mxu0 %v218
    %809 = vmatprep.subr.mxu0 0.0
    %810 = vmatpush1.msra.mxu0 %v215
    %811 = vmatprep.subr.mxu0 0.0
    %812 = vmatpush1.msra.mxu0 %v212
    %813 = vmatprep.subr.mxu0 0.0
    %814 = vmatpush1.msra.mxu0 %v209
    %815 = vmatprep.subr.mxu0 0.0
    %816 = vmatpush1.msra.mxu0 %v206
    %817 = vmatprep.subr.mxu0 0.0
    %818 = vmatpush1.msra.mxu0 %v203
    %819 = vmatprep.subr.mxu0 0.0
    %820 = vmatpush2.msra.mxu0 0.0
    %821 = vmatprep.subr.mxu0 0.0
    %822 = vmatpush2.msra.mxu0 0.0
    %823 = vmatprep.subr.mxu0 0.0
    %824 = vmatpush2.msra.mxu0 0.0
    %825 = vmatprep.subr.mxu0 0.0
    %826 = vmatpush2.msra.mxu0 0.0
    %827 = vmatprep.subr.mxu0 0.0
    %828 = vmatpush2.msra.mxu0 0.0
    %829 = vmatprep.subr.mxu0 0.0
    %830 = vmatpush2.msra.mxu0 0.0
    %831 = vmatprep.subr.mxu0 0.0
    %832 = vmatpush2.msra.mxu0 0.0
    %833 = vmatprep.subr.mxu0 0.0
    %834 = vmatpush2.msra.mxu0 0.0
    %835 = vmatprep.subr.mxu0 0.0
    %836 = vmatpush2.msra.mxu0 0.0
    %837 = vmatprep.subr.mxu0 0.0
    %838 = vmatpush2.msra.mxu0 0.0
    %839 = vmatprep.subr.mxu0 0.0
    %840 = vmatpush2.msra.mxu0 0.0
    %841 = vmatprep.subr.mxu0 0.0
    %842 = vmatpush2.msra.mxu0 0.0
    %843 = vmatprep.subr.mxu0 0.0
    %844 = vmatpush2.msra.mxu0 0.0
    %845 = vmatprep.subr.mxu0 0.0
    %846 = vmatpush2.msra.mxu0 0.0
    %847 = vmatprep.subr.mxu0 0.0
    %848 = vmatpush2.msra.mxu0 0.0
    %849 = vmatprep.subr.mxu0 0.0
    %850 = vmatpush2.msra.mxu0 0.0
    %851 = vmatprep.mubr.f32.mxu0 0.0
    %852 = vmatmul.mubr.f32.gmra.mxu0 %v714
    %v853 = vpop.f32.mrf.mxu0
    %v854 = vadd.f32 0.0, %v853
    %v855 = vpop.f32.mrf.mxu0
    %856 = vdwg.mxu0
    %v860 = vrot.slane %v783, 6
    %v861 = vrot.slane %v785, 6
    %v862 = vrot.slane %v854, 6
    %v866 = vadd.f32 %v109, %v860
    %v867 = vadd.f32 %v111, %v861
    %v868 = vadd.f32 %v186, %v862
    %v869 = vxor.u32 %v866, 2147483648
    %v870 = vmul.f32 %v869, 1.442695
    %v871 = vpow.pop %v870
    %v872 = vadd.f32 %v871, 1.0
    %v873 = vrcp.pop %v872
    %v874 = vmul.f32 1.0, %v873
    %v875 = vxor.u32 %v867, 2147483648
    %v876 = vmul.f32 %v875, 1.442695
    %v877 = vpow.pop %v876
    %v878 = vadd.f32 %v877, 1.0
    %v879 = vrcp.pop %v878
    %v880 = vmul.f32 1.0, %v879
    %v881 = vtanh.pop %v867
    %v882 = vtanh.pop %v868
    %v883 = vxor.u32 %v868, 2147483648
    %v884 = vmul.f32 %v883, 1.442695
    %v885 = vpow.pop %v884
    %v886 = vadd.f32 %v885, 1.0
    %v887 = vrcp.pop %v886
    %v888 = vmul.f32 1.0, %v887
    %v891 = vrot.slane %v435, 6
    %v892 = vrot.slane %v436, 6
    %v895 = vmul.f32 %v874, %v891
    %v896 = vmul.f32 %v880, %v892
    %899 = vrot.lane.b32.xlu0 %v881, 64
    %v900 = vpop.permute.xlu0 %899
    %901 = vrot.lane.b32.xlu0 %v882, 64
    %v902 = vpop.permute.xlu0 %901
    %v903 = vsel %vm413, %v900, %v902
    %v905 = vmul.f32 %v874, %v903
    %907 = vrot.lane.b32.xlu0 %v905, 96
    %v908 = vpop.permute.xlu0 %907
    %v910 = vadd.f32 %v895, %v908
    %v911 = vadd.f32 %v896, %v908
    %v912 = vtanh.pop %v910
    %v913 = vtanh.pop %v911
    %916 = vrot.lane.b32.xlu0 %v912, 64
    %v917 = vpop.permute.xlu0 %916
    %918 = vrot.lane.b32.xlu0 %v913, 64
    %v919 = vpop.permute.xlu0 %918
    %v920 = vsel %vm413, %v917, %v919
    %v922 = vmul.f32 %v888, %v920
    %v924 = vrot.slane %v922, 2
    %925 = vrot.lane.b32.xlu0 %v924, 96
    %v926 = vpop.permute.xlu0 %925
    %v928 = vsel %vm713, %v926, %v439
    %v931 = vrot.slane %v910, 2
    %v932 = vrot.slane %v911, 2
    %933 = vrot.lane.b32.xlu0 %v931, 32
    %v934 = vpop.permute.xlu0 %933
    %935 = vrot.lane.b32.xlu0 %v932, 32
    %v936 = vpop.permute.xlu0 %935
    %v937 = vsel %vm35, %v934, %v936
    %939 = vrot.lane.b32.xlu0 %v435, 32
    %v940 = vpop.permute.xlu0 %939
    %941 = vrot.lane.b32.xlu0 %v436, 32
    %v942 = vpop.permute.xlu0 %941
    %v943 = vsel %vm35, %v940, %v942
    %v945 = vsel %vm713, %v937, %v943
    %947 = vrot.lane.b32.xlu0 %v705, 64
    %v948 = vpop.permute.xlu0 %947
    %v950 = vsel %vm237, %v928, %v948
    %v951 = vsel %vm413, %v948, 0
    %953 = vmatprep.subr.mxu0 %v488
    %954 = vmatpush1.msra.mxu0 %v487
    %955 = vmatprep.subr.mxu0 %v485
    %956 = vmatpush1.msra.mxu0 %v484
    %957 = vmatprep.subr.mxu0 %v482
    %958 = vmatpush1.msra.mxu0 %v481
    %959 = vmatprep.subr.mxu0 %v479
    %960 = vmatpush1.msra.mxu0 %v478
    %961 = vmatprep.subr.mxu0 %v476
    %962 = vmatpush1.msra.mxu0 %v475
    %963 = vmatprep.subr.mxu0 %v473
    %964 = vmatpush1.msra.mxu0 %v472
    %965 = vmatprep.subr.mxu0 %v470
    %966 = vmatpush1.msra.mxu0 %v469
    %967 = vmatprep.subr.mxu0 %v467
    %968 = vmatpush1.msra.mxu0 %v466
    %969 = vmatprep.subr.mxu0 %v464
    %970 = vmatpush1.msra.mxu0 %v463
    %971 = vmatprep.subr.mxu0 %v461
    %972 = vmatpush1.msra.mxu0 %v460
    %973 = vmatprep.subr.mxu0 %v458
    %974 = vmatpush1.msra.mxu0 %v457
    %975 = vmatprep.subr.mxu0 %v455
    %976 = vmatpush1.msra.mxu0 %v454
    %977 = vmatprep.subr.mxu0 %v452
    %978 = vmatpush1.msra.mxu0 %v451
    %979 = vmatprep.subr.mxu0 %v449
    %980 = vmatpush1.msra.mxu0 %v448
    %981 = vmatprep.subr.mxu0 %v446
    %982 = vmatpush1.msra.mxu0 %v445
    %983 = vmatprep.subr.mxu0 %v443
    %984 = vmatpush1.msra.mxu0 %v442
    %985 = vmatprep.subr.mxu0 0.0
    %986 = vmatpush2.msra.mxu0 0.0
    %987 = vmatprep.subr.mxu0 0.0
    %988 = vmatpush2.msra.mxu0 0.0
    %989 = vmatprep.subr.mxu0 0.0
    %990 = vmatpush2.msra.mxu0 0.0
    %991 = vmatprep.subr.mxu0 0.0
    %992 = vmatpush2.msra.mxu0 0.0
    %993 = vmatprep.subr.mxu0 0.0
    %994 = vmatpush2.msra.mxu0 0.0
    %995 = vmatprep.subr.mxu0 0.0
    %996 = vmatpush2.msra.mxu0 0.0
    %997 = vmatprep.subr.mxu0 0.0
    %998 = vmatpush2.msra.mxu0 0.0
    %999 = vmatprep.subr.mxu0 0.0
    %1000 = vmatpush2.msra.mxu0 0.0
    %1001 = vmatprep.subr.mxu0 %v512
    %1002 = vmatpush2.msra.mxu0 %v511
    %1003 = vmatprep.subr.mxu0 %v509
    %1004 = vmatpush2.msra.mxu0 %v508
    %1005 = vmatprep.subr.mxu0 %v506
    %1006 = vmatpush2.msra.mxu0 %v505
    %1007 = vmatprep.subr.mxu0 %v503
    %1008 = vmatpush2.msra.mxu0 %v502
    %1009 = vmatprep.subr.mxu0 %v500
    %1010 = vmatpush2.msra.mxu0 %v499
    %1011 = vmatprep.subr.mxu0 %v497
    %1012 = vmatpush2.msra.mxu0 %v496
    %1013 = vmatprep.subr.mxu0 %v494
    %1014 = vmatpush2.msra.mxu0 %v493
    %1015 = vmatprep.subr.mxu0 %v491
    %1016 = vmatpush2.msra.mxu0 %v490
    %1017 = vmatprep.mubr.f32.mxu0 %v951
    %1018 = vmatmul.mubr.f32.gmra.mxu0 %v950
    %v1019 = vpop.f32.mrf.mxu0
    %v1020 = vadd.f32 0.0, %v1019
    %v1021 = vpop.f32.mrf.mxu0
    %v1022 = vadd.f32 0.0, %v1021
    %1023 = vdwg.mxu0
    %1024 = vmatprep.subr.mxu0 0.0
    %1025 = vmatpush1.msra.mxu0 %v489
    %1026 = vmatprep.subr.mxu0 0.0
    %1027 = vmatpush1.msra.mxu0 %v486
    %1028 = vmatprep.subr.mxu0 0.0
    %1029 = vmatpush1.msra.mxu0 %v483
    %1030 = vmatprep.subr.mxu0 0.0
    %1031 = vmatpush1.msra.mxu0 %v480
    %1032 = vmatprep.subr.mxu0 0.0
    %1033 = vmatpush1.msra.mxu0 %v477
    %1034 = vmatprep.subr.mxu0 0.0
    %1035 = vmatpush1.msra.mxu0 %v474
    %1036 = vmatprep.subr.mxu0 0.0
    %1037 = vmatpush1.msra.mxu0 %v471
    %1038 = vmatprep.subr.mxu0 0.0
    %1039 = vmatpush1.msra.mxu0 %v468
    %1040 = vmatprep.subr.mxu0 0.0
    %1041 = vmatpush1.msra.mxu0 %v465
    %1042 = vmatprep.subr.mxu0 0.0
    %1043 = vmatpush1.msra.mxu0 %v462
    %1044 = vmatprep.subr.mxu0 0.0
    %1045 = vmatpush1.msra.mxu0 %v459
    %1046 = vmatprep.subr.mxu0 0.0
    %1047 = vmatpush1.msra.mxu0 %v456
    %1048 = vmatprep.subr.mxu0 0.0
    %1049 = vmatpush1.msra.mxu0 %v453
    %1050 = vmatprep.subr.mxu0 0.0
    %1051 = vmatpush1.msra.mxu0 %v450
    %1052 = vmatprep.subr.mxu0 0.0
    %1053 = vmatpush1.msra.mxu0 %v447
    %1054 = vmatprep.subr.mxu0 0.0
    %1055 = vmatpush1.msra.mxu0 %v444
    %1056 = vmatprep.subr.mxu0 0.0
    %1057 = vmatpush2.msra.mxu0 0.0
    %1058 = vmatprep.subr.mxu0 0.0
    %1059 = vmatpush2.msra.mxu0 0.0
    %1060 = vmatprep.subr.mxu0 0.0
    %1061 = vmatpush2.msra.mxu0 0.0
    %1062 = vmatprep.subr.mxu0 0.0
    %1063 = vmatpush2.msra.mxu0 0.0
    %1064 = vmatprep.subr.mxu0 0.0
    %1065 = vmatpush2.msra.mxu0 0.0
    %1066 = vmatprep.subr.mxu0 0.0
    %1067 = vmatpush2.msra.mxu0 0.0
    %1068 = vmatprep.subr.mxu0 0.0
    %1069 = vmatpush2.msra.mxu0 0.0
    %1070 = vmatprep.subr.mxu0 0.0
    %1071 = vmatpush2.msra.mxu0 0.0
    %1072 = vmatprep.subr.mxu0 0.0
    %1073 = vmatpush2.msra.mxu0 %v513
    %1074 = vmatprep.subr.mxu0 0.0
    %1075 = vmatpush2.msra.mxu0 %v510
    %1076 = vmatprep.subr.mxu0 0.0
    %1077 = vmatpush2.msra.mxu0 %v507
    %1078 = vmatprep.subr.mxu0 0.0
    %1079 = vmatpush2.msra.mxu0 %v504
    %1080 = vmatprep.subr.mxu0 0.0
    %1081 = vmatpush2.msra.mxu0 %v501
    %1082 = vmatprep.subr.mxu0 0.0
    %1083 = vmatpush2.msra.mxu0 %v498
    %1084 = vmatprep.subr.mxu0 0.0
    %1085 = vmatpush2.msra.mxu0 %v495
    %1086 = vmatprep.subr.mxu0 0.0
    %1087 = vmatpush2.msra.mxu0 %v492
    %1088 = vmatprep.mubr.f32.mxu0 %v951
    %1089 = vmatmul.mubr.f32.gmra.mxu0 %v950
    %v1090 = vpop.f32.mrf.mxu0
    %v1091 = vadd.f32 0.0, %v1090
    %v1092 = vpop.f32.mrf.mxu0
    %1093 = vdwg.mxu0
    %v1094 = vxor.u32 %v1020, 2147483648
    %v1095 = vmul.f32 %v1094, 1.442695
    %v1096 = vpow.pop %v1095
    %v1097 = vadd.f32 %v1096, 1.0
    %v1098 = vrcp.pop %v1097
    %v1099 = vmul.f32 1.0, %v1098
    %v1100 = vxor.u32 %v1022, 2147483648
    %v1101 = vmul.f32 %v1100, 1.442695
    %v1102 = vpow.pop %v1101
    %v1103 = vadd.f32 %v1102, 1.0
    %v1104 = vrcp.pop %v1103
    %v1105 = vmul.f32 1.0, %v1104
    %v1106 = vtanh.pop %v1022
    %v1107 = vtanh.pop %v1091
    %v1108 = vxor.u32 %v1091, 2147483648
    %v1109 = vmul.f32 %v1108, 1.442695
    %v1110 = vpow.pop %v1109
    %v1111 = vadd.f32 %v1110, 1.0
    %v1112 = vrcp.pop %v1111
    %v1113 = vmul.f32 1.0, %v1112
    %v1114 = vmul.f32 %v1099, %v706
    %v1115 = vmul.f32 %v1105, %v707
    %1118 = vrot.lane.b32.xlu0 %v1106, 64
    %v1119 = vpop.permute.xlu0 %1118
    %1120 = vrot.lane.b32.xlu0 %v1107, 64
    %v1121 = vpop.permute.xlu0 %1120
    %v1122 = vsel %vm413, %v1119, %v1121
    %v1124 = vmul.f32 %v1099, %v1122
    %1126 = vrot.lane.b32.xlu0 %v1124, 96
    %v1127 = vpop.permute.xlu0 %1126
    %v1129 = vadd.f32 %v1114, %v1127
    %v1130 = vadd.f32 %v1115, %v1127
    %v1131 = vtanh.pop %v1129
    %v1132 = vtanh.pop %v1130
    %1135 = vrot.lane.b32.xlu0 %v1131, 64
    %v1136 = vpop.permute.xlu0 %1135
    %1137 = vrot.lane.b32.xlu0 %v1132, 64
    %v1138 = vpop.permute.xlu0 %1137
    %v1139 = vsel %vm413, %v1136, %v1138
    %v1141 = vmul.f32 %v1113, %v1139
    %v1142 = vsel %vm713, %v1141, %v705
    %v1143 = vsel %vm713, %v1129, %v706
    %v1144 = vsel %vm713, %v1130, %v707
    %vm1145 = vcmp.gt.s32.totalorder %v194, 2
    %v1146 = vsel %vm1145, 1, 0
    %1147 = vset.pattern.permute.xlu0 0
    %1148 = vperm.xlu0 %1147, %v1146
    %v1149 = vpop.permute.xlu0 %1148
    %vm1150 = vcmp.eq.s32.totalorder %v1149, 1
    %v1152 = vsel %vm237, %v928, 0
    %1154 = vmatprep.subr.mxu0 0.0
    %1155 = vmatpush1.msra.mxu0 0.0
    %1156 = vmatprep.subr.mxu0 0.0
    %1157 = vmatpush1.msra.mxu0 0.0
    %1158 = vmatprep.subr.mxu0 0.0
    %1159 = vmatpush1.msra.mxu0 0.0
    %1160 = vmatprep.subr.mxu0 0.0
    %1161 = vmatpush1.msra.mxu0 0.0
    %1162 = vmatprep.subr.mxu0 %v235
    %1163 = vmatpush1.msra.mxu0 %v234
    %1164 = vmatprep.subr.mxu0 %v232
    %1165 = vmatpush1.msra.mxu0 %v231
    %1166 = vmatprep.subr.mxu0 %v229
    %1167 = vmatpush1.msra.mxu0 %v228
    %1168 = vmatprep.subr.mxu0 %v226
    %1169 = vmatpush1.msra.mxu0 %v225
    %1170 = vmatprep.subr.mxu0 %v223
    %1171 = vmatpush1.msra.mxu0 %v222
    %1172 = vmatprep.subr.mxu0 %v220
    %1173 = vmatpush1.msra.mxu0 %v219
    %1174 = vmatprep.subr.mxu0 %v217
    %1175 = vmatpush1.msra.mxu0 %v216
    %1176 = vmatprep.subr.mxu0 %v214
    %1177 = vmatpush1.msra.mxu0 %v213
    %1178 = vmatprep.subr.mxu0 %v211
    %1179 = vmatpush1.msra.mxu0 %v210
    %1180 = vmatprep.subr.mxu0 %v208
    %1181 = vmatpush1.msra.mxu0 %v207
    %1182 = vmatprep.subr.mxu0 %v205
    %1183 = vmatpush1.msra.mxu0 %v204
    %1184 = vmatprep.subr.mxu0 %v202
    %1185 = vmatpush1.msra.mxu0 %v201
    %1186 = vmatprep.subr.mxu0 0.0
    %1187 = vmatpush2.msra.mxu0 0.0
    %1188 = vmatprep.subr.mxu0 0.0
    %1189 = vmatpush2.msra.mxu0 0.0
    %1190 = vmatprep.subr.mxu0 0.0
    %1191 = vmatpush2.msra.mxu0 0.0
    %1192 = vmatprep.subr.mxu0 0.0
    %1193 = vmatpush2.msra.mxu0 0.0
    %1194 = vmatprep.subr.mxu0 0.0
    %1195 = vmatpush2.msra.mxu0 0.0
    %1196 = vmatprep.subr.mxu0 0.0
    %1197 = vmatpush2.msra.mxu0 0.0
    %1198 = vmatprep.subr.mxu0 0.0
    %1199 = vmatpush2.msra.mxu0 0.0
    %1200 = vmatprep.subr.mxu0 0.0
    %1201 = vmatpush2.msra.mxu0 0.0
    %1202 = vmatprep.subr.mxu0 0.0
    %1203 = vmatpush2.msra.mxu0 0.0
    %1204 = vmatprep.subr.mxu0 0.0
    %1205 = vmatpush2.msra.mxu0 0.0
    %1206 = vmatprep.subr.mxu0 0.0
    %1207 = vmatpush2.msra.mxu0 0.0
    %1208 = vmatprep.subr.mxu0 0.0
    %1209 = vmatpush2.msra.mxu0 0.0
    %1210 = vmatprep.subr.mxu0 0.0
    %1211 = vmatpush2.msra.mxu0 0.0
    %1212 = vmatprep.subr.mxu0 0.0
    %1213 = vmatpush2.msra.mxu0 0.0
    %1214 = vmatprep.subr.mxu0 0.0
    %1215 = vmatpush2.msra.mxu0 0.0
    %1216 = vmatprep.subr.mxu0 0.0
    %1217 = vmatpush2.msra.mxu0 0.0
    %1218 = vmatprep.mubr.f32.mxu0 0.0
    %1219 = vmatmul.mubr.f32.gmra.mxu0 %v1152
    %v1220 = vpop.f32.mrf.mxu0
    %v1221 = vadd.f32 0.0, %v1220
    %v1222 = vpop.f32.mrf.mxu0
    %v1223 = vadd.f32 0.0, %v1222
    %1224 = vdwg.mxu0
    %1225 = vmatprep.subr.mxu0 0.0
    %1226 = vmatpush1.msra.mxu0 0.0
    %1227 = vmatprep.subr.mxu0 0.0
    %1228 = vmatpush1.msra.mxu0 0.0
    %1229 = vmatprep.subr.mxu0 0.0
    %1230 = vmatpush1.msra.mxu0 0.0
    %1231 = vmatprep.subr.mxu0 0.0
    %1232 = vmatpush1.msra.mxu0 0.0
    %1233 = vmatprep.subr.mxu0 0.0
    %1234 = vmatpush1.msra.mxu0 %v236
    %1235 = vmatprep.subr.mxu0 0.0
    %1236 = vmatpush1.msra.mxu0 %v233
    %1237 = vmatprep.subr.mxu0 0.0
    %1238 = vmatpush1.msra.mxu0 %v230
    %1239 = vmatprep.subr.mxu0 0.0
    %1240 = vmatpush1.msra.mxu0 %v227
    %1241 = vmatprep.subr.mxu0 0.0
    %1242 = vmatpush1.msra.mxu0 %v224
    %1243 = vmatprep.subr.mxu0 0.0
    %1244 = vmatpush1.msra.mxu0 %v221
    %1245 = vmatprep.subr.mxu0 0.0
    %1246 = vmatpush1.msra.mxu0 %v218
    %1247 = vmatprep.subr.mxu0 0.0
    %1248 = vmatpush1.msra.mxu0 %v215
    %1249 = vmatprep.subr.mxu0 0.0
    %1250 = vmatpush1.msra.mxu0 %v212
    %1251 = vmatprep.subr.mxu0 0.0
    %1252 = vmatpush1.msra.mxu0 %v209
    %1253 = vmatprep.subr.mxu0 0.0
    %1254 = vmatpush1.msra.mxu0 %v206
    %1255 = vmatprep.subr.mxu0 0.0
    %1256 = vmatpush1.msra.mxu0 %v203
    %1257 = vmatprep.subr.mxu0 0.0
    %1258 = vmatpush2.msra.mxu0 0.0
    %1259 = vmatprep.subr.mxu0 0.0
    %1260 = vmatpush2.msra.mxu0 0.0
    %1261 = vmatprep.subr.mxu0 0.0
    %1262 = vmatpush2.msra.mxu0 0.0
    %1263 = vmatprep.subr.mxu0 0.0
    %1264 = vmatpush2.msra.mxu0 0.0
    %1265 = vmatprep.subr.mxu0 0.0
    %1266 = vmatpush2.msra.mxu0 0.0
    %1267 = vmatprep.subr.mxu0 0.0
    %1268 = vmatpush2.msra.mxu0 0.0
    %1269 = vmatprep.subr.mxu0 0.0
    %1270 = vmatpush2.msra.mxu0 0.0
    %1271 = vmatprep.subr.mxu0 0.0
    %1272 = vmatpush2.msra.mxu0 0.0
    %1273 = vmatprep.subr.mxu0 0.0
    %1274 = vmatpush2.msra.mxu0 0.0
    %1275 = vmatprep.subr.mxu0 0.0
    %1276 = vmatpush2.msra.mxu0 0.0
    %1277 = vmatprep.subr.mxu0 0.0
    %1278 = vmatpush2.msra.mxu0 0.0
    %1279 = vmatprep.subr.mxu0 0.0
    %1280 = vmatpush2.msra.mxu0 0.0
    %1281 = vmatprep.subr.mxu0 0.0
    %1282 = vmatpush2.msra.mxu0 0.0
    %1283 = vmatprep.subr.mxu0 0.0
    %1284 = vmatpush2.msra.mxu0 0.0
    %1285 = vmatprep.subr.mxu0 0.0
    %1286 = vmatpush2.msra.mxu0 0.0
    %1287 = vmatprep.subr.mxu0 0.0
    %1288 = vmatpush2.msra.mxu0 0.0
    %1289 = vmatprep.mubr.f32.mxu0 0.0
    %1290 = vmatmul.mubr.f32.gmra.mxu0 %v1152
    %v1291 = vpop.f32.mrf.mxu0
    %v1292 = vadd.f32 0.0, %v1291
    %v1293 = vpop.f32.mrf.mxu0
    %1294 = vdwg.mxu0
    %v1298 = vrot.slane %v1221, 4
    %v1299 = vrot.slane %v1223, 4
    %v1300 = vrot.slane %v1292, 4
    %v1304 = vadd.f32 %v109, %v1298
    %v1305 = vadd.f32 %v111, %v1299
    %v1306 = vadd.f32 %v186, %v1300
    %v1307 = vxor.u32 %v1304, 2147483648
    %v1308 = vmul.f32 %v1307, 1.442695
    %v1309 = vpow.pop %v1308
    %v1310 = vadd.f32 %v1309, 1.0
    %v1311 = vrcp.pop %v1310
    %v1312 = vmul.f32 1.0, %v1311
    %v1313 = vxor.u32 %v1305, 2147483648
    %v1314 = vmul.f32 %v1313, 1.442695
    %v1315 = vpow.pop %v1314
    %v1316 = vadd.f32 %v1315, 1.0
    %v1317 = vrcp.pop %v1316
    %v1318 = vmul.f32 1.0, %v1317
    %v1319 = vtanh.pop %v1305
    %v1320 = vtanh.pop %v1306
    %v1321 = vxor.u32 %v1306, 2147483648
    %v1322 = vmul.f32 %v1321, 1.442695
    %v1323 = vpow.pop %v1322
    %v1324 = vadd.f32 %v1323, 1.0
    %v1325 = vrcp.pop %v1324
    %v1326 = vmul.f32 1.0, %v1325
    %v1328 = vrot.slane %v945, 4
    %1329 = vrot.lane.b32.xlu0 %v1328, 96
    %v1330 = vpop.permute.xlu0 %1329
    %v1332 = vmul.f32 %v1312, %v1330
    %v1333 = vmul.f32 %v1318, %v1330
    %1336 = vrot.lane.b32.xlu0 %v1319, 64
    %v1337 = vpop.permute.xlu0 %1336
    %1338 = vrot.lane.b32.xlu0 %v1320, 64
    %v1339 = vpop.permute.xlu0 %1338
    %v1340 = vsel %vm413, %v1337, %v1339
    %v1342 = vmul.f32 %v1312, %v1340
    %1344 = vrot.lane.b32.xlu0 %v1342, 96
    %v1345 = vpop.permute.xlu0 %1344
    %v1347 = vadd.f32 %v1332, %v1345
    %v1348 = vadd.f32 %v1333, %v1345
    %v1349 = vtanh.pop %v1347
    %v1350 = vtanh.pop %v1348
    %1353 = vrot.lane.b32.xlu0 %v1349, 64
    %v1354 = vpop.permute.xlu0 %1353
    %1355 = vrot.lane.b32.xlu0 %v1350, 64
    %v1356 = vpop.permute.xlu0 %1355
    %v1357 = vsel %vm413, %v1354, %v1356
    %v1359 = vmul.f32 %v1326, %v1357
    %v1361 = vrot.slane %v1359, 4
    %1362 = vrot.lane.b32.xlu0 %v1361, 96
    %v1363 = vpop.permute.xlu0 %1362
    %v1365 = vsel %vm1150, %v1363, %v928
    %v1368 = vrot.slane %v1347, 4
    %v1369 = vrot.slane %v1348, 4
    %1370 = vrot.lane.b32.xlu0 %v1368, 32
    %v1371 = vpop.permute.xlu0 %1370
    %1372 = vrot.lane.b32.xlu0 %v1369, 32
    %v1373 = vpop.permute.xlu0 %1372
    %v1374 = vsel %vm35, %v1371, %v1373
    %v1376 = vsel %vm1150, %v1374, %v945
    %1378 = vrot.lane.b32.xlu0 %v1142, 64
    %v1379 = vpop.permute.xlu0 %1378
    %v1381 = vsel %vm237, %v1365, %v1379
    %v1382 = vsel %vm413, %v1379, 0
    %1384 = vmatprep.subr.mxu0 %v488
    %1385 = vmatpush1.msra.mxu0 %v487
    %1386 = vmatprep.subr.mxu0 %v485
    %1387 = vmatpush1.msra.mxu0 %v484
    %1388 = vmatprep.subr.mxu0 %v482
    %1389 = vmatpush1.msra.mxu0 %v481
    %1390 = vmatprep.subr.mxu0 %v479
    %1391 = vmatpush1.msra.mxu0 %v478
    %1392 = vmatprep.subr.mxu0 %v476
    %1393 = vmatpush1.msra.mxu0 %v475
    %1394 = vmatprep.subr.mxu0 %v473
    %1395 = vmatpush1.msra.mxu0 %v472
    %1396 = vmatprep.subr.mxu0 %v470
    %1397 = vmatpush1.msra.mxu0 %v469
    %1398 = vmatprep.subr.mxu0 %v467
    %1399 = vmatpush1.msra.mxu0 %v466
    %1400 = vmatprep.subr.mxu0 %v464
    %1401 = vmatpush1.msra.mxu0 %v463
    %1402 = vmatprep.subr.mxu0 %v461
    %1403 = vmatpush1.msra.mxu0 %v460
    %1404 = vmatprep.subr.mxu0 %v458
    %1405 = vmatpush1.msra.mxu0 %v457
    %1406 = vmatprep.subr.mxu0 %v455
    %1407 = vmatpush1.msra.mxu0 %v454
    %1408 = vmatprep.subr.mxu0 %v452
    %1409 = vmatpush1.msra.mxu0 %v451
    %1410 = vmatprep.subr.mxu0 %v449
    %1411 = vmatpush1.msra.mxu0 %v448
    %1412 = vmatprep.subr.mxu0 %v446
    %1413 = vmatpush1.msra.mxu0 %v445
    %1414 = vmatprep.subr.mxu0 %v443
    %1415 = vmatpush1.msra.mxu0 %v442
    %1416 = vmatprep.subr.mxu0 0.0
    %1417 = vmatpush2.msra.mxu0 0.0
    %1418 = vmatprep.subr.mxu0 0.0
    %1419 = vmatpush2.msra.mxu0 0.0
    %1420 = vmatprep.subr.mxu0 0.0
    %1421 = vmatpush2.msra.mxu0 0.0
    %1422 = vmatprep.subr.mxu0 0.0
    %1423 = vmatpush2.msra.mxu0 0.0
    %1424 = vmatprep.subr.mxu0 0.0
    %1425 = vmatpush2.msra.mxu0 0.0
    %1426 = vmatprep.subr.mxu0 0.0
    %1427 = vmatpush2.msra.mxu0 0.0
    %1428 = vmatprep.subr.mxu0 0.0
    %1429 = vmatpush2.msra.mxu0 0.0
    %1430 = vmatprep.subr.mxu0 0.0
    %1431 = vmatpush2.msra.mxu0 0.0
    %1432 = vmatprep.subr.mxu0 %v512
    %1433 = vmatpush2.msra.mxu0 %v511
    %1434 = vmatprep.subr.mxu0 %v509
    %1435 = vmatpush2.msra.mxu0 %v508
    %1436 = vmatprep.subr.mxu0 %v506
    %1437 = vmatpush2.msra.mxu0 %v505
    %1438 = vmatprep.subr.mxu0 %v503
    %1439 = vmatpush2.msra.mxu0 %v502
    %1440 = vmatprep.subr.mxu0 %v500
    %1441 = vmatpush2.msra.mxu0 %v499
    %1442 = vmatprep.subr.mxu0 %v497
    %1443 = vmatpush2.msra.mxu0 %v496
    %1444 = vmatprep.subr.mxu0 %v494
    %1445 = vmatpush2.msra.mxu0 %v493
    %1446 = vmatprep.subr.mxu0 %v491
    %1447 = vmatpush2.msra.mxu0 %v490
    %1448 = vmatprep.mubr.f32.mxu0 %v1382
    %1449 = vmatmul.mubr.f32.gmra.mxu0 %v1381
    %v1450 = vpop.f32.mrf.mxu0
    %v1451 = vadd.f32 0.0, %v1450
    %v1452 = vpop.f32.mrf.mxu0
    %v1453 = vadd.f32 0.0, %v1452
    %1454 = vdwg.mxu0
    %1455 = vmatprep.subr.mxu0 0.0
    %1456 = vmatpush1.msra.mxu0 %v489
    %1457 = vmatprep.subr.mxu0 0.0
    %1458 = vmatpush1.msra.mxu0 %v486
    %1459 = vmatprep.subr.mxu0 0.0
    %1460 = vmatpush1.msra.mxu0 %v483
    %1461 = vmatprep.subr.mxu0 0.0
    %1462 = vmatpush1.msra.mxu0 %v480
    %1463 = vmatprep.subr.mxu0 0.0
    %1464 = vmatpush1.msra.mxu0 %v477
    %1465 = vmatprep.subr.mxu0 0.0
    %1466 = vmatpush1.msra.mxu0 %v474
    %1467 = vmatprep.subr.mxu0 0.0
    %1468 = vmatpush1.msra.mxu0 %v471
    %1469 = vmatprep.subr.mxu0 0.0
    %1470 = vmatpush1.msra.mxu0 %v468
    %1471 = vmatprep.subr.mxu0 0.0
    %1472 = vmatpush1.msra.mxu0 %v465
    %1473 = vmatprep.subr.mxu0 0.0
    %1474 = vmatpush1.msra.mxu0 %v462
    %1475 = vmatprep.subr.mxu0 0.0
    %1476 = vmatpush1.msra.mxu0 %v459
    %1477 = vmatprep.subr.mxu0 0.0
    %1478 = vmatpush1.msra.mxu0 %v456
    %1479 = vmatprep.subr.mxu0 0.0
    %1480 = vmatpush1.msra.mxu0 %v453
    %1481 = vmatprep.subr.mxu0 0.0
    %1482 = vmatpush1.msra.mxu0 %v450
    %1483 = vmatprep.subr.mxu0 0.0
    %1484 = vmatpush1.msra.mxu0 %v447
    %1485 = vmatprep.subr.mxu0 0.0
    %1486 = vmatpush1.msra.mxu0 %v444
    %1487 = vmatprep.subr.mxu0 0.0
    %1488 = vmatpush2.msra.mxu0 0.0
    %1489 = vmatprep.subr.mxu0 0.0
    %1490 = vmatpush2.msra.mxu0 0.0
    %1491 = vmatprep.subr.mxu0 0.0
    %1492 = vmatpush2.msra.mxu0 0.0
    %1493 = vmatprep.subr.mxu0 0.0
    %1494 = vmatpush2.msra.mxu0 0.0
    %1495 = vmatprep.subr.mxu0 0.0
    %1496 = vmatpush2.msra.mxu0 0.0
    %1497 = vmatprep.subr.mxu0 0.0
    %1498 = vmatpush2.msra.mxu0 0.0
    %1499 = vmatprep.subr.mxu0 0.0
    %1500 = vmatpush2.msra.mxu0 0.0
    %1501 = vmatprep.subr.mxu0 0.0
    %1502 = vmatpush2.msra.mxu0 0.0
    %1503 = vmatprep.subr.mxu0 0.0
    %1504 = vmatpush2.msra.mxu0 %v513
    %1505 = vmatprep.subr.mxu0 0.0
    %1506 = vmatpush2.msra.mxu0 %v510
    %1507 = vmatprep.subr.mxu0 0.0
    %1508 = vmatpush2.msra.mxu0 %v507
    %1509 = vmatprep.subr.mxu0 0.0
    %1510 = vmatpush2.msra.mxu0 %v504
    %1511 = vmatprep.subr.mxu0 0.0
    %1512 = vmatpush2.msra.mxu0 %v501
    %1513 = vmatprep.subr.mxu0 0.0
    %1514 = vmatpush2.msra.mxu0 %v498
    %1515 = vmatprep.subr.mxu0 0.0
    %1516 = vmatpush2.msra.mxu0 %v495
    %1517 = vmatprep.subr.mxu0 0.0
    %1518 = vmatpush2.msra.mxu0 %v492
    %1519 = vmatprep.mubr.f32.mxu0 %v1382
    %1520 = vmatmul.mubr.f32.gmra.mxu0 %v1381
    %v1521 = vpop.f32.mrf.mxu0
    %v1522 = vadd.f32 0.0, %v1521
    %v1523 = vpop.f32.mrf.mxu0
    %1524 = vdwg.mxu0
    %v1525 = vxor.u32 %v1451, 2147483648
    %v1526 = vmul.f32 %v1525, 1.442695
    %v1527 = vpow.pop %v1526
    %v1528 = vadd.f32 %v1527, 1.0
    %v1529 = vrcp.pop %v1528
    %v1530 = vmul.f32 1.0, %v1529
    %v1531 = vxor.u32 %v1453, 2147483648
    %v1532 = vmul.f32 %v1531, 1.442695
    %v1533 = vpow.pop %v1532
    %v1534 = vadd.f32 %v1533, 1.0
    %v1535 = vrcp.pop %v1534
    %v1536 = vmul.f32 1.0, %v1535
    %v1537 = vtanh.pop %v1453
    %v1538 = vtanh.pop %v1522
    %v1539 = vxor.u32 %v1522, 2147483648
    %v1540 = vmul.f32 %v1539, 1.442695
    %v1541 = vpow.pop %v1540
    %v1542 = vadd.f32 %v1541, 1.0
    %v1543 = vrcp.pop %v1542
    %v1544 = vmul.f32 1.0, %v1543
    %v1545 = vmul.f32 %v1530, %v1143
    %v1546 = vmul.f32 %v1536, %v1144
    %1549 = vrot.lane.b32.xlu0 %v1537, 64
    %v1550 = vpop.permute.xlu0 %1549
    %1551 = vrot.lane.b32.xlu0 %v1538, 64
    %v1552 = vpop.permute.xlu0 %1551
    %v1553 = vsel %vm413, %v1550, %v1552
    %v1555 = vmul.f32 %v1530, %v1553
    %1557 = vrot.lane.b32.xlu0 %v1555, 96
    %v1558 = vpop.permute.xlu0 %1557
    %v1560 = vadd.f32 %v1545, %v1558
    %v1561 = vadd.f32 %v1546, %v1558
    %v1562 = vtanh.pop %v1560
    %v1563 = vtanh.pop %v1561
    %1566 = vrot.lane.b32.xlu0 %v1562, 64
    %v1567 = vpop.permute.xlu0 %1566
    %1568 = vrot.lane.b32.xlu0 %v1563, 64
    %v1569 = vpop.permute.xlu0 %1568
    %v1570 = vsel %vm413, %v1567, %v1569
    %v1572 = vmul.f32 %v1544, %v1570
    %v1573 = vsel %vm1150, %v1572, %v1142
    %v1574 = vsel %vm1150, %v1560, %v1143
    %v1575 = vsel %vm1150, %v1561, %v1144
    %vm1576 = vcmp.gt.s32.totalorder %v194, 3
    %v1577 = vsel %vm1576, 1, 0
    %1578 = vset.pattern.permute.xlu0 0
    %1579 = vperm.xlu0 %1578, %v1577
    %v1580 = vpop.permute.xlu0 %1579
    %vm1581 = vcmp.eq.s32.totalorder %v1580, 1
    %v1583 = vsel %vm237, %v1365, 0
    %1585 = vmatprep.subr.mxu0 0.0
    %1586 = vmatpush1.msra.mxu0 0.0
    %1587 = vmatprep.subr.mxu0 0.0
    %1588 = vmatpush1.msra.mxu0 0.0
    %1589 = vmatprep.subr.mxu0 0.0
    %1590 = vmatpush1.msra.mxu0 0.0
    %1591 = vmatprep.subr.mxu0 0.0
    %1592 = vmatpush1.msra.mxu0 0.0
    %1593 = vmatprep.subr.mxu0 %v235
    %1594 = vmatpush1.msra.mxu0 %v234
    %1595 = vmatprep.subr.mxu0 %v232
    %1596 = vmatpush1.msra.mxu0 %v231
    %1597 = vmatprep.subr.mxu0 %v229
    %1598 = vmatpush1.msra.mxu0 %v228
    %1599 = vmatprep.subr.mxu0 %v226
    %1600 = vmatpush1.msra.mxu0 %v225
    %1601 = vmatprep.subr.mxu0 %v223
    %1602 = vmatpush1.msra.mxu0 %v222
    %1603 = vmatprep.subr.mxu0 %v220
    %1604 = vmatpush1.msra.mxu0 %v219
    %1605 = vmatprep.subr.mxu0 %v217
    %1606 = vmatpush1.msra.mxu0 %v216
    %1607 = vmatprep.subr.mxu0 %v214
    %1608 = vmatpush1.msra.mxu0 %v213
    %1609 = vmatprep.subr.mxu0 %v211
    %1610 = vmatpush1.msra.mxu0 %v210
    %1611 = vmatprep.subr.mxu0 %v208
    %1612 = vmatpush1.msra.mxu0 %v207
    %1613 = vmatprep.subr.mxu0 %v205
    %1614 = vmatpush1.msra.mxu0 %v204
    %1615 = vmatprep.subr.mxu0 %v202
    %1616 = vmatpush1.msra.mxu0 %v201
    %1617 = vmatprep.subr.mxu0 0.0
    %1618 = vmatpush2.msra.mxu0 0.0
    %1619 = vmatprep.subr.mxu0 0.0
    %1620 = vmatpush2.msra.mxu0 0.0
    %1621 = vmatprep.subr.mxu0 0.0
    %1622 = vmatpush2.msra.mxu0 0.0
    %1623 = vmatprep.subr.mxu0 0.0
    %1624 = vmatpush2.msra.mxu0 0.0
    %1625 = vmatprep.subr.mxu0 0.0
    %1626 = vmatpush2.msra.mxu0 0.0
    %1627 = vmatprep.subr.mxu0 0.0
    %1628 = vmatpush2.msra.mxu0 0.0
    %1629 = vmatprep.subr.mxu0 0.0
    %1630 = vmatpush2.msra.mxu0 0.0
    %1631 = vmatprep.subr.mxu0 0.0
    %1632 = vmatpush2.msra.mxu0 0.0
    %1633 = vmatprep.subr.mxu0 0.0
    %1634 = vmatpush2.msra.mxu0 0.0
    %1635 = vmatprep.subr.mxu0 0.0
    %1636 = vmatpush2.msra.mxu0 0.0
    %1637 = vmatprep.subr.mxu0 0.0
    %1638 = vmatpush2.msra.mxu0 0.0
    %1639 = vmatprep.subr.mxu0 0.0
    %1640 = vmatpush2.msra.mxu0 0.0
    %1641 = vmatprep.subr.mxu0 0.0
    %1642 = vmatpush2.msra.mxu0 0.0
    %1643 = vmatprep.subr.mxu0 0.0
    %1644 = vmatpush2.msra.mxu0 0.0
    %1645 = vmatprep.subr.mxu0 0.0
    %1646 = vmatpush2.msra.mxu0 0.0
    %1647 = vmatprep.subr.mxu0 0.0
    %1648 = vmatpush2.msra.mxu0 0.0
    %1649 = vmatprep.mubr.f32.mxu0 0.0
    %1650 = vmatmul.mubr.f32.gmra.mxu0 %v1583
    %v1651 = vpop.f32.mrf.mxu0
    %v1652 = vadd.f32 0.0, %v1651
    %v1653 = vpop.f32.mrf.mxu0
    %v1654 = vadd.f32 0.0, %v1653
    %1655 = vdwg.mxu0
    %1656 = vmatprep.subr.mxu0 0.0
    %1657 = vmatpush1.msra.mxu0 0.0
    %1658 = vmatprep.subr.mxu0 0.0
    %1659 = vmatpush1.msra.mxu0 0.0
    %1660 = vmatprep.subr.mxu0 0.0
    %1661 = vmatpush1.msra.mxu0 0.0
    %1662 = vmatprep.subr.mxu0 0.0
    %1663 = vmatpush1.msra.mxu0 0.0
    %1664 = vmatprep.subr.mxu0 0.0
    %1665 = vmatpush1.msra.mxu0 %v236
    %1666 = vmatprep.subr.mxu0 0.0
    %1667 = vmatpush1.msra.mxu0 %v233
    %1668 = vmatprep.subr.mxu0 0.0
    %1669 = vmatpush1.msra.mxu0 %v230
    %1670 = vmatprep.subr.mxu0 0.0
    %1671 = vmatpush1.msra.mxu0 %v227
    %1672 = vmatprep.subr.mxu0 0.0
    %1673 = vmatpush1.msra.mxu0 %v224
    %1674 = vmatprep.subr.mxu0 0.0
    %1675 = vmatpush1.msra.mxu0 %v221
    %1676 = vmatprep.subr.mxu0 0.0
    %1677 = vmatpush1.msra.mxu0 %v218
    %1678 = vmatprep.subr.mxu0 0.0
    %1679 = vmatpush1.msra.mxu0 %v215
    %1680 = vmatprep.subr.mxu0 0.0
    %1681 = vmatpush1.msra.mxu0 %v212
    %1682 = vmatprep.subr.mxu0 0.0
    %1683 = vmatpush1.msra.mxu0 %v209
    %1684 = vmatprep.subr.mxu0 0.0
    %1685 = vmatpush1.msra.mxu0 %v206
    %1686 = vmatprep.subr.mxu0 0.0
    %1687 = vmatpush1.msra.mxu0 %v203
    %1688 = vmatprep.subr.mxu0 0.0
    %1689 = vmatpush2.msra.mxu0 0.0
    %1690 = vmatprep.subr.mxu0 0.0
    %1691 = vmatpush2.msra.mxu0 0.0
    %1692 = vmatprep.subr.mxu0 0.0
    %1693 = vmatpush2.msra.mxu0 0.0
    %1694 = vmatprep.subr.mxu0 0.0
    %1695 = vmatpush2.msra.mxu0 0.0
    %1696 = vmatprep.subr.mxu0 0.0
    %1697 = vmatpush2.msra.mxu0 0.0
    %1698 = vmatprep.subr.mxu0 0.0
    %1699 = vmatpush2.msra.mxu0 0.0
    %1700 = vmatprep.subr.mxu0 0.0
    %1701 = vmatpush2.msra.mxu0 0.0
    %1702 = vmatprep.subr.mxu0 0.0
    %1703 = vmatpush2.msra.mxu0 0.0
    %1704 = vmatprep.subr.mxu0 0.0
    %1705 = vmatpush2.msra.mxu0 0.0
    %1706 = vmatprep.subr.mxu0 0.0
    %1707 = vmatpush2.msra.mxu0 0.0
    %1708 = vmatprep.subr.mxu0 0.0
    %1709 = vmatpush2.msra.mxu0 0.0
    %1710 = vmatprep.subr.mxu0 0.0
    %1711 = vmatpush2.msra.mxu0 0.0
    %1712 = vmatprep.subr.mxu0 0.0
    %1713 = vmatpush2.msra.mxu0 0.0
    %1714 = vmatprep.subr.mxu0 0.0
    %1715 = vmatpush2.msra.mxu0 0.0
    %1716 = vmatprep.subr.mxu0 0.0
    %1717 = vmatpush2.msra.mxu0 0.0
    %1718 = vmatprep.subr.mxu0 0.0
    %1719 = vmatpush2.msra.mxu0 0.0
    %1720 = vmatprep.mubr.f32.mxu0 0.0
    %1721 = vmatmul.mubr.f32.gmra.mxu0 %v1583
    %v1722 = vpop.f32.mrf.mxu0
    %v1723 = vadd.f32 0.0, %v1722
    %v1724 = vpop.f32.mrf.mxu0
    %1725 = vdwg.mxu0
    %v1729 = vrot.slane %v1652, 2
    %v1730 = vrot.slane %v1654, 2
    %v1731 = vrot.slane %v1723, 2
    %v1735 = vadd.f32 %v109, %v1729
    %v1736 = vadd.f32 %v111, %v1730
    %v1737 = vadd.f32 %v186, %v1731
    %v1738 = vxor.u32 %v1735, 2147483648
    %v1739 = vmul.f32 %v1738, 1.442695
    %v1740 = vpow.pop %v1739
    %v1741 = vadd.f32 %v1740, 1.0
    %v1742 = vrcp.pop %v1741
    %v1743 = vmul.f32 1.0, %v1742
    %v1744 = vxor.u32 %v1736, 2147483648
    %v1745 = vmul.f32 %v1744, 1.442695
    %v1746 = vpow.pop %v1745
    %v1747 = vadd.f32 %v1746, 1.0
    %v1748 = vrcp.pop %v1747
    %v1749 = vmul.f32 1.0, %v1748
    %v1750 = vtanh.pop %v1736
    %v1751 = vtanh.pop %v1737
    %v1752 = vxor.u32 %v1737, 2147483648
    %v1753 = vmul.f32 %v1752, 1.442695
    %v1754 = vpow.pop %v1753
    %v1755 = vadd.f32 %v1754, 1.0
    %v1756 = vrcp.pop %v1755
    %v1757 = vmul.f32 1.0, %v1756
    %v1759 = vrot.slane %v1376, 2
    %1760 = vrot.lane.b32.xlu0 %v1759, 96
    %v1761 = vpop.permute.xlu0 %1760
    %v1763 = vmul.f32 %v1743, %v1761
    %v1764 = vmul.f32 %v1749, %v1761
    %1767 = vrot.lane.b32.xlu0 %v1750, 64
    %v1768 = vpop.permute.xlu0 %1767
    %1769 = vrot.lane.b32.xlu0 %v1751, 64
    %v1770 = vpop.permute.xlu0 %1769
    %v1771 = vsel %vm413, %v1768, %v1770
    %v1773 = vmul.f32 %v1743, %v1771
    %1775 = vrot.lane.b32.xlu0 %v1773, 96
    %v1776 = vpop.permute.xlu0 %1775
    %v1778 = vadd.f32 %v1763, %v1776
    %v1779 = vadd.f32 %v1764, %v1776
    %v1780 = vtanh.pop %v1778
    %v1781 = vtanh.pop %v1779
    %1784 = vrot.lane.b32.xlu0 %v1780, 64
    %v1785 = vpop.permute.xlu0 %1784
    %1786 = vrot.lane.b32.xlu0 %v1781, 64
    %v1787 = vpop.permute.xlu0 %1786
    %v1788 = vsel %vm413, %v1785, %v1787
    %v1790 = vmul.f32 %v1757, %v1788
    %v1792 = vrot.slane %v1790, 6
    %1793 = vrot.lane.b32.xlu0 %v1792, 96
    %v1794 = vpop.permute.xlu0 %1793
    %v1796 = vsel %vm1581, %v1794, %v1365
    %v1799 = vrot.slane %v1778, 6
    %v1800 = vrot.slane %v1779, 6
    %1801 = vrot.lane.b32.xlu0 %v1799, 32
    %v1802 = vpop.permute.xlu0 %1801
    %1803 = vrot.lane.b32.xlu0 %v1800, 32
    %v1804 = vpop.permute.xlu0 %1803
    %v1805 = vsel %vm35, %v1802, %v1804
    %v1807 = vsel %vm1581, %v1805, %v1376
    %1809 = vrot.lane.b32.xlu0 %v1573, 64
    %v1810 = vpop.permute.xlu0 %1809
    %v1812 = vsel %vm237, %v1796, %v1810
    %v1813 = vsel %vm413, %v1810, 0
    %1815 = vmatprep.subr.mxu0 %v488
    %1816 = vmatpush1.msra.mxu0 %v487
    %1817 = vmatprep.subr.mxu0 %v485
    %1818 = vmatpush1.msra.mxu0 %v484
    %1819 = vmatprep.subr.mxu0 %v482
    %1820 = vmatpush1.msra.mxu0 %v481
    %1821 = vmatprep.subr.mxu0 %v479
    %1822 = vmatpush1.msra.mxu0 %v478
    %1823 = vmatprep.subr.mxu0 %v476
    %1824 = vmatpush1.msra.mxu0 %v475
    %1825 = vmatprep.subr.mxu0 %v473
    %1826 = vmatpush1.msra.mxu0 %v472
    %1827 = vmatprep.subr.mxu0 %v470
    %1828 = vmatpush1.msra.mxu0 %v469
    %1829 = vmatprep.subr.mxu0 %v467
    %1830 = vmatpush1.msra.mxu0 %v466
    %1831 = vmatprep.subr.mxu0 %v464
    %1832 = vmatpush1.msra.mxu0 %v463
    %1833 = vmatprep.subr.mxu0 %v461
    %1834 = vmatpush1.msra.mxu0 %v460
    %1835 = vmatprep.subr.mxu0 %v458
    %1836 = vmatpush1.msra.mxu0 %v457
    %1837 = vmatprep.subr.mxu0 %v455
    %1838 = vmatpush1.msra.mxu0 %v454
    %1839 = vmatprep.subr.mxu0 %v452
    %1840 = vmatpush1.msra.mxu0 %v451
    %1841 = vmatprep.subr.mxu0 %v449
    %1842 = vmatpush1.msra.mxu0 %v448
    %1843 = vmatprep.subr.mxu0 %v446
    %1844 = vmatpush1.msra.mxu0 %v445
    %1845 = vmatprep.subr.mxu0 %v443
    %1846 = vmatpush1.msra.mxu0 %v442
    %1847 = vmatprep.subr.mxu0 0.0
    %1848 = vmatpush2.msra.mxu0 0.0
    %1849 = vmatprep.subr.mxu0 0.0
    %1850 = vmatpush2.msra.mxu0 0.0
    %1851 = vmatprep.subr.mxu0 0.0
    %1852 = vmatpush2.msra.mxu0 0.0
    %1853 = vmatprep.subr.mxu0 0.0
    %1854 = vmatpush2.msra.mxu0 0.0
    %1855 = vmatprep.subr.mxu0 0.0
    %1856 = vmatpush2.msra.mxu0 0.0
    %1857 = vmatprep.subr.mxu0 0.0
    %1858 = vmatpush2.msra.mxu0 0.0
    %1859 = vmatprep.subr.mxu0 0.0
    %1860 = vmatpush2.msra.mxu0 0.0
    %1861 = vmatprep.subr.mxu0 0.0
    %1862 = vmatpush2.msra.mxu0 0.0
    %1863 = vmatprep.subr.mxu0 %v512
    %1864 = vmatpush2.msra.mxu0 %v511
    %1865 = vmatprep.subr.mxu0 %v509
    %1866 = vmatpush2.msra.mxu0 %v508
    %1867 = vmatprep.subr.mxu0 %v506
    %1868 = vmatpush2.msra.mxu0 %v505
    %1869 = vmatprep.subr.mxu0 %v503
    %1870 = vmatpush2.msra.mxu0 %v502
    %1871 = vmatprep.subr.mxu0 %v500
    %1872 = vmatpush2.msra.mxu0 %v499
    %1873 = vmatprep.subr.mxu0 %v497
    %1874 = vmatpush2.msra.mxu0 %v496
    %1875 = vmatprep.subr.mxu0 %v494
    %1876 = vmatpush2.msra.mxu0 %v493
    %1877 = vmatprep.subr.mxu0 %v491
    %1878 = vmatpush2.msra.mxu0 %v490
    %1879 = vmatprep.mubr.f32.mxu0 %v1813
    %1880 = vmatmul.mubr.f32.gmra.mxu0 %v1812
    %v1881 = vpop.f32.mrf.mxu0
    %v1882 = vadd.f32 0.0, %v1881
    %v1883 = vpop.f32.mrf.mxu0
    %v1884 = vadd.f32 0.0, %v1883
    %1885 = vdwg.mxu0
    %1886 = vmatprep.subr.mxu0 0.0
    %1887 = vmatpush1.msra.mxu0 %v489
    %1888 = vmatprep.subr.mxu0 0.0
    %1889 = vmatpush1.msra.mxu0 %v486
    %1890 = vmatprep.subr.mxu0 0.0
    %1891 = vmatpush1.msra.mxu0 %v483
    %1892 = vmatprep.subr.mxu0 0.0
    %1893 = vmatpush1.msra.mxu0 %v480
    %1894 = vmatprep.subr.mxu0 0.0
    %1895 = vmatpush1.msra.mxu0 %v477
    %1896 = vmatprep.subr.mxu0 0.0
    %1897 = vmatpush1.msra.mxu0 %v474
    %1898 = vmatprep.subr.mxu0 0.0
    %1899 = vmatpush1.msra.mxu0 %v471
    %1900 = vmatprep.subr.mxu0 0.0
    %1901 = vmatpush1.msra.mxu0 %v468
    %1902 = vmatprep.subr.mxu0 0.0
    %1903 = vmatpush1.msra.mxu0 %v465
    %1904 = vmatprep.subr.mxu0 0.0
    %1905 = vmatpush1.msra.mxu0 %v462
    %1906 = vmatprep.subr.mxu0 0.0
    %1907 = vmatpush1.msra.mxu0 %v459
    %1908 = vmatprep.subr.mxu0 0.0
    %1909 = vmatpush1.msra.mxu0 %v456
    %1910 = vmatprep.subr.mxu0 0.0
    %1911 = vmatpush1.msra.mxu0 %v453
    %1912 = vmatprep.subr.mxu0 0.0
    %1913 = vmatpush1.msra.mxu0 %v450
    %1914 = vmatprep.subr.mxu0 0.0
    %1915 = vmatpush1.msra.mxu0 %v447
    %1916 = vmatprep.subr.mxu0 0.0
    %1917 = vmatpush1.msra.mxu0 %v444
    %1918 = vmatprep.subr.mxu0 0.0
    %1919 = vmatpush2.msra.mxu0 0.0
    %1920 = vmatprep.subr.mxu0 0.0
    %1921 = vmatpush2.msra.mxu0 0.0
    %1922 = vmatprep.subr.mxu0 0.0
    %1923 = vmatpush2.msra.mxu0 0.0
    %1924 = vmatprep.subr.mxu0 0.0
    %1925 = vmatpush2.msra.mxu0 0.0
    %1926 = vmatprep.subr.mxu0 0.0
    %1927 = vmatpush2.msra.mxu0 0.0
    %1928 = vmatprep.subr.mxu0 0.0
    %1929 = vmatpush2.msra.mxu0 0.0
    %1930 = vmatprep.subr.mxu0 0.0
    %1931 = vmatpush2.msra.mxu0 0.0
    %1932 = vmatprep.subr.mxu0 0.0
    %1933 = vmatpush2.msra.mxu0 0.0
    %1934 = vmatprep.subr.mxu0 0.0
    %1935 = vmatpush2.msra.mxu0 %v513
    %1936 = vmatprep.subr.mxu0 0.0
    %1937 = vmatpush2.msra.mxu0 %v510
    %1938 = vmatprep.subr.mxu0 0.0
    %1939 = vmatpush2.msra.mxu0 %v507
    %1940 = vmatprep.subr.mxu0 0.0
    %1941 = vmatpush2.msra.mxu0 %v504
    %1942 = vmatprep.subr.mxu0 0.0
    %1943 = vmatpush2.msra.mxu0 %v501
    %1944 = vmatprep.subr.mxu0 0.0
    %1945 = vmatpush2.msra.mxu0 %v498
    %1946 = vmatprep.subr.mxu0 0.0
    %1947 = vmatpush2.msra.mxu0 %v495
    %1948 = vmatprep.subr.mxu0 0.0
    %1949 = vmatpush2.msra.mxu0 %v492
    %1950 = vmatprep.mubr.f32.mxu0 %v1813
    %1951 = vmatmul.mubr.f32.gmra.mxu0 %v1812
    %v1952 = vpop.f32.mrf.mxu0
    %v1953 = vadd.f32 0.0, %v1952
    %v1954 = vpop.f32.mrf.mxu0
    %1955 = vdwg.mxu0
    %v1956 = vxor.u32 %v1882, 2147483648
    %v1957 = vmul.f32 %v1956, 1.442695
    %v1958 = vpow.pop %v1957
    %v1959 = vadd.f32 %v1958, 1.0
    %v1960 = vrcp.pop %v1959
    %v1961 = vmul.f32 1.0, %v1960
    %v1962 = vxor.u32 %v1884, 2147483648
    %v1963 = vmul.f32 %v1962, 1.442695
    %v1964 = vpow.pop %v1963
    %v1965 = vadd.f32 %v1964, 1.0
    %v1966 = vrcp.pop %v1965
    %v1967 = vmul.f32 1.0, %v1966
    %v1968 = vtanh.pop %v1884
    %v1969 = vtanh.pop %v1953
    %v1970 = vxor.u32 %v1953, 2147483648
    %v1971 = vmul.f32 %v1970, 1.442695
    %v1972 = vpow.pop %v1971
    %v1973 = vadd.f32 %v1972, 1.0
    %v1974 = vrcp.pop %v1973
    %v1975 = vmul.f32 1.0, %v1974
    %v1976 = vmul.f32 %v1961, %v1574
    %v1977 = vmul.f32 %v1967, %v1575
    %1980 = vrot.lane.b32.xlu0 %v1968, 64
    %v1981 = vpop.permute.xlu0 %1980
    %1982 = vrot.lane.b32.xlu0 %v1969, 64
    %v1983 = vpop.permute.xlu0 %1982
    %v1984 = vsel %vm413, %v1981, %v1983
    %v1986 = vmul.f32 %v1961, %v1984
    %1988 = vrot.lane.b32.xlu0 %v1986, 96
    %v1989 = vpop.permute.xlu0 %1988
    %v1991 = vadd.f32 %v1976, %v1989
    %v1992 = vadd.f32 %v1977, %v1989
    %v1993 = vtanh.pop %v1991
    %v1994 = vtanh.pop %v1992
    %1997 = vrot.lane.b32.xlu0 %v1993, 64
    %v1998 = vpop.permute.xlu0 %1997
    %1999 = vrot.lane.b32.xlu0 %v1994, 64
    %v2000 = vpop.permute.xlu0 %1999
    %v2001 = vsel %vm413, %v1998, %v2000
    %v2003 = vmul.f32 %v1975, %v2001
    %v2004 = vsel %vm1581, %v2003, %v1573
    %v2005 = vsel %vm1581, %v1991, %v1574
    %v2006 = vsel %vm1581, %v1992, %v1575
    %vm2007 = vcmp.gt.s32.totalorder %v194, 4
    %v2008 = vsel %vm2007, 1, 0
    %2009 = vset.pattern.permute.xlu0 0
    %2010 = vperm.xlu0 %2009, %v2008
    %v2011 = vpop.permute.xlu0 %2010
    %vm2012 = vcmp.eq.s32.totalorder %v2011, 1
    %v2014 = vsel %vm237, %v1796, 0
    %2016 = vmatprep.subr.mxu0 0.0
    %2017 = vmatpush1.msra.mxu0 0.0
    %2018 = vmatprep.subr.mxu0 0.0
    %2019 = vmatpush1.msra.mxu0 0.0
    %2020 = vmatprep.subr.mxu0 0.0
    %2021 = vmatpush1.msra.mxu0 0.0
    %2022 = vmatprep.subr.mxu0 0.0
    %2023 = vmatpush1.msra.mxu0 0.0
    %2024 = vmatprep.subr.mxu0 %v235
    %2025 = vmatpush1.msra.mxu0 %v234
    %2026 = vmatprep.subr.mxu0 %v232
    %2027 = vmatpush1.msra.mxu0 %v231
    %2028 = vmatprep.subr.mxu0 %v229
    %2029 = vmatpush1.msra.mxu0 %v228
    %2030 = vmatprep.subr.mxu0 %v226
    %2031 = vmatpush1.msra.mxu0 %v225
    %2032 = vmatprep.subr.mxu0 %v223
    %2033 = vmatpush1.msra.mxu0 %v222
    %2034 = vmatprep.subr.mxu0 %v220
    %2035 = vmatpush1.msra.mxu0 %v219
    %2036 = vmatprep.subr.mxu0 %v217
    %2037 = vmatpush1.msra.mxu0 %v216
    %2038 = vmatprep.subr.mxu0 %v214
    %2039 = vmatpush1.msra.mxu0 %v213
    %2040 = vmatprep.subr.mxu0 %v211
    %2041 = vmatpush1.msra.mxu0 %v210
    %2042 = vmatprep.subr.mxu0 %v208
    %2043 = vmatpush1.msra.mxu0 %v207
    %2044 = vmatprep.subr.mxu0 %v205
    %2045 = vmatpush1.msra.mxu0 %v204
    %2046 = vmatprep.subr.mxu0 %v202
    %2047 = vmatpush1.msra.mxu0 %v201
    %2048 = vmatprep.subr.mxu0 0.0
    %2049 = vmatpush2.msra.mxu0 0.0
    %2050 = vmatprep.subr.mxu0 0.0
    %2051 = vmatpush2.msra.mxu0 0.0
    %2052 = vmatprep.subr.mxu0 0.0
    %2053 = vmatpush2.msra.mxu0 0.0
    %2054 = vmatprep.subr.mxu0 0.0
    %2055 = vmatpush2.msra.mxu0 0.0
    %2056 = vmatprep.subr.mxu0 0.0
    %2057 = vmatpush2.msra.mxu0 0.0
    %2058 = vmatprep.subr.mxu0 0.0
    %2059 = vmatpush2.msra.mxu0 0.0
    %2060 = vmatprep.subr.mxu0 0.0
    %2061 = vmatpush2.msra.mxu0 0.0
    %2062 = vmatprep.subr.mxu0 0.0
    %2063 = vmatpush2.msra.mxu0 0.0
    %2064 = vmatprep.subr.mxu0 0.0
    %2065 = vmatpush2.msra.mxu0 0.0
    %2066 = vmatprep.subr.mxu0 0.0
    %2067 = vmatpush2.msra.mxu0 0.0
    %2068 = vmatprep.subr.mxu0 0.0
    %2069 = vmatpush2.msra.mxu0 0.0
    %2070 = vmatprep.subr.mxu0 0.0
    %2071 = vmatpush2.msra.mxu0 0.0
    %2072 = vmatprep.subr.mxu0 0.0
    %2073 = vmatpush2.msra.mxu0 0.0
    %2074 = vmatprep.subr.mxu0 0.0
    %2075 = vmatpush2.msra.mxu0 0.0
    %2076 = vmatprep.subr.mxu0 0.0
    %2077 = vmatpush2.msra.mxu0 0.0
    %2078 = vmatprep.subr.mxu0 0.0
    %2079 = vmatpush2.msra.mxu0 0.0
    %2080 = vmatprep.mubr.f32.mxu0 0.0
    %2081 = vmatmul.mubr.f32.gmra.mxu0 %v2014
    %v2082 = vpop.f32.mrf.mxu0
    %v2083 = vadd.f32 0.0, %v2082
    %v2084 = vpop.f32.mrf.mxu0
    %v2085 = vadd.f32 0.0, %v2084
    %2086 = vdwg.mxu0
    %2087 = vmatprep.subr.mxu0 0.0
    %2088 = vmatpush1.msra.mxu0 0.0
    %2089 = vmatprep.subr.mxu0 0.0
    %2090 = vmatpush1.msra.mxu0 0.0
    %2091 = vmatprep.subr.mxu0 0.0
    %2092 = vmatpush1.msra.mxu0 0.0
    %2093 = vmatprep.subr.mxu0 0.0
    %2094 = vmatpush1.msra.mxu0 0.0
    %2095 = vmatprep.subr.mxu0 0.0
    %2096 = vmatpush1.msra.mxu0 %v236
    %2097 = vmatprep.subr.mxu0 0.0
    %2098 = vmatpush1.msra.mxu0 %v233
    %2099 = vmatprep.subr.mxu0 0.0
    %2100 = vmatpush1.msra.mxu0 %v230
    %2101 = vmatprep.subr.mxu0 0.0
    %2102 = vmatpush1.msra.mxu0 %v227
    %2103 = vmatprep.subr.mxu0 0.0
    %2104 = vmatpush1.msra.mxu0 %v224
    %2105 = vmatprep.subr.mxu0 0.0
    %2106 = vmatpush1.msra.mxu0 %v221
    %2107 = vmatprep.subr.mxu0 0.0
    %2108 = vmatpush1.msra.mxu0 %v218
    %2109 = vmatprep.subr.mxu0 0.0
    %2110 = vmatpush1.msra.mxu0 %v215
    %2111 = vmatprep.subr.mxu0 0.0
    %2112 = vmatpush1.msra.mxu0 %v212
    %2113 = vmatprep.subr.mxu0 0.0
    %2114 = vmatpush1.msra.mxu0 %v209
    %2115 = vmatprep.subr.mxu0 0.0
    %2116 = vmatpush1.msra.mxu0 %v206
    %2117 = vmatprep.subr.mxu0 0.0
    %2118 = vmatpush1.msra.mxu0 %v203
    %2119 = vmatprep.subr.mxu0 0.0
    %2120 = vmatpush2.msra.mxu0 0.0
    %2121 = vmatprep.subr.mxu0 0.0
    %2122 = vmatpush2.msra.mxu0 0.0
    %2123 = vmatprep.subr.mxu0 0.0
    %2124 = vmatpush2.msra.mxu0 0.0
    %2125 = vmatprep.subr.mxu0 0.0
    %2126 = vmatpush2.msra.mxu0 0.0
    %2127 = vmatprep.subr.mxu0 0.0
    %2128 = vmatpush2.msra.mxu0 0.0
    %2129 = vmatprep.subr.mxu0 0.0
    %2130 = vmatpush2.msra.mxu0 0.0
    %2131 = vmatprep.subr.mxu0 0.0
    %2132 = vmatpush2.msra.mxu0 0.0
    %2133 = vmatprep.subr.mxu0 0.0
    %2134 = vmatpush2.msra.mxu0 0.0
    %2135 = vmatprep.subr.mxu0 0.0
    %2136 = vmatpush2.msra.mxu0 0.0
    %2137 = vmatprep.subr.mxu0 0.0
    %2138 = vmatpush2.msra.mxu0 0.0
    %2139 = vmatprep.subr.mxu0 0.0
    %2140 = vmatpush2.msra.mxu0 0.0
    %2141 = vmatprep.subr.mxu0 0.0
    %2142 = vmatpush2.msra.mxu0 0.0
    %2143 = vmatprep.subr.mxu0 0.0
    %2144 = vmatpush2.msra.mxu0 0.0
    %2145 = vmatprep.subr.mxu0 0.0
    %2146 = vmatpush2.msra.mxu0 0.0
    %2147 = vmatprep.subr.mxu0 0.0
    %2148 = vmatpush2.msra.mxu0 0.0
    %2149 = vmatprep.subr.mxu0 0.0
    %2150 = vmatpush2.msra.mxu0 0.0
    %2151 = vmatprep.mubr.f32.mxu0 0.0
    %2152 = vmatmul.mubr.f32.gmra.mxu0 %v2014
    %v2153 = vpop.f32.mrf.mxu0
    %v2154 = vadd.f32 0.0, %v2153
    %v2155 = vpop.f32.mrf.mxu0
    %2156 = vdwg.mxu0
    %v2157 = vadd.f32 %v115, %v2083
    %v2158 = vadd.f32 %v117, %v2085
    %v2159 = vadd.f32 %v191, %v2154
    %v2160 = vxor.u32 %v2157, 2147483648
    %v2161 = vmul.f32 %v2160, 1.442695
    %v2162 = vpow.pop %v2161
    %v2163 = vadd.f32 %v2162, 1.0
    %v2164 = vrcp.pop %v2163
    %v2165 = vmul.f32 1.0, %v2164
    %v2166 = vxor.u32 %v2158, 2147483648
    %v2167 = vmul.f32 %v2166, 1.442695
    %v2168 = vpow.pop %v2167
    %v2169 = vadd.f32 %v2168, 1.0
    %v2170 = vrcp.pop %v2169
    %v2171 = vmul.f32 1.0, %v2170
    %v2172 = vtanh.pop %v2158
    %v2173 = vtanh.pop %v2159
    %v2174 = vxor.u32 %v2159, 2147483648
    %v2175 = vmul.f32 %v2174, 1.442695
    %v2176 = vpow.pop %v2175
    %v2177 = vadd.f32 %v2176, 1.0
    %v2178 = vrcp.pop %v2177
    %v2179 = vmul.f32 1.0, %v2178
    %2181 = vrot.lane.b32.xlu0 %v1807, 96
    %v2182 = vpop.permute.xlu0 %2181
    %v2184 = vmul.f32 %v2165, %v2182
    %v2185 = vmul.f32 %v2171, %v2182
    %2188 = vrot.lane.b32.xlu0 %v2172, 64
    %v2189 = vpop.permute.xlu0 %2188
    %2190 = vrot.lane.b32.xlu0 %v2173, 64
    %v2191 = vpop.permute.xlu0 %2190
    %v2192 = vsel %vm413, %v2189, %v2191
    %v2194 = vmul.f32 %v2165, %v2192
    %2196 = vrot.lane.b32.xlu0 %v2194, 96
    %v2197 = vpop.permute.xlu0 %2196
    %v2199 = vadd.f32 %v2184, %v2197
    %v2200 = vadd.f32 %v2185, %v2197
    %v2201 = vtanh.pop %v2199
    %v2202 = vtanh.pop %v2200
    %2205 = vrot.lane.b32.xlu0 %v2201, 64
    %v2206 = vpop.permute.xlu0 %2205
    %2207 = vrot.lane.b32.xlu0 %v2202, 64
    %v2208 = vpop.permute.xlu0 %2207
    %v2209 = vsel %vm413, %v2206, %v2208
    %v2211 = vmul.f32 %v2179, %v2209
    %2212 = vrot.lane.b32.xlu0 %v1796, 32
    %v2213 = vpop.permute.xlu0 %2212
    %v2215 = vsel %vm2012, %v2211, %v2213
    %v2216 = vsel %vm2012, %v2199, %v2182
    %v2217 = vsel %vm2012, %v2200, %v2182
    %2219 = vrot.lane.b32.xlu0 %v2215, 96
    %v2220 = vpop.permute.xlu0 %2219
    %2223 = vrot.lane.b32.xlu0 %v2004, 64
    %v2224 = vpop.permute.xlu0 %2223
    %v2226 = vsel %vm237, %v2220, %v2224
    %v2227 = vsel %vm413, %v2224, 0
    %2229 = vmatprep.subr.mxu0 %v488
    %2230 = vmatpush1.msra.mxu0 %v487
    %2231 = vmatprep.subr.mxu0 %v485
    %2232 = vmatpush1.msra.mxu0 %v484
    %2233 = vmatprep.subr.mxu0 %v482
    %2234 = vmatpush1.msra.mxu0 %v481
    %2235 = vmatprep.subr.mxu0 %v479
    %2236 = vmatpush1.msra.mxu0 %v478
    %2237 = vmatprep.subr.mxu0 %v476
    %2238 = vmatpush1.msra.mxu0 %v475
    %2239 = vmatprep.subr.mxu0 %v473
    %2240 = vmatpush1.msra.mxu0 %v472
    %2241 = vmatprep.subr.mxu0 %v470
    %2242 = vmatpush1.msra.mxu0 %v469
    %2243 = vmatprep.subr.mxu0 %v467
    %2244 = vmatpush1.msra.mxu0 %v466
    %2245 = vmatprep.subr.mxu0 %v464
    %2246 = vmatpush1.msra.mxu0 %v463
    %2247 = vmatprep.subr.mxu0 %v461
    %2248 = vmatpush1.msra.mxu0 %v460
    %2249 = vmatprep.subr.mxu0 %v458
    %2250 = vmatpush1.msra.mxu0 %v457
    %2251 = vmatprep.subr.mxu0 %v455
    %2252 = vmatpush1.msra.mxu0 %v454
    %2253 = vmatprep.subr.mxu0 %v452
    %2254 = vmatpush1.msra.mxu0 %v451
    %2255 = vmatprep.subr.mxu0 %v449
    %2256 = vmatpush1.msra.mxu0 %v448
    %2257 = vmatprep.subr.mxu0 %v446
    %2258 = vmatpush1.msra.mxu0 %v445
    %2259 = vmatprep.subr.mxu0 %v443
    %2260 = vmatpush1.msra.mxu0 %v442
    %2261 = vmatprep.subr.mxu0 0.0
    %2262 = vmatpush2.msra.mxu0 0.0
    %2263 = vmatprep.subr.mxu0 0.0
    %2264 = vmatpush2.msra.mxu0 0.0
    %2265 = vmatprep.subr.mxu0 0.0
    %2266 = vmatpush2.msra.mxu0 0.0
    %2267 = vmatprep.subr.mxu0 0.0
    %2268 = vmatpush2.msra.mxu0 0.0
    %2269 = vmatprep.subr.mxu0 0.0
    %2270 = vmatpush2.msra.mxu0 0.0
    %2271 = vmatprep.subr.mxu0 0.0
    %2272 = vmatpush2.msra.mxu0 0.0
    %2273 = vmatprep.subr.mxu0 0.0
    %2274 = vmatpush2.msra.mxu0 0.0
    %2275 = vmatprep.subr.mxu0 0.0
    %2276 = vmatpush2.msra.mxu0 0.0
    %2277 = vmatprep.subr.mxu0 %v512
    %2278 = vmatpush2.msra.mxu0 %v511
    %2279 = vmatprep.subr.mxu0 %v509
    %2280 = vmatpush2.msra.mxu0 %v508
    %2281 = vmatprep.subr.mxu0 %v506
    %2282 = vmatpush2.msra.mxu0 %v505
    %2283 = vmatprep.subr.mxu0 %v503
    %2284 = vmatpush2.msra.mxu0 %v502
    %2285 = vmatprep.subr.mxu0 %v500
    %2286 = vmatpush2.msra.mxu0 %v499
    %2287 = vmatprep.subr.mxu0 %v497
    %2288 = vmatpush2.msra.mxu0 %v496
    %2289 = vmatprep.subr.mxu0 %v494
    %2290 = vmatpush2.msra.mxu0 %v493
    %2291 = vmatprep.subr.mxu0 %v491
    %2292 = vmatpush2.msra.mxu0 %v490
    %2293 = vmatprep.mubr.f32.mxu0 %v2227
    %2294 = vmatmul.mubr.f32.gmra.mxu0 %v2226
    %v2295 = vpop.f32.mrf.mxu0
    %v2296 = vadd.f32 0.0, %v2295
    %v2297 = vpop.f32.mrf.mxu0
    %v2298 = vadd.f32 0.0, %v2297
    %2299 = vdwg.mxu0
    %2300 = vmatprep.subr.mxu0 0.0
    %2301 = vmatpush1.msra.mxu0 %v489
    %2302 = vmatprep.subr.mxu0 0.0
    %2303 = vmatpush1.msra.mxu0 %v486
    %2304 = vmatprep.subr.mxu0 0.0
    %2305 = vmatpush1.msra.mxu0 %v483
    %2306 = vmatprep.subr.mxu0 0.0
    %2307 = vmatpush1.msra.mxu0 %v480
    %2308 = vmatprep.subr.mxu0 0.0
    %2309 = vmatpush1.msra.mxu0 %v477
    %2310 = vmatprep.subr.mxu0 0.0
    %2311 = vmatpush1.msra.mxu0 %v474
    %2312 = vmatprep.subr.mxu0 0.0
    %2313 = vmatpush1.msra.mxu0 %v471
    %2314 = vmatprep.subr.mxu0 0.0
    %2315 = vmatpush1.msra.mxu0 %v468
    %2316 = vmatprep.subr.mxu0 0.0
    %2317 = vmatpush1.msra.mxu0 %v465
    %2318 = vmatprep.subr.mxu0 0.0
    %2319 = vmatpush1.msra.mxu0 %v462
    %2320 = vmatprep.subr.mxu0 0.0
    %2321 = vmatpush1.msra.mxu0 %v459
    %2322 = vmatprep.subr.mxu0 0.0
    %2323 = vmatpush1.msra.mxu0 %v456
    %2324 = vmatprep.subr.mxu0 0.0
    %2325 = vmatpush1.msra.mxu0 %v453
    %2326 = vmatprep.subr.mxu0 0.0
    %2327 = vmatpush1.msra.mxu0 %v450
    %2328 = vmatprep.subr.mxu0 0.0
    %2329 = vmatpush1.msra.mxu0 %v447
    %2330 = vmatprep.subr.mxu0 0.0
    %2331 = vmatpush1.msra.mxu0 %v444
    %2332 = vmatprep.subr.mxu0 0.0
    %2333 = vmatpush2.msra.mxu0 0.0
    %2334 = vmatprep.subr.mxu0 0.0
    %2335 = vmatpush2.msra.mxu0 0.0
    %2336 = vmatprep.subr.mxu0 0.0
    %2337 = vmatpush2.msra.mxu0 0.0
    %2338 = vmatprep.subr.mxu0 0.0
    %2339 = vmatpush2.msra.mxu0 0.0
    %2340 = vmatprep.subr.mxu0 0.0
    %2341 = vmatpush2.msra.mxu0 0.0
    %2342 = vmatprep.subr.mxu0 0.0
    %2343 = vmatpush2.msra.mxu0 0.0
    %2344 = vmatprep.subr.mxu0 0.0
    %2345 = vmatpush2.msra.mxu0 0.0
    %2346 = vmatprep.subr.mxu0 0.0
    %2347 = vmatpush2.msra.mxu0 0.0
    %2348 = vmatprep.subr.mxu0 0.0
    %2349 = vmatpush2.msra.mxu0 %v513
    %2350 = vmatprep.subr.mxu0 0.0
    %2351 = vmatpush2.msra.mxu0 %v510
    %2352 = vmatprep.subr.mxu0 0.0
    %2353 = vmatpush2.msra.mxu0 %v507
    %2354 = vmatprep.subr.mxu0 0.0
    %2355 = vmatpush2.msra.mxu0 %v504
    %2356 = vmatprep.subr.mxu0 0.0
    %2357 = vmatpush2.msra.mxu0 %v501
    %2358 = vmatprep.subr.mxu0 0.0
    %2359 = vmatpush2.msra.mxu0 %v498
    %2360 = vmatprep.subr.mxu0 0.0
    %2361 = vmatpush2.msra.mxu0 %v495
    %2362 = vmatprep.subr.mxu0 0.0
    %2363 = vmatpush2.msra.mxu0 %v492
    %2364 = vmatprep.mubr.f32.mxu0 %v2227
    %2365 = vmatmul.mubr.f32.gmra.mxu0 %v2226
    %v2366 = vpop.f32.mrf.mxu0
    %v2367 = vadd.f32 0.0, %v2366
    %v2368 = vpop.f32.mrf.mxu0
    %2369 = vdwg.mxu0
    %v2370 = vxor.u32 %v2296, 2147483648
    %v2371 = vmul.f32 %v2370, 1.442695
    %v2372 = vpow.pop %v2371
    %v2373 = vadd.f32 %v2372, 1.0
    %v2374 = vrcp.pop %v2373
    %v2375 = vmul.f32 1.0, %v2374
    %v2376 = vxor.u32 %v2298, 2147483648
    %v2377 = vmul.f32 %v2376, 1.442695
    %v2378 = vpow.pop %v2377
    %v2379 = vadd.f32 %v2378, 1.0
    %v2380 = vrcp.pop %v2379
    %v2381 = vmul.f32 1.0, %v2380
    %v2382 = vtanh.pop %v2298
    %v2383 = vtanh.pop %v2367
    %v2384 = vxor.u32 %v2367, 2147483648
    %v2385 = vmul.f32 %v2384, 1.442695
    %v2386 = vpow.pop %v2385
    %v2387 = vadd.f32 %v2386, 1.0
    %v2388 = vrcp.pop %v2387
    %v2389 = vmul.f32 1.0, %v2388
    %v2390 = vmul.f32 %v2375, %v2005
    %v2391 = vmul.f32 %v2381, %v2006
    %2394 = vrot.lane.b32.xlu0 %v2382, 64
    %v2395 = vpop.permute.xlu0 %2394
    %2396 = vrot.lane.b32.xlu0 %v2383, 64
    %v2397 = vpop.permute.xlu0 %2396
    %v2398 = vsel %vm413, %v2395, %v2397
    %v2400 = vmul.f32 %v2375, %v2398
    %2402 = vrot.lane.b32.xlu0 %v2400, 96
    %v2403 = vpop.permute.xlu0 %2402
    %v2405 = vadd.f32 %v2390, %v2403
    %v2406 = vadd.f32 %v2391, %v2403
    %v2407 = vtanh.pop %v2405
    %v2408 = vtanh.pop %v2406
    %2411 = vrot.lane.b32.xlu0 %v2407, 64
    %v2412 = vpop.permute.xlu0 %2411
    %2413 = vrot.lane.b32.xlu0 %v2408, 64
    %v2414 = vpop.permute.xlu0 %2413
    %v2415 = vsel %vm413, %v2412, %v2414
    %v2417 = vmul.f32 %v2389, %v2415
    %v2418 = vsel %vm2012, %v2417, %v2004
    %v2419 = vsel %vm2012, %v2405, %v2005
    %v2420 = vsel %vm2012, %v2406, %v2006
    %vm2421 = vcmp.gt.s32.totalorder %v194, 5
    %v2422 = vsel %vm2421, 1, 0
    %2423 = vset.pattern.permute.xlu0 0
    %2424 = vperm.xlu0 %2423, %v2422
    %v2425 = vpop.permute.xlu0 %2424
    %vm2426 = vcmp.eq.s32.totalorder %v2425, 1
    %v2427 = vsel %vm237, %v2220, 0
    %2429 = vmatprep.subr.mxu0 0.0
    %2430 = vmatpush1.msra.mxu0 0.0
    %2431 = vmatprep.subr.mxu0 0.0
    %2432 = vmatpush1.msra.mxu0 0.0
    %2433 = vmatprep.subr.mxu0 0.0
    %2434 = vmatpush1.msra.mxu0 0.0
    %2435 = vmatprep.subr.mxu0 0.0
    %2436 = vmatpush1.msra.mxu0 0.0
    %2437 = vmatprep.subr.mxu0 %v235
    %2438 = vmatpush1.msra.mxu0 %v234
    %2439 = vmatprep.subr.mxu0 %v232
    %2440 = vmatpush1.msra.mxu0 %v231
    %2441 = vmatprep.subr.mxu0 %v229
    %2442 = vmatpush1.msra.mxu0 %v228
    %2443 = vmatprep.subr.mxu0 %v226
    %2444 = vmatpush1.msra.mxu0 %v225
    %2445 = vmatprep.subr.mxu0 %v223
    %2446 = vmatpush1.msra.mxu0 %v222
    %2447 = vmatprep.subr.mxu0 %v220
    %2448 = vmatpush1.msra.mxu0 %v219
    %2449 = vmatprep.subr.mxu0 %v217
    %2450 = vmatpush1.msra.mxu0 %v216
    %2451 = vmatprep.subr.mxu0 %v214
    %2452 = vmatpush1.msra.mxu0 %v213
    %2453 = vmatprep.subr.mxu0 %v211
    %2454 = vmatpush1.msra.mxu0 %v210
    %2455 = vmatprep.subr.mxu0 %v208
    %2456 = vmatpush1.msra.mxu0 %v207
    %2457 = vmatprep.subr.mxu0 %v205
    %2458 = vmatpush1.msra.mxu0 %v204
    %2459 = vmatprep.subr.mxu0 %v202
    %2460 = vmatpush1.msra.mxu0 %v201
    %2461 = vmatprep.subr.mxu0 0.0
    %2462 = vmatpush2.msra.mxu0 0.0
    %2463 = vmatprep.subr.mxu0 0.0
    %2464 = vmatpush2.msra.mxu0 0.0
    %2465 = vmatprep.subr.mxu0 0.0
    %2466 = vmatpush2.msra.mxu0 0.0
    %2467 = vmatprep.subr.mxu0 0.0
    %2468 = vmatpush2.msra.mxu0 0.0
    %2469 = vmatprep.subr.mxu0 0.0
    %2470 = vmatpush2.msra.mxu0 0.0
    %2471 = vmatprep.subr.mxu0 0.0
    %2472 = vmatpush2.msra.mxu0 0.0
    %2473 = vmatprep.subr.mxu0 0.0
    %2474 = vmatpush2.msra.mxu0 0.0
    %2475 = vmatprep.subr.mxu0 0.0
    %2476 = vmatpush2.msra.mxu0 0.0
    %2477 = vmatprep.subr.mxu0 0.0
    %2478 = vmatpush2.msra.mxu0 0.0
    %2479 = vmatprep.subr.mxu0 0.0
    %2480 = vmatpush2.msra.mxu0 0.0
    %2481 = vmatprep.subr.mxu0 0.0
    %2482 = vmatpush2.msra.mxu0 0.0
    %2483 = vmatprep.subr.mxu0 0.0
    %2484 = vmatpush2.msra.mxu0 0.0
    %2485 = vmatprep.subr.mxu0 0.0
    %2486 = vmatpush2.msra.mxu0 0.0
    %2487 = vmatprep.subr.mxu0 0.0
    %2488 = vmatpush2.msra.mxu0 0.0
    %2489 = vmatprep.subr.mxu0 0.0
    %2490 = vmatpush2.msra.mxu0 0.0
    %2491 = vmatprep.subr.mxu0 0.0
    %2492 = vmatpush2.msra.mxu0 0.0
    %2493 = vmatprep.mubr.f32.mxu0 0.0
    %2494 = vmatmul.mubr.f32.gmra.mxu0 %v2427
    %v2495 = vpop.f32.mrf.mxu0
    %v2496 = vadd.f32 0.0, %v2495
    %v2497 = vpop.f32.mrf.mxu0
    %v2498 = vadd.f32 0.0, %v2497
    %2499 = vdwg.mxu0
    %2500 = vmatprep.subr.mxu0 0.0
    %2501 = vmatpush1.msra.mxu0 0.0
    %2502 = vmatprep.subr.mxu0 0.0
    %2503 = vmatpush1.msra.mxu0 0.0
    %2504 = vmatprep.subr.mxu0 0.0
    %2505 = vmatpush1.msra.mxu0 0.0
    %2506 = vmatprep.subr.mxu0 0.0
    %2507 = vmatpush1.msra.mxu0 0.0
    %2508 = vmatprep.subr.mxu0 0.0
    %2509 = vmatpush1.msra.mxu0 %v236
    %2510 = vmatprep.subr.mxu0 0.0
    %2511 = vmatpush1.msra.mxu0 %v233
    %2512 = vmatprep.subr.mxu0 0.0
    %2513 = vmatpush1.msra.mxu0 %v230
    %2514 = vmatprep.subr.mxu0 0.0
    %2515 = vmatpush1.msra.mxu0 %v227
    %2516 = vmatprep.subr.mxu0 0.0
    %2517 = vmatpush1.msra.mxu0 %v224
    %2518 = vmatprep.subr.mxu0 0.0
    %2519 = vmatpush1.msra.mxu0 %v221
    %2520 = vmatprep.subr.mxu0 0.0
    %2521 = vmatpush1.msra.mxu0 %v218
    %2522 = vmatprep.subr.mxu0 0.0
    %2523 = vmatpush1.msra.mxu0 %v215
    %2524 = vmatprep.subr.mxu0 0.0
    %2525 = vmatpush1.msra.mxu0 %v212
    %2526 = vmatprep.subr.mxu0 0.0
    %2527 = vmatpush1.msra.mxu0 %v209
    %2528 = vmatprep.subr.mxu0 0.0
    %2529 = vmatpush1.msra.mxu0 %v206
    %2530 = vmatprep.subr.mxu0 0.0
    %2531 = vmatpush1.msra.mxu0 %v203
    %2532 = vmatprep.subr.mxu0 0.0
    %2533 = vmatpush2.msra.mxu0 0.0
    %2534 = vmatprep.subr.mxu0 0.0
    %2535 = vmatpush2.msra.mxu0 0.0
    %2536 = vmatprep.subr.mxu0 0.0
    %2537 = vmatpush2.msra.mxu0 0.0
    %2538 = vmatprep.subr.mxu0 0.0
    %2539 = vmatpush2.msra.mxu0 0.0
    %2540 = vmatprep.subr.mxu0 0.0
    %2541 = vmatpush2.msra.mxu0 0.0
    %2542 = vmatprep.subr.mxu0 0.0
    %2543 = vmatpush2.msra.mxu0 0.0
    %2544 = vmatprep.subr.mxu0 0.0
    %2545 = vmatpush2.msra.mxu0 0.0
    %2546 = vmatprep.subr.mxu0 0.0
    %2547 = vmatpush2.msra.mxu0 0.0
    %2548 = vmatprep.subr.mxu0 0.0
    %2549 = vmatpush2.msra.mxu0 0.0
    %2550 = vmatprep.subr.mxu0 0.0
    %2551 = vmatpush2.msra.mxu0 0.0
    %2552 = vmatprep.subr.mxu0 0.0
    %2553 = vmatpush2.msra.mxu0 0.0
    %2554 = vmatprep.subr.mxu0 0.0
    %2555 = vmatpush2.msra.mxu0 0.0
    %2556 = vmatprep.subr.mxu0 0.0
    %2557 = vmatpush2.msra.mxu0 0.0
    %2558 = vmatprep.subr.mxu0 0.0
    %2559 = vmatpush2.msra.mxu0 0.0
    %2560 = vmatprep.subr.mxu0 0.0
    %2561 = vmatpush2.msra.mxu0 0.0
    %2562 = vmatprep.subr.mxu0 0.0
    %2563 = vmatpush2.msra.mxu0 0.0
    %2564 = vmatprep.mubr.f32.mxu0 0.0
    %2565 = vmatmul.mubr.f32.gmra.mxu0 %v2427
    %v2566 = vpop.f32.mrf.mxu0
    %v2567 = vadd.f32 0.0, %v2566
    %v2568 = vpop.f32.mrf.mxu0
    %2569 = vdwg.mxu0
    %v2573 = vrot.slane %v2496, 6
    %v2574 = vrot.slane %v2498, 6
    %v2575 = vrot.slane %v2567, 6
    %v2579 = vadd.f32 %v115, %v2573
    %v2580 = vadd.f32 %v117, %v2574
    %v2581 = vadd.f32 %v191, %v2575
    %v2582 = vxor.u32 %v2579, 2147483648
    %v2583 = vmul.f32 %v2582, 1.442695
    %v2584 = vpow.pop %v2583
    %v2585 = vadd.f32 %v2584, 1.0
    %v2586 = vrcp.pop %v2585
    %v2587 = vmul.f32 1.0, %v2586
    %v2588 = vxor.u32 %v2580, 2147483648
    %v2589 = vmul.f32 %v2588, 1.442695
    %v2590 = vpow.pop %v2589
    %v2591 = vadd.f32 %v2590, 1.0
    %v2592 = vrcp.pop %v2591
    %v2593 = vmul.f32 1.0, %v2592
    %v2594 = vtanh.pop %v2580
    %v2595 = vtanh.pop %v2581
    %v2596 = vxor.u32 %v2581, 2147483648
    %v2597 = vmul.f32 %v2596, 1.442695
    %v2598 = vpow.pop %v2597
    %v2599 = vadd.f32 %v2598, 1.0
    %v2600 = vrcp.pop %v2599
    %v2601 = vmul.f32 1.0, %v2600
    %v2604 = vrot.slane %v2216, 6
    %v2605 = vrot.slane %v2217, 6
    %v2608 = vmul.f32 %v2587, %v2604
    %v2609 = vmul.f32 %v2593, %v2605
    %2612 = vrot.lane.b32.xlu0 %v2594, 64
    %v2613 = vpop.permute.xlu0 %2612
    %2614 = vrot.lane.b32.xlu0 %v2595, 64
    %v2615 = vpop.permute.xlu0 %2614
    %v2616 = vsel %vm413, %v2613, %v2615
    %v2618 = vmul.f32 %v2587, %v2616
    %2620 = vrot.lane.b32.xlu0 %v2618, 96
    %v2621 = vpop.permute.xlu0 %2620
    %v2623 = vadd.f32 %v2608, %v2621
    %v2624 = vadd.f32 %v2609, %v2621
    %v2625 = vtanh.pop %v2623
    %v2626 = vtanh.pop %v2624
    %2629 = vrot.lane.b32.xlu0 %v2625, 64
    %v2630 = vpop.permute.xlu0 %2629
    %2631 = vrot.lane.b32.xlu0 %v2626, 64
    %v2632 = vpop.permute.xlu0 %2631
    %v2633 = vsel %vm413, %v2630, %v2632
    %v2635 = vmul.f32 %v2601, %v2633
    %v2637 = vrot.slane %v2635, 2
    %2638 = vrot.lane.b32.xlu0 %v2637, 96
    %v2639 = vpop.permute.xlu0 %2638
    %v2641 = vsel %vm2426, %v2639, %v2220
    %v2644 = vrot.slane %v2623, 2
    %v2645 = vrot.slane %v2624, 2
    %2646 = vrot.lane.b32.xlu0 %v2644, 32
    %v2647 = vpop.permute.xlu0 %2646
    %2648 = vrot.lane.b32.xlu0 %v2645, 32
    %v2649 = vpop.permute.xlu0 %2648
    %v2650 = vsel %vm35, %v2647, %v2649
    %2652 = vrot.lane.b32.xlu0 %v2216, 32
    %v2653 = vpop.permute.xlu0 %2652
    %2654 = vrot.lane.b32.xlu0 %v2217, 32
    %v2655 = vpop.permute.xlu0 %2654
    %v2656 = vsel %vm35, %v2653, %v2655
    %v2658 = vsel %vm2426, %v2650, %v2656
    %2660 = vrot.lane.b32.xlu0 %v2418, 64
    %v2661 = vpop.permute.xlu0 %2660
    %v2663 = vsel %vm237, %v2641, %v2661
    %v2664 = vsel %vm413, %v2661, 0
    %2666 = vmatprep.subr.mxu0 %v488
    %2667 = vmatpush1.msra.mxu0 %v487
    %2668 = vmatprep.subr.mxu0 %v485
    %2669 = vmatpush1.msra.mxu0 %v484
    %2670 = vmatprep.subr.mxu0 %v482
    %2671 = vmatpush1.msra.mxu0 %v481
    %2672 = vmatprep.subr.mxu0 %v479
    %2673 = vmatpush1.msra.mxu0 %v478
    %2674 = vmatprep.subr.mxu0 %v476
    %2675 = vmatpush1.msra.mxu0 %v475
    %2676 = vmatprep.subr.mxu0 %v473
    %2677 = vmatpush1.msra.mxu0 %v472
    %2678 = vmatprep.subr.mxu0 %v470
    %2679 = vmatpush1.msra.mxu0 %v469
    %2680 = vmatprep.subr.mxu0 %v467
    %2681 = vmatpush1.msra.mxu0 %v466
    %2682 = vmatprep.subr.mxu0 %v464
    %2683 = vmatpush1.msra.mxu0 %v463
    %2684 = vmatprep.subr.mxu0 %v461
    %2685 = vmatpush1.msra.mxu0 %v460
    %2686 = vmatprep.subr.mxu0 %v458
    %2687 = vmatpush1.msra.mxu0 %v457
    %2688 = vmatprep.subr.mxu0 %v455
    %2689 = vmatpush1.msra.mxu0 %v454
    %2690 = vmatprep.subr.mxu0 %v452
    %2691 = vmatpush1.msra.mxu0 %v451
    %2692 = vmatprep.subr.mxu0 %v449
    %2693 = vmatpush1.msra.mxu0 %v448
    %2694 = vmatprep.subr.mxu0 %v446
    %2695 = vmatpush1.msra.mxu0 %v445
    %2696 = vmatprep.subr.mxu0 %v443
    %2697 = vmatpush1.msra.mxu0 %v442
    %2698 = vmatprep.subr.mxu0 0.0
    %2699 = vmatpush2.msra.mxu0 0.0
    %2700 = vmatprep.subr.mxu0 0.0
    %2701 = vmatpush2.msra.mxu0 0.0
    %2702 = vmatprep.subr.mxu0 0.0
    %2703 = vmatpush2.msra.mxu0 0.0
    %2704 = vmatprep.subr.mxu0 0.0
    %2705 = vmatpush2.msra.mxu0 0.0
    %2706 = vmatprep.subr.mxu0 0.0
    %2707 = vmatpush2.msra.mxu0 0.0
    %2708 = vmatprep.subr.mxu0 0.0
    %2709 = vmatpush2.msra.mxu0 0.0
    %2710 = vmatprep.subr.mxu0 0.0
    %2711 = vmatpush2.msra.mxu0 0.0
    %2712 = vmatprep.subr.mxu0 0.0
    %2713 = vmatpush2.msra.mxu0 0.0
    %2714 = vmatprep.subr.mxu0 %v512
    %2715 = vmatpush2.msra.mxu0 %v511
    %2716 = vmatprep.subr.mxu0 %v509
    %2717 = vmatpush2.msra.mxu0 %v508
    %2718 = vmatprep.subr.mxu0 %v506
    %2719 = vmatpush2.msra.mxu0 %v505
    %2720 = vmatprep.subr.mxu0 %v503
    %2721 = vmatpush2.msra.mxu0 %v502
    %2722 = vmatprep.subr.mxu0 %v500
    %2723 = vmatpush2.msra.mxu0 %v499
    %2724 = vmatprep.subr.mxu0 %v497
    %2725 = vmatpush2.msra.mxu0 %v496
    %2726 = vmatprep.subr.mxu0 %v494
    %2727 = vmatpush2.msra.mxu0 %v493
    %2728 = vmatprep.subr.mxu0 %v491
    %2729 = vmatpush2.msra.mxu0 %v490
    %2730 = vmatprep.mubr.f32.mxu0 %v2664
    %2731 = vmatmul.mubr.f32.gmra.mxu0 %v2663
    %v2732 = vpop.f32.mrf.mxu0
    %v2733 = vadd.f32 0.0, %v2732
    %v2734 = vpop.f32.mrf.mxu0
    %v2735 = vadd.f32 0.0, %v2734
    %2736 = vdwg.mxu0
    %2737 = vmatprep.subr.mxu0 0.0
    %2738 = vmatpush1.msra.mxu0 %v489
    %2739 = vmatprep.subr.mxu0 0.0
    %2740 = vmatpush1.msra.mxu0 %v486
    %2741 = vmatprep.subr.mxu0 0.0
    %2742 = vmatpush1.msra.mxu0 %v483
    %2743 = vmatprep.subr.mxu0 0.0
    %2744 = vmatpush1.msra.mxu0 %v480
    %2745 = vmatprep.subr.mxu0 0.0
    %2746 = vmatpush1.msra.mxu0 %v477
    %2747 = vmatprep.subr.mxu0 0.0
    %2748 = vmatpush1.msra.mxu0 %v474
    %2749 = vmatprep.subr.mxu0 0.0
    %2750 = vmatpush1.msra.mxu0 %v471
    %2751 = vmatprep.subr.mxu0 0.0
    %2752 = vmatpush1.msra.mxu0 %v468
    %2753 = vmatprep.subr.mxu0 0.0
    %2754 = vmatpush1.msra.mxu0 %v465
    %2755 = vmatprep.subr.mxu0 0.0
    %2756 = vmatpush1.msra.mxu0 %v462
    %2757 = vmatprep.subr.mxu0 0.0
    %2758 = vmatpush1.msra.mxu0 %v459
    %2759 = vmatprep.subr.mxu0 0.0
    %2760 = vmatpush1.msra.mxu0 %v456
    %2761 = vmatprep.subr.mxu0 0.0
    %2762 = vmatpush1.msra.mxu0 %v453
    %2763 = vmatprep.subr.mxu0 0.0
    %2764 = vmatpush1.msra.mxu0 %v450
    %2765 = vmatprep.subr.mxu0 0.0
    %2766 = vmatpush1.msra.mxu0 %v447
    %2767 = vmatprep.subr.mxu0 0.0
    %2768 = vmatpush1.msra.mxu0 %v444
    %2769 = vmatprep.subr.mxu0 0.0
    %2770 = vmatpush2.msra.mxu0 0.0
    %2771 = vmatprep.subr.mxu0 0.0
    %2772 = vmatpush2.msra.mxu0 0.0
    %2773 = vmatprep.subr.mxu0 0.0
    %2774 = vmatpush2.msra.mxu0 0.0
    %2775 = vmatprep.subr.mxu0 0.0
    %2776 = vmatpush2.msra.mxu0 0.0
    %2777 = vmatprep.subr.mxu0 0.0
    %2778 = vmatpush2.msra.mxu0 0.0
    %2779 = vmatprep.subr.mxu0 0.0
    %2780 = vmatpush2.msra.mxu0 0.0
    %2781 = vmatprep.subr.mxu0 0.0
    %2782 = vmatpush2.msra.mxu0 0.0
    %2783 = vmatprep.subr.mxu0 0.0
    %2784 = vmatpush2.msra.mxu0 0.0
    %2785 = vmatprep.subr.mxu0 0.0
    %2786 = vmatpush2.msra.mxu0 %v513
    %2787 = vmatprep.subr.mxu0 0.0
    %2788 = vmatpush2.msra.mxu0 %v510
    %2789 = vmatprep.subr.mxu0 0.0
    %2790 = vmatpush2.msra.mxu0 %v507
    %2791 = vmatprep.subr.mxu0 0.0
    %2792 = vmatpush2.msra.mxu0 %v504
    %2793 = vmatprep.subr.mxu0 0.0
    %2794 = vmatpush2.msra.mxu0 %v501
    %2795 = vmatprep.subr.mxu0 0.0
    %2796 = vmatpush2.msra.mxu0 %v498
    %2797 = vmatprep.subr.mxu0 0.0
    %2798 = vmatpush2.msra.mxu0 %v495
    %2799 = vmatprep.subr.mxu0 0.0
    %2800 = vmatpush2.msra.mxu0 %v492
    %2801 = vmatprep.mubr.f32.mxu0 %v2664
    %2802 = vmatmul.mubr.f32.gmra.mxu0 %v2663
    %v2803 = vpop.f32.mrf.mxu0
    %v2804 = vadd.f32 0.0, %v2803
    %v2805 = vpop.f32.mrf.mxu0
    %2806 = vdwg.mxu0
    %v2807 = vxor.u32 %v2733, 2147483648
    %v2808 = vmul.f32 %v2807, 1.442695
    %v2809 = vpow.pop %v2808
    %v2810 = vadd.f32 %v2809, 1.0
    %v2811 = vrcp.pop %v2810
    %v2812 = vmul.f32 1.0, %v2811
    %v2813 = vxor.u32 %v2735, 2147483648
    %v2814 = vmul.f32 %v2813, 1.442695
    %v2815 = vpow.pop %v2814
    %v2816 = vadd.f32 %v2815, 1.0
    %v2817 = vrcp.pop %v2816
    %v2818 = vmul.f32 1.0, %v2817
    %v2819 = vtanh.pop %v2735
    %v2820 = vtanh.pop %v2804
    %v2821 = vxor.u32 %v2804, 2147483648
    %v2822 = vmul.f32 %v2821, 1.442695
    %v2823 = vpow.pop %v2822
    %v2824 = vadd.f32 %v2823, 1.0
    %v2825 = vrcp.pop %v2824
    %v2826 = vmul.f32 1.0, %v2825
    %v2827 = vmul.f32 %v2812, %v2419
    %v2828 = vmul.f32 %v2818, %v2420
    %2831 = vrot.lane.b32.xlu0 %v2819, 64
    %v2832 = vpop.permute.xlu0 %2831
    %2833 = vrot.lane.b32.xlu0 %v2820, 64
    %v2834 = vpop.permute.xlu0 %2833
    %v2835 = vsel %vm413, %v2832, %v2834
    %v2837 = vmul.f32 %v2812, %v2835
    %2839 = vrot.lane.b32.xlu0 %v2837, 96
    %v2840 = vpop.permute.xlu0 %2839
    %v2842 = vadd.f32 %v2827, %v2840
    %v2843 = vadd.f32 %v2828, %v2840
    %v2844 = vtanh.pop %v2842
    %v2845 = vtanh.pop %v2843
    %2848 = vrot.lane.b32.xlu0 %v2844, 64
    %v2849 = vpop.permute.xlu0 %2848
    %2850 = vrot.lane.b32.xlu0 %v2845, 64
    %v2851 = vpop.permute.xlu0 %2850
    %v2852 = vsel %vm413, %v2849, %v2851
    %v2854 = vmul.f32 %v2826, %v2852
    %v2855 = vsel %vm2426, %v2854, %v2418
    %v2856 = vsel %vm2426, %v2842, %v2419
    %v2857 = vsel %vm2426, %v2843, %v2420
    %vm2858 = vcmp.gt.s32.totalorder %v194, 6
    %v2859 = vsel %vm2858, 1, 0
    %2860 = vset.pattern.permute.xlu0 0
    %2861 = vperm.xlu0 %2860, %v2859
    %v2862 = vpop.permute.xlu0 %2861
    %vm2863 = vcmp.eq.s32.totalorder %v2862, 1
    %v2865 = vsel %vm237, %v2641, 0
    %2867 = vmatprep.subr.mxu0 0.0
    %2868 = vmatpush1.msra.mxu0 0.0
    %2869 = vmatprep.subr.mxu0 0.0
    %2870 = vmatpush1.msra.mxu0 0.0
    %2871 = vmatprep.subr.mxu0 0.0
    %2872 = vmatpush1.msra.mxu0 0.0
    %2873 = vmatprep.subr.mxu0 0.0
    %2874 = vmatpush1.msra.mxu0 0.0
    %2875 = vmatprep.subr.mxu0 %v235
    %2876 = vmatpush1.msra.mxu0 %v234
    %2877 = vmatprep.subr.mxu0 %v232
    %2878 = vmatpush1.msra.mxu0 %v231
    %2879 = vmatprep.subr.mxu0 %v229
    %2880 = vmatpush1.msra.mxu0 %v228
    %2881 = vmatprep.subr.mxu0 %v226
    %2882 = vmatpush1.msra.mxu0 %v225
    %2883 = vmatprep.subr.mxu0 %v223
    %2884 = vmatpush1.msra.mxu0 %v222
    %2885 = vmatprep.subr.mxu0 %v220
    %2886 = vmatpush1.msra.mxu0 %v219
    %2887 = vmatprep.subr.mxu0 %v217
    %2888 = vmatpush1.msra.mxu0 %v216
    %2889 = vmatprep.subr.mxu0 %v214
    %2890 = vmatpush1.msra.mxu0 %v213
    %2891 = vmatprep.subr.mxu0 %v211
    %2892 = vmatpush1.msra.mxu0 %v210
    %2893 = vmatprep.subr.mxu0 %v208
    %2894 = vmatpush1.msra.mxu0 %v207
    %2895 = vmatprep.subr.mxu0 %v205
    %2896 = vmatpush1.msra.mxu0 %v204
    %2897 = vmatprep.subr.mxu0 %v202
    %2898 = vmatpush1.msra.mxu0 %v201
    %2899 = vmatprep.subr.mxu0 0.0
    %2900 = vmatpush2.msra.mxu0 0.0
    %2901 = vmatprep.subr.mxu0 0.0
    %2902 = vmatpush2.msra.mxu0 0.0
    %2903 = vmatprep.subr.mxu0 0.0
    %2904 = vmatpush2.msra.mxu0 0.0
    %2905 = vmatprep.subr.mxu0 0.0
    %2906 = vmatpush2.msra.mxu0 0.0
    %2907 = vmatprep.subr.mxu0 0.0
    %2908 = vmatpush2.msra.mxu0 0.0
    %2909 = vmatprep.subr.mxu0 0.0
    %2910 = vmatpush2.msra.mxu0 0.0
    %2911 = vmatprep.subr.mxu0 0.0
    %2912 = vmatpush2.msra.mxu0 0.0
    %2913 = vmatprep.subr.mxu0 0.0
    %2914 = vmatpush2.msra.mxu0 0.0
    %2915 = vmatprep.subr.mxu0 0.0
    %2916 = vmatpush2.msra.mxu0 0.0
    %2917 = vmatprep.subr.mxu0 0.0
    %2918 = vmatpush2.msra.mxu0 0.0
    %2919 = vmatprep.subr.mxu0 0.0
    %2920 = vmatpush2.msra.mxu0 0.0
    %2921 = vmatprep.subr.mxu0 0.0
    %2922 = vmatpush2.msra.mxu0 0.0
    %2923 = vmatprep.subr.mxu0 0.0
    %2924 = vmatpush2.msra.mxu0 0.0
    %2925 = vmatprep.subr.mxu0 0.0
    %2926 = vmatpush2.msra.mxu0 0.0
    %2927 = vmatprep.subr.mxu0 0.0
    %2928 = vmatpush2.msra.mxu0 0.0
    %2929 = vmatprep.subr.mxu0 0.0
    %2930 = vmatpush2.msra.mxu0 0.0
    %2931 = vmatprep.mubr.f32.mxu0 0.0
    %2932 = vmatmul.mubr.f32.gmra.mxu0 %v2865
    %v2933 = vpop.f32.mrf.mxu0
    %v2934 = vadd.f32 0.0, %v2933
    %v2935 = vpop.f32.mrf.mxu0
    %v2936 = vadd.f32 0.0, %v2935
    %2937 = vdwg.mxu0
    %2938 = vmatprep.subr.mxu0 0.0
    %2939 = vmatpush1.msra.mxu0 0.0
    %2940 = vmatprep.subr.mxu0 0.0
    %2941 = vmatpush1.msra.mxu0 0.0
    %2942 = vmatprep.subr.mxu0 0.0
    %2943 = vmatpush1.msra.mxu0 0.0
    %2944 = vmatprep.subr.mxu0 0.0
    %2945 = vmatpush1.msra.mxu0 0.0
    %2946 = vmatprep.subr.mxu0 0.0
    %2947 = vmatpush1.msra.mxu0 %v236
    %2948 = vmatprep.subr.mxu0 0.0
    %2949 = vmatpush1.msra.mxu0 %v233
    %2950 = vmatprep.subr.mxu0 0.0
    %2951 = vmatpush1.msra.mxu0 %v230
    %2952 = vmatprep.subr.mxu0 0.0
    %2953 = vmatpush1.msra.mxu0 %v227
    %2954 = vmatprep.subr.mxu0 0.0
    %2955 = vmatpush1.msra.mxu0 %v224
    %2956 = vmatprep.subr.mxu0 0.0
    %2957 = vmatpush1.msra.mxu0 %v221
    %2958 = vmatprep.subr.mxu0 0.0
    %2959 = vmatpush1.msra.mxu0 %v218
    %2960 = vmatprep.subr.mxu0 0.0
    %2961 = vmatpush1.msra.mxu0 %v215
    %2962 = vmatprep.subr.mxu0 0.0
    %2963 = vmatpush1.msra.mxu0 %v212
    %2964 = vmatprep.subr.mxu0 0.0
    %2965 = vmatpush1.msra.mxu0 %v209
    %2966 = vmatprep.subr.mxu0 0.0
    %2967 = vmatpush1.msra.mxu0 %v206
    %2968 = vmatprep.subr.mxu0 0.0
    %2969 = vmatpush1.msra.mxu0 %v203
    %2970 = vmatprep.subr.mxu0 0.0
    %2971 = vmatpush2.msra.mxu0 0.0
    %2972 = vmatprep.subr.mxu0 0.0
    %2973 = vmatpush2.msra.mxu0 0.0
    %2974 = vmatprep.subr.mxu0 0.0
    %2975 = vmatpush2.msra.mxu0 0.0
    %2976 = vmatprep.subr.mxu0 0.0
    %2977 = vmatpush2.msra.mxu0 0.0
    %2978 = vmatprep.subr.mxu0 0.0
    %2979 = vmatpush2.msra.mxu0 0.0
    %2980 = vmatprep.subr.mxu0 0.0
    %2981 = vmatpush2.msra.mxu0 0.0
    %2982 = vmatprep.subr.mxu0 0.0
    %2983 = vmatpush2.msra.mxu0 0.0
    %2984 = vmatprep.subr.mxu0 0.0
    %2985 = vmatpush2.msra.mxu0 0.0
    %2986 = vmatprep.subr.mxu0 0.0
    %2987 = vmatpush2.msra.mxu0 0.0
    %2988 = vmatprep.subr.mxu0 0.0
    %2989 = vmatpush2.msra.mxu0 0.0
    %2990 = vmatprep.subr.mxu0 0.0
    %2991 = vmatpush2.msra.mxu0 0.0
    %2992 = vmatprep.subr.mxu0 0.0
    %2993 = vmatpush2.msra.mxu0 0.0
    %2994 = vmatprep.subr.mxu0 0.0
    %2995 = vmatpush2.msra.mxu0 0.0
    %2996 = vmatprep.subr.mxu0 0.0
    %2997 = vmatpush2.msra.mxu0 0.0
    %2998 = vmatprep.subr.mxu0 0.0
    %2999 = vmatpush2.msra.mxu0 0.0
    %3000 = vmatprep.subr.mxu0 0.0
    %3001 = vmatpush2.msra.mxu0 0.0
    %3002 = vmatprep.mubr.f32.mxu0 0.0
    %3003 = vmatmul.mubr.f32.gmra.mxu0 %v2865
    %v3004 = vpop.f32.mrf.mxu0
    %v3005 = vadd.f32 0.0, %v3004
    %v3006 = vpop.f32.mrf.mxu0
    %3007 = vdwg.mxu0
    %v3011 = vrot.slane %v2934, 4
    %v3012 = vrot.slane %v2936, 4
    %v3013 = vrot.slane %v3005, 4
    %v3017 = vadd.f32 %v115, %v3011
    %v3018 = vadd.f32 %v117, %v3012
    %v3019 = vadd.f32 %v191, %v3013
    %v3020 = vxor.u32 %v3017, 2147483648
    %v3021 = vmul.f32 %v3020, 1.442695
    %v3022 = vpow.pop %v3021
    %v3023 = vadd.f32 %v3022, 1.0
    %v3024 = vrcp.pop %v3023
    %v3025 = vmul.f32 1.0, %v3024
    %v3026 = vxor.u32 %v3018, 2147483648
    %v3027 = vmul.f32 %v3026, 1.442695
    %v3028 = vpow.pop %v3027
    %v3029 = vadd.f32 %v3028, 1.0
    %v3030 = vrcp.pop %v3029
    %v3031 = vmul.f32 1.0, %v3030
    %v3032 = vtanh.pop %v3018
    %v3033 = vtanh.pop %v3019
    %v3034 = vxor.u32 %v3019, 2147483648
    %v3035 = vmul.f32 %v3034, 1.442695
    %v3036 = vpow.pop %v3035
    %v3037 = vadd.f32 %v3036, 1.0
    %v3038 = vrcp.pop %v3037
    %v3039 = vmul.f32 1.0, %v3038
    %v3041 = vrot.slane %v2658, 4
    %3042 = vrot.lane.b32.xlu0 %v3041, 96
    %v3043 = vpop.permute.xlu0 %3042
    %v3045 = vmul.f32 %v3025, %v3043
    %v3046 = vmul.f32 %v3031, %v3043
    %3049 = vrot.lane.b32.xlu0 %v3032, 64
    %v3050 = vpop.permute.xlu0 %3049
    %3051 = vrot.lane.b32.xlu0 %v3033, 64
    %v3052 = vpop.permute.xlu0 %3051
    %v3053 = vsel %vm413, %v3050, %v3052
    %v3055 = vmul.f32 %v3025, %v3053
    %3057 = vrot.lane.b32.xlu0 %v3055, 96
    %v3058 = vpop.permute.xlu0 %3057
    %v3060 = vadd.f32 %v3045, %v3058
    %v3061 = vadd.f32 %v3046, %v3058
    %v3062 = vtanh.pop %v3060
    %v3063 = vtanh.pop %v3061
    %3066 = vrot.lane.b32.xlu0 %v3062, 64
    %v3067 = vpop.permute.xlu0 %3066
    %3068 = vrot.lane.b32.xlu0 %v3063, 64
    %v3069 = vpop.permute.xlu0 %3068
    %v3070 = vsel %vm413, %v3067, %v3069
    %v3072 = vmul.f32 %v3039, %v3070
    %v3074 = vrot.slane %v3072, 4
    %3075 = vrot.lane.b32.xlu0 %v3074, 96
    %v3076 = vpop.permute.xlu0 %3075
    %v3078 = vsel %vm2863, %v3076, %v2641
    %v3081 = vrot.slane %v3060, 4
    %v3082 = vrot.slane %v3061, 4
    %3083 = vrot.lane.b32.xlu0 %v3081, 32
    %v3084 = vpop.permute.xlu0 %3083
    %3085 = vrot.lane.b32.xlu0 %v3082, 32
    %v3086 = vpop.permute.xlu0 %3085
    %v3087 = vsel %vm35, %v3084, %v3086
    %v3089 = vsel %vm2863, %v3087, %v2658
    %3091 = vrot.lane.b32.xlu0 %v2855, 64
    %v3092 = vpop.permute.xlu0 %3091
    %v3094 = vsel %vm237, %v3078, %v3092
    %v3095 = vsel %vm413, %v3092, 0
    %3097 = vmatprep.subr.mxu0 %v488
    %3098 = vmatpush1.msra.mxu0 %v487
    %3099 = vmatprep.subr.mxu0 %v485
    %3100 = vmatpush1.msra.mxu0 %v484
    %3101 = vmatprep.subr.mxu0 %v482
    %3102 = vmatpush1.msra.mxu0 %v481
    %3103 = vmatprep.subr.mxu0 %v479
    %3104 = vmatpush1.msra.mxu0 %v478
    %3105 = vmatprep.subr.mxu0 %v476
    %3106 = vmatpush1.msra.mxu0 %v475
    %3107 = vmatprep.subr.mxu0 %v473
    %3108 = vmatpush1.msra.mxu0 %v472
    %3109 = vmatprep.subr.mxu0 %v470
    %3110 = vmatpush1.msra.mxu0 %v469
    %3111 = vmatprep.subr.mxu0 %v467
    %3112 = vmatpush1.msra.mxu0 %v466
    %3113 = vmatprep.subr.mxu0 %v464
    %3114 = vmatpush1.msra.mxu0 %v463
    %3115 = vmatprep.subr.mxu0 %v461
    %3116 = vmatpush1.msra.mxu0 %v460
    %3117 = vmatprep.subr.mxu0 %v458
    %3118 = vmatpush1.msra.mxu0 %v457
    %3119 = vmatprep.subr.mxu0 %v455
    %3120 = vmatpush1.msra.mxu0 %v454
    %3121 = vmatprep.subr.mxu0 %v452
    %3122 = vmatpush1.msra.mxu0 %v451
    %3123 = vmatprep.subr.mxu0 %v449
    %3124 = vmatpush1.msra.mxu0 %v448
    %3125 = vmatprep.subr.mxu0 %v446
    %3126 = vmatpush1.msra.mxu0 %v445
    %3127 = vmatprep.subr.mxu0 %v443
    %3128 = vmatpush1.msra.mxu0 %v442
    %3129 = vmatprep.subr.mxu0 0.0
    %3130 = vmatpush2.msra.mxu0 0.0
    %3131 = vmatprep.subr.mxu0 0.0
    %3132 = vmatpush2.msra.mxu0 0.0
    %3133 = vmatprep.subr.mxu0 0.0
    %3134 = vmatpush2.msra.mxu0 0.0
    %3135 = vmatprep.subr.mxu0 0.0
    %3136 = vmatpush2.msra.mxu0 0.0
    %3137 = vmatprep.subr.mxu0 0.0
    %3138 = vmatpush2.msra.mxu0 0.0
    %3139 = vmatprep.subr.mxu0 0.0
    %3140 = vmatpush2.msra.mxu0 0.0
    %3141 = vmatprep.subr.mxu0 0.0
    %3142 = vmatpush2.msra.mxu0 0.0
    %3143 = vmatprep.subr.mxu0 0.0
    %3144 = vmatpush2.msra.mxu0 0.0
    %3145 = vmatprep.subr.mxu0 %v512
    %3146 = vmatpush2.msra.mxu0 %v511
    %3147 = vmatprep.subr.mxu0 %v509
    %3148 = vmatpush2.msra.mxu0 %v508
    %3149 = vmatprep.subr.mxu0 %v506
    %3150 = vmatpush2.msra.mxu0 %v505
    %3151 = vmatprep.subr.mxu0 %v503
    %3152 = vmatpush2.msra.mxu0 %v502
    %3153 = vmatprep.subr.mxu0 %v500
    %3154 = vmatpush2.msra.mxu0 %v499
    %3155 = vmatprep.subr.mxu0 %v497
    %3156 = vmatpush2.msra.mxu0 %v496
    %3157 = vmatprep.subr.mxu0 %v494
    %3158 = vmatpush2.msra.mxu0 %v493
    %3159 = vmatprep.subr.mxu0 %v491
    %3160 = vmatpush2.msra.mxu0 %v490
    %3161 = vmatprep.mubr.f32.mxu0 %v3095
    %3162 = vmatmul.mubr.f32.gmra.mxu0 %v3094
    %v3163 = vpop.f32.mrf.mxu0
    %v3164 = vadd.f32 0.0, %v3163
    %v3165 = vpop.f32.mrf.mxu0
    %v3166 = vadd.f32 0.0, %v3165
    %3167 = vdwg.mxu0
    %3168 = vmatprep.subr.mxu0 0.0
    %3169 = vmatpush1.msra.mxu0 %v489
    %3170 = vmatprep.subr.mxu0 0.0
    %3171 = vmatpush1.msra.mxu0 %v486
    %3172 = vmatprep.subr.mxu0 0.0
    %3173 = vmatpush1.msra.mxu0 %v483
    %3174 = vmatprep.subr.mxu0 0.0
    %3175 = vmatpush1.msra.mxu0 %v480
    %3176 = vmatprep.subr.mxu0 0.0
    %3177 = vmatpush1.msra.mxu0 %v477
    %3178 = vmatprep.subr.mxu0 0.0
    %3179 = vmatpush1.msra.mxu0 %v474
    %3180 = vmatprep.subr.mxu0 0.0
    %3181 = vmatpush1.msra.mxu0 %v471
    %3182 = vmatprep.subr.mxu0 0.0
    %3183 = vmatpush1.msra.mxu0 %v468
    %3184 = vmatprep.subr.mxu0 0.0
    %3185 = vmatpush1.msra.mxu0 %v465
    %3186 = vmatprep.subr.mxu0 0.0
    %3187 = vmatpush1.msra.mxu0 %v462
    %3188 = vmatprep.subr.mxu0 0.0
    %3189 = vmatpush1.msra.mxu0 %v459
    %3190 = vmatprep.subr.mxu0 0.0
    %3191 = vmatpush1.msra.mxu0 %v456
    %3192 = vmatprep.subr.mxu0 0.0
    %3193 = vmatpush1.msra.mxu0 %v453
    %3194 = vmatprep.subr.mxu0 0.0
    %3195 = vmatpush1.msra.mxu0 %v450
    %3196 = vmatprep.subr.mxu0 0.0
    %3197 = vmatpush1.msra.mxu0 %v447
    %3198 = vmatprep.subr.mxu0 0.0
    %3199 = vmatpush1.msra.mxu0 %v444
    %3200 = vmatprep.subr.mxu0 0.0
    %3201 = vmatpush2.msra.mxu0 0.0
    %3202 = vmatprep.subr.mxu0 0.0
    %3203 = vmatpush2.msra.mxu0 0.0
    %3204 = vmatprep.subr.mxu0 0.0
    %3205 = vmatpush2.msra.mxu0 0.0
    %3206 = vmatprep.subr.mxu0 0.0
    %3207 = vmatpush2.msra.mxu0 0.0
    %3208 = vmatprep.subr.mxu0 0.0
    %3209 = vmatpush2.msra.mxu0 0.0
    %3210 = vmatprep.subr.mxu0 0.0
    %3211 = vmatpush2.msra.mxu0 0.0
    %3212 = vmatprep.subr.mxu0 0.0
    %3213 = vmatpush2.msra.mxu0 0.0
    %3214 = vmatprep.subr.mxu0 0.0
    %3215 = vmatpush2.msra.mxu0 0.0
    %3216 = vmatprep.subr.mxu0 0.0
    %3217 = vmatpush2.msra.mxu0 %v513
    %3218 = vmatprep.subr.mxu0 0.0
    %3219 = vmatpush2.msra.mxu0 %v510
    %3220 = vmatprep.subr.mxu0 0.0
    %3221 = vmatpush2.msra.mxu0 %v507
    %3222 = vmatprep.subr.mxu0 0.0
    %3223 = vmatpush2.msra.mxu0 %v504
    %3224 = vmatprep.subr.mxu0 0.0
    %3225 = vmatpush2.msra.mxu0 %v501
    %3226 = vmatprep.subr.mxu0 0.0
    %3227 = vmatpush2.msra.mxu0 %v498
    %3228 = vmatprep.subr.mxu0 0.0
    %3229 = vmatpush2.msra.mxu0 %v495
    %3230 = vmatprep.subr.mxu0 0.0
    %3231 = vmatpush2.msra.mxu0 %v492
    %3232 = vmatprep.mubr.f32.mxu0 %v3095
    %3233 = vmatmul.mubr.f32.gmra.mxu0 %v3094
    %v3234 = vpop.f32.mrf.mxu0
    %v3235 = vadd.f32 0.0, %v3234
    %v3236 = vpop.f32.mrf.mxu0
    %3237 = vdwg.mxu0
    %v3238 = vxor.u32 %v3164, 2147483648
    %v3239 = vmul.f32 %v3238, 1.442695
    %v3240 = vpow.pop %v3239
    %v3241 = vadd.f32 %v3240, 1.0
    %v3242 = vrcp.pop %v3241
    %v3243 = vmul.f32 1.0, %v3242
    %v3244 = vxor.u32 %v3166, 2147483648
    %v3245 = vmul.f32 %v3244, 1.442695
    %v3246 = vpow.pop %v3245
    %v3247 = vadd.f32 %v3246, 1.0
    %v3248 = vrcp.pop %v3247
    %v3249 = vmul.f32 1.0, %v3248
    %v3250 = vtanh.pop %v3166
    %v3251 = vtanh.pop %v3235
    %v3252 = vxor.u32 %v3235, 2147483648
    %v3253 = vmul.f32 %v3252, 1.442695
    %v3254 = vpow.pop %v3253
    %v3255 = vadd.f32 %v3254, 1.0
    %v3256 = vrcp.pop %v3255
    %v3257 = vmul.f32 1.0, %v3256
    %v3258 = vmul.f32 %v3243, %v2856
    %v3259 = vmul.f32 %v3249, %v2857
    %3262 = vrot.lane.b32.xlu0 %v3250, 64
    %v3263 = vpop.permute.xlu0 %3262
    %3264 = vrot.lane.b32.xlu0 %v3251, 64
    %v3265 = vpop.permute.xlu0 %3264
    %v3266 = vsel %vm413, %v3263, %v3265
    %v3268 = vmul.f32 %v3243, %v3266
    %3270 = vrot.lane.b32.xlu0 %v3268, 96
    %v3271 = vpop.permute.xlu0 %3270
    %v3273 = vadd.f32 %v3258, %v3271
    %v3274 = vadd.f32 %v3259, %v3271
    %v3275 = vtanh.pop %v3273
    %v3276 = vtanh.pop %v3274
    %3279 = vrot.lane.b32.xlu0 %v3275, 64
    %v3280 = vpop.permute.xlu0 %3279
    %3281 = vrot.lane.b32.xlu0 %v3276, 64
    %v3282 = vpop.permute.xlu0 %3281
    %v3283 = vsel %vm413, %v3280, %v3282
    %v3285 = vmul.f32 %v3257, %v3283
    %v3286 = vsel %vm2863, %v3285, %v2855
    %v3287 = vsel %vm2863, %v3273, %v2856
    %v3288 = vsel %vm2863, %v3274, %v2857
    %vm3289 = vcmp.gt.s32.totalorder %v194, 7
    %v3290 = vsel %vm3289, 1, 0
    %3291 = vset.pattern.permute.xlu0 0
    %3292 = vperm.xlu0 %3291, %v3290
    %v3293 = vpop.permute.xlu0 %3292
    %vm3294 = vcmp.eq.s32.totalorder %v3293, 1
    %v3296 = vsel %vm237, %v3078, 0
    %3298 = vmatprep.subr.mxu0 0.0
    %3299 = vmatpush1.msra.mxu0 0.0
    %3300 = vmatprep.subr.mxu0 0.0
    %3301 = vmatpush1.msra.mxu0 0.0
    %3302 = vmatprep.subr.mxu0 0.0
    %3303 = vmatpush1.msra.mxu0 0.0
    %3304 = vmatprep.subr.mxu0 0.0
    %3305 = vmatpush1.msra.mxu0 0.0
    %3306 = vmatprep.subr.mxu0 %v235
    %3307 = vmatpush1.msra.mxu0 %v234
    %3308 = vmatprep.subr.mxu0 %v232
    %3309 = vmatpush1.msra.mxu0 %v231
    %3310 = vmatprep.subr.mxu0 %v229
    %3311 = vmatpush1.msra.mxu0 %v228
    %3312 = vmatprep.subr.mxu0 %v226
    %3313 = vmatpush1.msra.mxu0 %v225
    %3314 = vmatprep.subr.mxu0 %v223
    %3315 = vmatpush1.msra.mxu0 %v222
    %3316 = vmatprep.subr.mxu0 %v220
    %3317 = vmatpush1.msra.mxu0 %v219
    %3318 = vmatprep.subr.mxu0 %v217
    %3319 = vmatpush1.msra.mxu0 %v216
    %3320 = vmatprep.subr.mxu0 %v214
    %3321 = vmatpush1.msra.mxu0 %v213
    %3322 = vmatprep.subr.mxu0 %v211
    %3323 = vmatpush1.msra.mxu0 %v210
    %3324 = vmatprep.subr.mxu0 %v208
    %3325 = vmatpush1.msra.mxu0 %v207
    %3326 = vmatprep.subr.mxu0 %v205
    %3327 = vmatpush1.msra.mxu0 %v204
    %3328 = vmatprep.subr.mxu0 %v202
    %3329 = vmatpush1.msra.mxu0 %v201
    %3330 = vmatprep.subr.mxu0 0.0
    %3331 = vmatpush2.msra.mxu0 0.0
    %3332 = vmatprep.subr.mxu0 0.0
    %3333 = vmatpush2.msra.mxu0 0.0
    %3334 = vmatprep.subr.mxu0 0.0
    %3335 = vmatpush2.msra.mxu0 0.0
    %3336 = vmatprep.subr.mxu0 0.0
    %3337 = vmatpush2.msra.mxu0 0.0
    %3338 = vmatprep.subr.mxu0 0.0
    %3339 = vmatpush2.msra.mxu0 0.0
    %3340 = vmatprep.subr.mxu0 0.0
    %3341 = vmatpush2.msra.mxu0 0.0
    %3342 = vmatprep.subr.mxu0 0.0
    %3343 = vmatpush2.msra.mxu0 0.0
    %3344 = vmatprep.subr.mxu0 0.0
    %3345 = vmatpush2.msra.mxu0 0.0
    %3346 = vmatprep.subr.mxu0 0.0
    %3347 = vmatpush2.msra.mxu0 0.0
    %3348 = vmatprep.subr.mxu0 0.0
    %3349 = vmatpush2.msra.mxu0 0.0
    %3350 = vmatprep.subr.mxu0 0.0
    %3351 = vmatpush2.msra.mxu0 0.0
    %3352 = vmatprep.subr.mxu0 0.0
    %3353 = vmatpush2.msra.mxu0 0.0
    %3354 = vmatprep.subr.mxu0 0.0
    %3355 = vmatpush2.msra.mxu0 0.0
    %3356 = vmatprep.subr.mxu0 0.0
    %3357 = vmatpush2.msra.mxu0 0.0
    %3358 = vmatprep.subr.mxu0 0.0
    %3359 = vmatpush2.msra.mxu0 0.0
    %3360 = vmatprep.subr.mxu0 0.0
    %3361 = vmatpush2.msra.mxu0 0.0
    %3362 = vmatprep.mubr.f32.mxu0 0.0
    %3363 = vmatmul.mubr.f32.gmra.mxu0 %v3296
    %v3364 = vpop.f32.mrf.mxu0
    %v3365 = vadd.f32 0.0, %v3364
    %v3366 = vpop.f32.mrf.mxu0
    %v3367 = vadd.f32 0.0, %v3366
    %3368 = vdwg.mxu0
    %3369 = vmatprep.subr.mxu0 0.0
    %3370 = vmatpush1.msra.mxu0 0.0
    %3371 = vmatprep.subr.mxu0 0.0
    %3372 = vmatpush1.msra.mxu0 0.0
    %3373 = vmatprep.subr.mxu0 0.0
    %3374 = vmatpush1.msra.mxu0 0.0
    %3375 = vmatprep.subr.mxu0 0.0
    %3376 = vmatpush1.msra.mxu0 0.0
    %3377 = vmatprep.subr.mxu0 0.0
    %3378 = vmatpush1.msra.mxu0 %v236
    %3379 = vmatprep.subr.mxu0 0.0
    %3380 = vmatpush1.msra.mxu0 %v233
    %3381 = vmatprep.subr.mxu0 0.0
    %3382 = vmatpush1.msra.mxu0 %v230
    %3383 = vmatprep.subr.mxu0 0.0
    %3384 = vmatpush1.msra.mxu0 %v227
    %3385 = vmatprep.subr.mxu0 0.0
    %3386 = vmatpush1.msra.mxu0 %v224
    %3387 = vmatprep.subr.mxu0 0.0
    %3388 = vmatpush1.msra.mxu0 %v221
    %3389 = vmatprep.subr.mxu0 0.0
    %3390 = vmatpush1.msra.mxu0 %v218
    %3391 = vmatprep.subr.mxu0 0.0
    %3392 = vmatpush1.msra.mxu0 %v215
    %3393 = vmatprep.subr.mxu0 0.0
    %3394 = vmatpush1.msra.mxu0 %v212
    %3395 = vmatprep.subr.mxu0 0.0
    %3396 = vmatpush1.msra.mxu0 %v209
    %3397 = vmatprep.subr.mxu0 0.0
    %3398 = vmatpush1.msra.mxu0 %v206
    %3399 = vmatprep.subr.mxu0 0.0
    %3400 = vmatpush1.msra.mxu0 %v203
    %3401 = vmatprep.subr.mxu0 0.0
    %3402 = vmatpush2.msra.mxu0 0.0
    %3403 = vmatprep.subr.mxu0 0.0
    %3404 = vmatpush2.msra.mxu0 0.0
    %3405 = vmatprep.subr.mxu0 0.0
    %3406 = vmatpush2.msra.mxu0 0.0
    %3407 = vmatprep.subr.mxu0 0.0
    %3408 = vmatpush2.msra.mxu0 0.0
    %3409 = vmatprep.subr.mxu0 0.0
    %3410 = vmatpush2.msra.mxu0 0.0
    %3411 = vmatprep.subr.mxu0 0.0
    %3412 = vmatpush2.msra.mxu0 0.0
    %3413 = vmatprep.subr.mxu0 0.0
    %3414 = vmatpush2.msra.mxu0 0.0
    %3415 = vmatprep.subr.mxu0 0.0
    %3416 = vmatpush2.msra.mxu0 0.0
    %3417 = vmatprep.subr.mxu0 0.0
    %3418 = vmatpush2.msra.mxu0 0.0
    %3419 = vmatprep.subr.mxu0 0.0
    %3420 = vmatpush2.msra.mxu0 0.0
    %3421 = vmatprep.subr.mxu0 0.0
    %3422 = vmatpush2.msra.mxu0 0.0
    %3423 = vmatprep.subr.mxu0 0.0
    %3424 = vmatpush2.msra.mxu0 0.0
    %3425 = vmatprep.subr.mxu0 0.0
    %3426 = vmatpush2.msra.mxu0 0.0
    %3427 = vmatprep.subr.mxu0 0.0
    %3428 = vmatpush2.msra.mxu0 0.0
    %3429 = vmatprep.subr.mxu0 0.0
    %3430 = vmatpush2.msra.mxu0 0.0
    %3431 = vmatprep.subr.mxu0 0.0
    %3432 = vmatpush2.msra.mxu0 0.0
    %3433 = vmatprep.mubr.f32.mxu0 0.0
    %3434 = vmatmul.mubr.f32.gmra.mxu0 %v3296
    %v3435 = vpop.f32.mrf.mxu0
    %v3436 = vadd.f32 0.0, %v3435
    %v3437 = vpop.f32.mrf.mxu0
    %3438 = vdwg.mxu0
    %v3442 = vrot.slane %v3365, 2
    %v3443 = vrot.slane %v3367, 2
    %v3444 = vrot.slane %v3436, 2
    %v3448 = vadd.f32 %v115, %v3442
    %v3449 = vadd.f32 %v117, %v3443
    %v3450 = vadd.f32 %v191, %v3444
    %v3451 = vxor.u32 %v3448, 2147483648
    %v3452 = vmul.f32 %v3451, 1.442695
    %v3453 = vpow.pop %v3452
    %v3454 = vadd.f32 %v3453, 1.0
    %v3455 = vrcp.pop %v3454
    %v3456 = vmul.f32 1.0, %v3455
    %v3457 = vxor.u32 %v3449, 2147483648
    %v3458 = vmul.f32 %v3457, 1.442695
    %v3459 = vpow.pop %v3458
    %v3460 = vadd.f32 %v3459, 1.0
    %v3461 = vrcp.pop %v3460
    %v3462 = vmul.f32 1.0, %v3461
    %v3463 = vtanh.pop %v3449
    %v3464 = vtanh.pop %v3450
    %v3465 = vxor.u32 %v3450, 2147483648
    %v3466 = vmul.f32 %v3465, 1.442695
    %v3467 = vpow.pop %v3466
    %v3468 = vadd.f32 %v3467, 1.0
    %v3469 = vrcp.pop %v3468
    %v3470 = vmul.f32 1.0, %v3469
    %v3472 = vrot.slane %v3089, 2
    %3473 = vrot.lane.b32.xlu0 %v3472, 96
    %v3474 = vpop.permute.xlu0 %3473
    %v3476 = vmul.f32 %v3456, %v3474
    %v3477 = vmul.f32 %v3462, %v3474
    %3480 = vrot.lane.b32.xlu0 %v3463, 64
    %v3481 = vpop.permute.xlu0 %3480
    %3482 = vrot.lane.b32.xlu0 %v3464, 64
    %v3483 = vpop.permute.xlu0 %3482
    %v3484 = vsel %vm413, %v3481, %v3483
    %v3486 = vmul.f32 %v3456, %v3484
    %3488 = vrot.lane.b32.xlu0 %v3486, 96
    %v3489 = vpop.permute.xlu0 %3488
    %v3491 = vadd.f32 %v3476, %v3489
    %v3492 = vadd.f32 %v3477, %v3489
    %v3493 = vtanh.pop %v3491
    %v3494 = vtanh.pop %v3492
    %3497 = vrot.lane.b32.xlu0 %v3493, 64
    %v3498 = vpop.permute.xlu0 %3497
    %3499 = vrot.lane.b32.xlu0 %v3494, 64
    %v3500 = vpop.permute.xlu0 %3499
    %v3501 = vsel %vm413, %v3498, %v3500
    %v3503 = vmul.f32 %v3470, %v3501
    %v3505 = vrot.slane %v3503, 6
    %3506 = vrot.lane.b32.xlu0 %v3505, 96
    %v3507 = vpop.permute.xlu0 %3506
    %v3509 = vsel %vm3294, %v3507, %v3078
    %3511 = vrot.lane.b32.xlu0 %v3286, 64
    %v3512 = vpop.permute.xlu0 %3511
    %v3514 = vsel %vm237, %v3509, %v3512
    %v3515 = vsel %vm413, %v3512, 0
    %3517 = vmatprep.subr.mxu0 %v488
    %3518 = vmatpush1.msra.mxu0 %v487
    %3519 = vmatprep.subr.mxu0 %v485
    %3520 = vmatpush1.msra.mxu0 %v484
    %3521 = vmatprep.subr.mxu0 %v482
    %3522 = vmatpush1.msra.mxu0 %v481
    %3523 = vmatprep.subr.mxu0 %v479
    %3524 = vmatpush1.msra.mxu0 %v478
    %3525 = vmatprep.subr.mxu0 %v476
    %3526 = vmatpush1.msra.mxu0 %v475
    %3527 = vmatprep.subr.mxu0 %v473
    %3528 = vmatpush1.msra.mxu0 %v472
    %3529 = vmatprep.subr.mxu0 %v470
    %3530 = vmatpush1.msra.mxu0 %v469
    %3531 = vmatprep.subr.mxu0 %v467
    %3532 = vmatpush1.msra.mxu0 %v466
    %3533 = vmatprep.subr.mxu0 %v464
    %3534 = vmatpush1.msra.mxu0 %v463
    %3535 = vmatprep.subr.mxu0 %v461
    %3536 = vmatpush1.msra.mxu0 %v460
    %3537 = vmatprep.subr.mxu0 %v458
    %3538 = vmatpush1.msra.mxu0 %v457
    %3539 = vmatprep.subr.mxu0 %v455
    %3540 = vmatpush1.msra.mxu0 %v454
    %3541 = vmatprep.subr.mxu0 %v452
    %3542 = vmatpush1.msra.mxu0 %v451
    %3543 = vmatprep.subr.mxu0 %v449
    %3544 = vmatpush1.msra.mxu0 %v448
    %3545 = vmatprep.subr.mxu0 %v446
    %3546 = vmatpush1.msra.mxu0 %v445
    %3547 = vmatprep.subr.mxu0 %v443
    %3548 = vmatpush1.msra.mxu0 %v442
    %3549 = vmatprep.subr.mxu0 0.0
    %3550 = vmatpush2.msra.mxu0 0.0
    %3551 = vmatprep.subr.mxu0 0.0
    %3552 = vmatpush2.msra.mxu0 0.0
    %3553 = vmatprep.subr.mxu0 0.0
    %3554 = vmatpush2.msra.mxu0 0.0
    %3555 = vmatprep.subr.mxu0 0.0
    %3556 = vmatpush2.msra.mxu0 0.0
    %3557 = vmatprep.subr.mxu0 0.0
    %3558 = vmatpush2.msra.mxu0 0.0
    %3559 = vmatprep.subr.mxu0 0.0
    %3560 = vmatpush2.msra.mxu0 0.0
    %3561 = vmatprep.subr.mxu0 0.0
    %3562 = vmatpush2.msra.mxu0 0.0
    %3563 = vmatprep.subr.mxu0 0.0
    %3564 = vmatpush2.msra.mxu0 0.0
    %3565 = vmatprep.subr.mxu0 %v512
    %3566 = vmatpush2.msra.mxu0 %v511
    %3567 = vmatprep.subr.mxu0 %v509
    %3568 = vmatpush2.msra.mxu0 %v508
    %3569 = vmatprep.subr.mxu0 %v506
    %3570 = vmatpush2.msra.mxu0 %v505
    %3571 = vmatprep.subr.mxu0 %v503
    %3572 = vmatpush2.msra.mxu0 %v502
    %3573 = vmatprep.subr.mxu0 %v500
    %3574 = vmatpush2.msra.mxu0 %v499
    %3575 = vmatprep.subr.mxu0 %v497
    %3576 = vmatpush2.msra.mxu0 %v496
    %3577 = vmatprep.subr.mxu0 %v494
    %3578 = vmatpush2.msra.mxu0 %v493
    %3579 = vmatprep.subr.mxu0 %v491
    %3580 = vmatpush2.msra.mxu0 %v490
    %3581 = vmatprep.mubr.f32.mxu0 %v3515
    %3582 = vmatmul.mubr.f32.gmra.mxu0 %v3514
    %v3583 = vpop.f32.mrf.mxu0
    %v3584 = vadd.f32 0.0, %v3583
    %v3585 = vpop.f32.mrf.mxu0
    %v3586 = vadd.f32 0.0, %v3585
    %3587 = vdwg.mxu0
    %3588 = vmatprep.subr.mxu0 0.0
    %3589 = vmatpush1.msra.mxu0 %v489
    %3590 = vmatprep.subr.mxu0 0.0
    %3591 = vmatpush1.msra.mxu0 %v486
    %3592 = vmatprep.subr.mxu0 0.0
    %3593 = vmatpush1.msra.mxu0 %v483
    %3594 = vmatprep.subr.mxu0 0.0
    %3595 = vmatpush1.msra.mxu0 %v480
    %3596 = vmatprep.subr.mxu0 0.0
    %3597 = vmatpush1.msra.mxu0 %v477
    %3598 = vmatprep.subr.mxu0 0.0
    %3599 = vmatpush1.msra.mxu0 %v474
    %3600 = vmatprep.subr.mxu0 0.0
    %3601 = vmatpush1.msra.mxu0 %v471
    %3602 = vmatprep.subr.mxu0 0.0
    %3603 = vmatpush1.msra.mxu0 %v468
    %3604 = vmatprep.subr.mxu0 0.0
    %3605 = vmatpush1.msra.mxu0 %v465
    %3606 = vmatprep.subr.mxu0 0.0
    %3607 = vmatpush1.msra.mxu0 %v462
    %3608 = vmatprep.subr.mxu0 0.0
    %3609 = vmatpush1.msra.mxu0 %v459
    %3610 = vmatprep.subr.mxu0 0.0
    %3611 = vmatpush1.msra.mxu0 %v456
    %3612 = vmatprep.subr.mxu0 0.0
    %3613 = vmatpush1.msra.mxu0 %v453
    %3614 = vmatprep.subr.mxu0 0.0
    %3615 = vmatpush1.msra.mxu0 %v450
    %3616 = vmatprep.subr.mxu0 0.0
    %3617 = vmatpush1.msra.mxu0 %v447
    %3618 = vmatprep.subr.mxu0 0.0
    %3619 = vmatpush1.msra.mxu0 %v444
    %3620 = vmatprep.subr.mxu0 0.0
    %3621 = vmatpush2.msra.mxu0 0.0
    %3622 = vmatprep.subr.mxu0 0.0
    %3623 = vmatpush2.msra.mxu0 0.0
    %3624 = vmatprep.subr.mxu0 0.0
    %3625 = vmatpush2.msra.mxu0 0.0
    %3626 = vmatprep.subr.mxu0 0.0
    %3627 = vmatpush2.msra.mxu0 0.0
    %3628 = vmatprep.subr.mxu0 0.0
    %3629 = vmatpush2.msra.mxu0 0.0
    %3630 = vmatprep.subr.mxu0 0.0
    %3631 = vmatpush2.msra.mxu0 0.0
    %3632 = vmatprep.subr.mxu0 0.0
    %3633 = vmatpush2.msra.mxu0 0.0
    %3634 = vmatprep.subr.mxu0 0.0
    %3635 = vmatpush2.msra.mxu0 0.0
    %3636 = vmatprep.subr.mxu0 0.0
    %3637 = vmatpush2.msra.mxu0 %v513
    %3638 = vmatprep.subr.mxu0 0.0
    %3639 = vmatpush2.msra.mxu0 %v510
    %3640 = vmatprep.subr.mxu0 0.0
    %3641 = vmatpush2.msra.mxu0 %v507
    %3642 = vmatprep.subr.mxu0 0.0
    %3643 = vmatpush2.msra.mxu0 %v504
    %3644 = vmatprep.subr.mxu0 0.0
    %3645 = vmatpush2.msra.mxu0 %v501
    %3646 = vmatprep.subr.mxu0 0.0
    %3647 = vmatpush2.msra.mxu0 %v498
    %3648 = vmatprep.subr.mxu0 0.0
    %3649 = vmatpush2.msra.mxu0 %v495
    %3650 = vmatprep.subr.mxu0 0.0
    %3651 = vmatpush2.msra.mxu0 %v492
    %3652 = vmatprep.mubr.f32.mxu0 %v3515
    %3653 = vmatmul.mubr.f32.gmra.mxu0 %v3514
    %v3654 = vpop.f32.mrf.mxu0
    %v3655 = vadd.f32 0.0, %v3654
    %v3656 = vpop.f32.mrf.mxu0
    %3657 = vdwg.mxu0
    %v3658 = vxor.u32 %v3584, 2147483648
    %v3659 = vmul.f32 %v3658, 1.442695
    %v3660 = vpow.pop %v3659
    %v3661 = vadd.f32 %v3660, 1.0
    %v3662 = vrcp.pop %v3661
    %v3663 = vmul.f32 1.0, %v3662
    %v3664 = vxor.u32 %v3586, 2147483648
    %v3665 = vmul.f32 %v3664, 1.442695
    %v3666 = vpow.pop %v3665
    %v3667 = vadd.f32 %v3666, 1.0
    %v3668 = vrcp.pop %v3667
    %v3669 = vmul.f32 1.0, %v3668
    %v3670 = vtanh.pop %v3586
    %v3671 = vtanh.pop %v3655
    %v3672 = vxor.u32 %v3655, 2147483648
    %v3673 = vmul.f32 %v3672, 1.442695
    %v3674 = vpow.pop %v3673
    %v3675 = vadd.f32 %v3674, 1.0
    %v3676 = vrcp.pop %v3675
    %v3677 = vmul.f32 1.0, %v3676
    %v3678 = vmul.f32 %v3663, %v3287
    %v3679 = vmul.f32 %v3669, %v3288
    %3682 = vrot.lane.b32.xlu0 %v3670, 64
    %v3683 = vpop.permute.xlu0 %3682
    %3684 = vrot.lane.b32.xlu0 %v3671, 64
    %v3685 = vpop.permute.xlu0 %3684
    %v3686 = vsel %vm413, %v3683, %v3685
    %v3688 = vmul.f32 %v3663, %v3686
    %3690 = vrot.lane.b32.xlu0 %v3688, 96
    %v3691 = vpop.permute.xlu0 %3690
    %v3693 = vadd.f32 %v3678, %v3691
    %v3694 = vadd.f32 %v3679, %v3691
    %v3695 = vtanh.pop %v3693
    %v3696 = vtanh.pop %v3694
    %3699 = vrot.lane.b32.xlu0 %v3695, 64
    %v3700 = vpop.permute.xlu0 %3699
    %3701 = vrot.lane.b32.xlu0 %v3696, 64
    %v3702 = vpop.permute.xlu0 %3701
    %v3703 = vsel %vm413, %v3700, %v3702
    %v3705 = vmul.f32 %v3677, %v3703
    %v3706 = vsel %vm3294, %v3705, %v3286
    %3708 = vrot.lane.b32.xlu0 %v3706, 96
    %v3709 = vpop.permute.xlu0 %3708
    %v3711 = vmax.f32 %v3706, %v3709
    %3712 = vrot.lane.b32.xlu0 %v3706, 64
    %v3713 = vpop.permute.xlu0 %3712
    %v3715 = vmax.f32 %v3711, %v3713
    %3717 = vrot.lane.b32.xlu0 %v3715, 96
    %v3718 = vpop.permute.xlu0 %3717
    %vm3720 = vcmask 254976
    %3721 = vst.msk [vmem:[#allocation2] sm:$0x3] %vm3720, %v3718
    // Predicated region
    $region22: #{lstm_mwe_model_pool.1} parent=1 // pred_check
      _
    $region23: #{lstm_mwe_model_pool.1} parent=1 // pred_check_branch
      %3723 = sbr.rel (0) target = $region25
    $region24: #{lstm_mwe_model_pool.1} parent=1 // pred_region
      %s3725 = ssub.s32 32, 32
      %3726 = vsyncadd [#allocation3], %s3725
      %s3728 = sshll.u32 [#allocation2], 4
      %s3729 = int_to_ptr.vmem [resolvable:$true] %s3728
      %3731 = dma.vmem_to_hbm [thread:$0]  %s3729, 32, %s5, [#allocation3]
    $region25: #{lstm_mwe_model_pool.1} parent=1 // pred_fallthru
      _
    // Predicated region
    $region26: #{lstm_mwe_model_pool.1} parent=1 // pred_check
      _
    $region27: #{lstm_mwe_model_pool.1} parent=1 // pred_check_branch
      %3733 = sbr.rel (0) target = $region29
    $region28: #{lstm_mwe_model_pool.1} parent=1 // pred_region
      %3734 = dma.done [#allocation3], 32
    $region29: #{lstm_mwe_model_pool.1} parent=1 // pred_fallthru
      _
    %3735 = vsyncpa [#allocation3], 1

</llo_original>
